<compile_context>
chip_gen: v5e
topology: v5e:2x2
jax: 0.10.0
libtpu: 0.0.40
codegen_flags: <defaults>
</compile_context>

<pallas_src>
import functools

import jax
import jax.numpy as jnp
from jax import lax
from jax.experimental import pallas as pl
from jax.experimental.pallas import tpu as pltpu


# ---------------------------------------------------------------------------
# Fused kernel: 3x3 conv + ReLU (x & h branches), circular temporal conv +
# add + LeakyReLU, temporal attention, squeeze-excite gate, 1x1-conv residual.
# ---------------------------------------------------------------------------
def _fused_ta_se_kernel(a_ref,
                        wxm_ref, wx0_ref, wxp_ref, bs_ref,
                        wt_ref, bt_ref,
                        mxm_ref, mxp_ref, mym_ref, myp_ref,
                        fc1_ref, fc2_ref,
                        e_ref, et_ref, sel_ref, eye_ref, w1bd_ref, b1fm_ref,
                        o_ref, *, t, c, h, w):
    f32 = jnp.float32
    hw = h * w
    thw = t * hw
    c2 = 2 * c

    a = a_ref[...]                                            # (2c, thw) channel-major

    # --- stage 1: per-frame 3x3 conv (zero pad 1) + bias + ReLU, both branches
    # column pass: 2 masked lane-rolled copies of the input (ox = -1 / +1);
    # each ox copy hits an M-stacked weight (all 3 ky rows at once) -> (6c, thw)
    a_xm = pltpu.roll(a, 1, axis=1) * mxm_ref[...]            # in[.., y, x-1]
    a_xp = pltpu.roll(a, thw - 1, axis=1) * mxp_ref[...]      # in[.., y, x+1]
    qacc = (jnp.dot(wxm_ref[...], a_xm, preferred_element_type=f32)
            + jnp.dot(wx0_ref[...], a, preferred_element_type=f32)
            + jnp.dot(wxp_ref[...], a_xp, preferred_element_type=f32))
    # row pass: combine the ky = 0/1/2 partials with masked +-w lane rolls.
    s_pre = (qacc[c2:2 * c2]
             + pltpu.roll(qacc[:c2], w, axis=1) * mym_ref[...]
             + pltpu.roll(qacc[2 * c2:], thw - w, axis=1) * myp_ref[...]
             + bs_ref[...])
    s = jnp.maximum(s_pre, 0.0)                               # ReLU, (2c, thw)

    # --- stage 2: circular temporal conv (k=3) of both branches + add + LeakyReLU
    # one M-stacked dot; the per-tap frame shifts commute with the channel
    # contraction, so they are applied to the (c, thw) partials (aligned rolls).
    p3 = jnp.dot(wt_ref[...], s, preferred_element_type=f32)  # (3c, thw)
    y_pre = (pltpu.roll(p3[:c], hw, axis=1)                   # k=0 tap -> frame tau-1
             + p3[c:2 * c]                                    # k=1 tap -> frame tau
             + pltpu.roll(p3[2 * c:], thw - hw, axis=1)       # k=2 tap -> frame tau+1
             + bt_ref[...])
    y = jnp.maximum(y_pre, 0.01 * y_pre)                      # LeakyReLU(0.01), (c, thw)

    # --- single relayout to frame-major: y_fm[f*c+ch, p] = y[ch, f*hw+p]
    y_fm = jnp.concatenate([y[:, f * hw:(f + 1) * hw] for f in range(t)],
                           axis=0)                            # (t*c, hw), tile-aligned blocks

    # --- stage 3: temporal attention (tiny tensors, exact softmax)
    y1_flat = jnp.sum(y_fm, axis=1, keepdims=True) * (1.0 / hw)          # (t*c, 1) pool
    y1 = jnp.dot(et_ref[...], sel_ref[...] * y1_flat,
                 preferred_element_type=f32)                              # (t, c)
    logits = lax.dot_general(y1, y1, (((1,), (1,)), ((), ())),
                             preferred_element_type=f32) * (c ** -0.5) + 1e-6
    mx = jnp.max(logits, axis=-1, keepdims=True)
    ex = jnp.exp(logits - mx)
    corrs = ex / jnp.sum(ex, axis=-1, keepdims=True)                      # softmax, (t, t)

    # --- stage 4: squeeze-excite gate on the pooled mixed tensor
    out1 = jnp.dot(corrs, y1, preferred_element_type=f32)                 # (t, c)
    hfc = jnp.maximum(jnp.dot(out1, fc1_ref[...], preferred_element_type=f32), 0.0)
    gate = 1.0 / (1.0 + jnp.exp(-jnp.dot(hfc, fc2_ref[...],
                                         preferred_element_type=f32)))    # sigmoid, (t, c)

    # --- stages 3+4 + 1x1-conv residual fused into ONE (t*c, t*c) mixing matrix:
    #   M[f*c+ch, s*c+ci] = gate[f,ch]*corrs[f,s]*delta(ch,ci) + delta(f,s)*w1[ch,ci]
    gate_flat = jnp.sum(jnp.dot(e_ref[...], gate, preferred_element_type=f32)
                        * sel_ref[...], axis=1, keepdims=True)             # (t*c, 1)
    corrs_exp = jnp.dot(jnp.dot(e_ref[...], corrs, preferred_element_type=f32),
                        et_ref[...], preferred_element_type=f32)           # (t*c, t*c)
    m_comb = gate_flat * corrs_exp * eye_ref[...] + w1bd_ref[...]

    # frame-major output == NCHW memory order; fully lane-dense (hw-wide) store.
    o_ref[...] = jnp.dot(m_comb, y_fm, preferred_element_type=f32) + b1fm_ref[...]


# ---------------------------------------------------------------------------
# Wrapper-side constant preparation (weights, boundary masks, kron helpers).
# ---------------------------------------------------------------------------
def _prep_constants(params, t, c, h, w):
    f32 = jnp.float32
    hw = h * w
    thw = t * hw
    zc = jnp.zeros((c, c), f32)

    def blockdiag(wx, wh):                      # (2c, 2c): [x-branch ; h-branch]
        return jnp.concatenate(
            [jnp.concatenate([wx, zc], axis=1),
             jnp.concatenate([zc, wh], axis=1)], axis=0)

    def col_weight(kx):                         # ky rows stacked on M -> (6c, 2c)
        return jnp.concatenate(
            [blockdiag(params["wx2d"][:, :, ky, kx].astype(f32),
                       params["wh2d"][:, :, ky, kx].astype(f32))
             for ky in range(3)], axis=0)

    w_xm, w_x0, w_xp = col_weight(0), col_weight(1), col_weight(2)
    b_s = jnp.concatenate([params["bx2d"], params["bh2d"]]).astype(f32).reshape(2 * c, 1)

    w_t = jnp.concatenate(                      # (3c, 2c): taps k = 0, 1, 2
        [jnp.concatenate([params["wx1d"][:, :, k], params["wh1d"][:, :, k]],
                         axis=1).astype(f32) for k in range(3)], axis=0)
    b_t = (params["bx1d"] + params["bh1d"]).astype(f32).reshape(c, 1)

    # boundary masks for the +-1 / +-w lane rolls (zero padding of the 3x3 conv)
    qi = jnp.arange(thw, dtype=jnp.int32)
    xx = qi % w
    yy = (qi // w) % h
    m_xm = (xx >= 1).astype(f32).reshape(1, thw)
    m_xp = (xx <= w - 2).astype(f32).reshape(1, thw)
    m_ym = (yy >= 1).astype(f32).reshape(1, thw)
    m_yp = (yy <= h - 2).astype(f32).reshape(1, thw)

    # kron / expansion helpers for the fused frame-major stage 3/4
    r = jnp.arange(t * c, dtype=jnp.int32)
    e_mat = (r[:, None] // c == jnp.arange(t, dtype=jnp.int32)[None, :]).astype(f32)  # (tc, t)
    et_mat = e_mat.T                                                                  # (t, tc)
    sel = (r[:, None] % c == jnp.arange(c, dtype=jnp.int32)[None, :]).astype(f32)     # (tc, c)
    eyem = ((r[:, None] % c) == (r[None, :] % c)).astype(f32)                         # (tc, tc)
    w1bd = jnp.kron(jnp.eye(t, dtype=f32), params["w1x1"].astype(f32))                # (tc, tc)
    b1fm = jnp.tile(params["b1x1"].astype(f32), t).reshape(t * c, 1)                  # (tc, 1)

    return [w_xm, w_x0, w_xp, b_s, w_t, b_t,
            m_xm, m_xp, m_ym, m_yp,
            params["fc1"].astype(f32), params["fc2"].astype(f32),
            e_mat, et_mat, sel, eyem, w1bd, b1fm]


def _const_spec(arr):
    nd = arr.ndim
    return pl.BlockSpec(arr.shape, lambda i: (0,) * nd)


def ta_se_block_new_batched(x, hh, params):
    """x, hh: (B, t, c, h, w) float32.  Returns (B, t, c, h, w)."""
    b, t, c, h, w = x.shape
    hw = h * w
    thw = t * hw
    tc = t * c
    consts = _prep_constants(params, t, c, h, w)

    # (B, t, c, h, w) x 2  ->  channel-major (B, 2c, t*h*w)  (tiny XLA transpose)
    a = jnp.concatenate([x, hh], axis=2)                       # (B, t, 2c, h, w)
    a = jnp.transpose(a, (0, 2, 1, 3, 4)).reshape(b, 2 * c, thw).astype(jnp.float32)

    kernel = functools.partial(_fused_ta_se_kernel, t=t, c=c, h=h, w=w)
    out_fm = pl.pallas_call(
        kernel,
        out_shape=jax.ShapeDtypeStruct((b, tc, hw), jnp.float32),
        grid=(b,),
        in_specs=[pl.BlockSpec((None, 2 * c, thw), lambda i: (i, 0, 0))]
                 + [_const_spec(arr) for arr in consts],
        out_specs=pl.BlockSpec((None, tc, hw), lambda i: (i, 0, 0)),
        compiler_params=pltpu.CompilerParams(
            dimension_semantics=("parallel",)),   # batch axis -> megacore on v7x
    )(a, *consts)

    # frame-major (t*c, h*w) is exactly NCHW memory order -> reshape only.
    return out_fm.reshape(b, t, c, h, w)


def ta_se_block_new(x, hh, params):
    """Module-faithful entry point: x, hh are (t, c, h, w) as in the PyTorch forward."""
    return ta_se_block_new_batched(x[None], hh[None], params)[0]


# ---------------------------------------------------------------------------
# Synthetic parameters (PyTorch-style conv layouts; fc stored (in, out)).
# ---------------------------------------------------------------------------
def make_params(key, c):
    ks = jax.random.split(key, 12)
    n = lambda k, shp: jax.random.normal(k, shp, jnp.float32) * 0.1
    return {
        # conv_x: Conv2d weight (cout, cin, 3, 3) + bias; Conv1d (cout, cin, 3) + bias
        "wx2d": n(ks[0], (c, c, 3, 3)), "bx2d": n(ks[1], (c,)),
        "wx1d": n(ks[2], (c, c, 3)),    "bx1d": n(ks[3], (c,)),
        # conv_h
        "wh2d": n(ks[4], (c, c, 3, 3)), "bh2d": n(ks[5], (c,)),
        "wh1d": n(ks[6], (c, c, 3)),    "bh1d": n(ks[7], (c,)),
        # fc: Linear(c -> 2c, no bias) then Linear(2c -> c, no bias), stored (in, out)
        "fc1": n(ks[8], (c, 2 * c)),    "fc2": n(ks[9], (2 * c, c)),
        # 1x1 conv: weight (cout, cin) + bias
        "w1x1": n(ks[10], (c, c)),      "b1x1": n(ks[11], (c,)),
    }


# ---------------------------------------------------------------------------
# Pure-JAX reference of the PyTorch forward (f32, HIGHEST precision).
# ---------------------------------------------------------------------------
def _reference(x, hh, p):
    t, c, h, w = x.shape
    hp = lax.Precision.HIGHEST

    def conv2_1d(inp, w2, b2, w1, b1):
        s = lax.conv_general_dilated(
            inp, w2, window_strides=(1, 1), padding=((1, 1), (1, 1)),
            dimension_numbers=("NCHW", "OIHW", "NCHW"), precision=hp)
        s = jnp.maximum(s + b2[None, :, None, None], 0.0)
        sm1 = jnp.roll(s, 1, axis=0)      # frame tau-1 (circular)
        sp1 = jnp.roll(s, -1, axis=0)     # frame tau+1 (circular)
        return (jnp.einsum("oi,tihw->tohw", w1[:, :, 0], sm1, precision=hp)
                + jnp.einsum("oi,tihw->tohw", w1[:, :, 1], s, precision=hp)
                + jnp.einsum("oi,tihw->tohw", w1[:, :, 2], sp1, precision=hp)
                + b1[None, :, None, None])

    x1 = conv2_1d(x, p["wx2d"], p["bx2d"], p["wx1d"], p["bx1d"])
    h1 = conv2_1d(hh, p["wh2d"], p["bh2d"], p["wh1d"], p["bh1d"])
    yp = x1 + h1
    y = jnp.where(yp >= 0, yp, 0.01 * yp)                      # LeakyReLU(0.01)
    y1 = jnp.mean(y, axis=(2, 3))                              # (t, c)
    corrs = jax.nn.softmax(jnp.dot(y1, y1.T, precision=hp) / (c ** 0.5) + 1e-6, axis=-1)
    out = jnp.dot(corrs, y.reshape(t, -1), precision=hp).reshape(t, c, h, w)
    out1 = jnp.mean(out, axis=(2, 3))
    gate = jax.nn.sigmoid(
        jnp.dot(jnp.maximum(jnp.dot(out1, p["fc1"], precision=hp), 0.0),
                p["fc2"], precision=hp))
    z = jnp.einsum("oi,tihw->tohw", p["w1x1"], y, precision=hp) + p["b1x1"][None, :, None, None]
    return out * gate[:, :, None, None] + z


if __name__ == "__main__":
    key = jax.random.PRNGKey(0)
    B, T, C, H, W = 2, 8, 8, 16, 16   # batch of (t, chans, h, w) pairs

    kx, kh, kp = jax.random.split(key, 3)
    x = jax.random.normal(kx, (B, T, C, H, W), jnp.float32)
    hh = jax.random.normal(kh, (B, T, C, H, W), jnp.float32)
    params = make_params(kp, C)

    out = jax.jit(ta_se_block_new_batched)(x, hh, params)
    jax.block_until_ready(out)
    assert out.shape == (B, T, C, H, W)

    ref = jax.jit(jax.vmap(_reference, in_axes=(0, 0, None)))(x, hh, params)
    err = jnp.max(jnp.abs(out - ref))
    if not bool(err < 2e-3):
        raise AssertionError(f"kernel/reference mismatch: max|err|={float(err)}")

    print("KERNEL_OK")
</pallas_src>

<mosaic_0001>
module attributes {stable_mosaic.version = 11 : i64} {
  func.func @_fused_ta_se_kernel(%arg0: i32, %arg1: memref<1x16x2048xf32, #tpu.memory_space<vmem>>, %arg2: memref<48x16xf32, #tpu.memory_space<vmem>>, %arg3: memref<48x16xf32, #tpu.memory_space<vmem>>, %arg4: memref<48x16xf32, #tpu.memory_space<vmem>>, %arg5: memref<16x1xf32, #tpu.memory_space<vmem>>, %arg6: memref<24x16xf32, #tpu.memory_space<vmem>>, %arg7: memref<8x1xf32, #tpu.memory_space<vmem>>, %arg8: memref<1x2048xf32, #tpu.memory_space<vmem>>, %arg9: memref<1x2048xf32, #tpu.memory_space<vmem>>, %arg10: memref<1x2048xf32, #tpu.memory_space<vmem>>, %arg11: memref<1x2048xf32, #tpu.memory_space<vmem>>, %arg12: memref<8x16xf32, #tpu.memory_space<vmem>>, %arg13: memref<16x8xf32, #tpu.memory_space<vmem>>, %arg14: memref<64x8xf32, #tpu.memory_space<vmem>>, %arg15: memref<8x64xf32, #tpu.memory_space<vmem>>, %arg16: memref<64x8xf32, #tpu.memory_space<vmem>>, %arg17: memref<64x64xf32, #tpu.memory_space<vmem>>, %arg18: memref<64x64xf32, #tpu.memory_space<vmem>>, %arg19: memref<64x1xf32, #tpu.memory_space<vmem>>, %arg20: memref<1x64x256xf32, #tpu.memory_space<vmem>>) attributes {dimension_semantics = [#tpu.dimension_semantics<parallel>], iteration_bounds = array<i64: 2>, scalar_prefetch = 0 : i64, scratch_operands = 0 : i64, tpu.core_type = #tpu.core_type<tc>, window_params = [{transform_indices = @transform_0, window_bounds = array<i64: 1, 16, 2048>}, {pipeline_mode = #tpu.pipeline_mode<synchronous>, transform_indices = @transform_1, window_bounds = array<i64: 48, 16>}, {pipeline_mode = #tpu.pipeline_mode<synchronous>, transform_indices = @transform_2, window_bounds = array<i64: 48, 16>}, {pipeline_mode = #tpu.pipeline_mode<synchronous>, transform_indices = @transform_3, window_bounds = array<i64: 48, 16>}, {pipeline_mode = #tpu.pipeline_mode<synchronous>, transform_indices = @transform_4, window_bounds = array<i64: 16, 1>}, {pipeline_mode = #tpu.pipeline_mode<synchronous>, transform_indices = @transform_5, window_bounds = array<i64: 24, 16>}, {pipeline_mode = #tpu.pipeline_mode<synchronous>, transform_indices = @transform_6, window_bounds = array<i64: 8, 1>}, {pipeline_mode = #tpu.pipeline_mode<synchronous>, transform_indices = @transform_7, window_bounds = array<i64: 1, 2048>}, {pipeline_mode = #tpu.pipeline_mode<synchronous>, transform_indices = @transform_8, window_bounds = array<i64: 1, 2048>}, {pipeline_mode = #tpu.pipeline_mode<synchronous>, transform_indices = @transform_9, window_bounds = array<i64: 1, 2048>}, {pipeline_mode = #tpu.pipeline_mode<synchronous>, transform_indices = @transform_10, window_bounds = array<i64: 1, 2048>}, {pipeline_mode = #tpu.pipeline_mode<synchronous>, transform_indices = @transform_11, window_bounds = array<i64: 8, 16>}, {pipeline_mode = #tpu.pipeline_mode<synchronous>, transform_indices = @transform_12, window_bounds = array<i64: 16, 8>}, {pipeline_mode = #tpu.pipeline_mode<synchronous>, transform_indices = @transform_13, window_bounds = array<i64: 64, 8>}, {pipeline_mode = #tpu.pipeline_mode<synchronous>, transform_indices = @transform_14, window_bounds = array<i64: 8, 64>}, {pipeline_mode = #tpu.pipeline_mode<synchronous>, transform_indices = @transform_15, window_bounds = array<i64: 64, 8>}, {pipeline_mode = #tpu.pipeline_mode<synchronous>, transform_indices = @transform_16, window_bounds = array<i64: 64, 64>}, {pipeline_mode = #tpu.pipeline_mode<synchronous>, transform_indices = @transform_17, window_bounds = array<i64: 64, 64>}, {pipeline_mode = #tpu.pipeline_mode<synchronous>, transform_indices = @transform_18, window_bounds = array<i64: 64, 1>}, {transform_indices = @transform_19, window_bounds = array<i64: 1, 64, 256>}]} {
    %c0 = arith.constant 0 : index
    %c0_0 = arith.constant 0 : index
    %c0_1 = arith.constant 0 : index
    %0 = vector.load %arg1[%c0, %c0_0, %c0_1] : memref<1x16x2048xf32, #tpu.memory_space<vmem>>, vector<1x16x2048xf32>
    %1 = vector.shape_cast %0 : vector<1x16x2048xf32> to vector<16x2048xf32>
    %c1_i32 = arith.constant 1 : i32
    %2 = tpu.dynamic_rotate %1 by %c1_i32 dim 1 : vector<16x2048xf32>, i32 -> vector<16x2048xf32>
    %c0_2 = arith.constant 0 : index
    %c0_3 = arith.constant 0 : index
    %3 = vector.load %arg8[%c0_2, %c0_3] : memref<1x2048xf32, #tpu.memory_space<vmem>>, vector<1x2048xf32>
    %4 = vector.broadcast %3 : vector<1x2048xf32> to vector<16x2048xf32>
    %5 = arith.mulf %2, %4 : vector<16x2048xf32>
    %c2047_i32 = arith.constant 2047 : i32
    %6 = tpu.dynamic_rotate %1 by %c2047_i32 dim 1 : vector<16x2048xf32>, i32 -> vector<16x2048xf32>
    %c0_4 = arith.constant 0 : index
    %c0_5 = arith.constant 0 : index
    %7 = vector.load %arg9[%c0_4, %c0_5] : memref<1x2048xf32, #tpu.memory_space<vmem>>, vector<1x2048xf32>
    %8 = vector.broadcast %7 : vector<1x2048xf32> to vector<16x2048xf32>
    %9 = arith.mulf %6, %8 : vector<16x2048xf32>
    %c0_6 = arith.constant 0 : index
    %c0_7 = arith.constant 0 : index
    %10 = vector.load %arg2[%c0_6, %c0_7] : memref<48x16xf32, #tpu.memory_space<vmem>>, vector<48x16xf32>
    %cst = arith.constant dense<0.000000e+00> : vector<48x2048xf32>
    %11 = tpu.matmul %10, %5, %cst {dimension_numbers = #tpu.dot_dimension_numbers<[1], [0], [0], [1], [0, 0, 1, 1], [], []>} : vector<48x16xf32>, vector<16x2048xf32>, vector<48x2048xf32> -> vector<48x2048xf32>
    %c0_8 = arith.constant 0 : index
    %c0_9 = arith.constant 0 : index
    %12 = vector.load %arg3[%c0_8, %c0_9] : memref<48x16xf32, #tpu.memory_space<vmem>>, vector<48x16xf32>
    %cst_10 = arith.constant dense<0.000000e+00> : vector<48x2048xf32>
    %13 = tpu.matmul %12, %1, %cst_10 {dimension_numbers = #tpu.dot_dimension_numbers<[1], [0], [0], [1], [0, 0, 1, 1], [], []>} : vector<48x16xf32>, vector<16x2048xf32>, vector<48x2048xf32> -> vector<48x2048xf32>
    %14 = arith.addf %11, %13 : vector<48x2048xf32>
    %c0_11 = arith.constant 0 : index
    %c0_12 = arith.constant 0 : index
    %15 = vector.load %arg4[%c0_11, %c0_12] : memref<48x16xf32, #tpu.memory_space<vmem>>, vector<48x16xf32>
    %cst_13 = arith.constant dense<0.000000e+00> : vector<48x2048xf32>
    %16 = tpu.matmul %15, %9, %cst_13 {dimension_numbers = #tpu.dot_dimension_numbers<[1], [0], [0], [1], [0, 0, 1, 1], [], []>} : vector<48x16xf32>, vector<16x2048xf32>, vector<48x2048xf32> -> vector<48x2048xf32>
    %17 = arith.addf %14, %16 : vector<48x2048xf32>
    %18 = vector.extract_strided_slice %17 {offsets = [16, 0], sizes = [16, 2048], strides = [1, 1]} : vector<48x2048xf32> to vector<16x2048xf32>
    %19 = vector.extract_strided_slice %17 {offsets = [0, 0], sizes = [16, 2048], strides = [1, 1]} : vector<48x2048xf32> to vector<16x2048xf32>
    %c16_i32 = arith.constant 16 : i32
    %20 = tpu.dynamic_rotate %19 by %c16_i32 dim 1 : vector<16x2048xf32>, i32 -> vector<16x2048xf32>
    %c0_14 = arith.constant 0 : index
    %c0_15 = arith.constant 0 : index
    %21 = vector.load %arg10[%c0_14, %c0_15] : memref<1x2048xf32, #tpu.memory_space<vmem>>, vector<1x2048xf32>
    %22 = vector.broadcast %21 : vector<1x2048xf32> to vector<16x2048xf32>
    %23 = arith.mulf %20, %22 : vector<16x2048xf32>
    %24 = arith.addf %18, %23 : vector<16x2048xf32>
    %25 = vector.extract_strided_slice %17 {offsets = [32, 0], sizes = [16, 2048], strides = [1, 1]} : vector<48x2048xf32> to vector<16x2048xf32>
    %c2032_i32 = arith.constant 2032 : i32
    %26 = tpu.dynamic_rotate %25 by %c2032_i32 dim 1 : vector<16x2048xf32>, i32 -> vector<16x2048xf32>
    %c0_16 = arith.constant 0 : index
    %c0_17 = arith.constant 0 : index
    %27 = vector.load %arg11[%c0_16, %c0_17] : memref<1x2048xf32, #tpu.memory_space<vmem>>, vector<1x2048xf32>
    %28 = vector.broadcast %27 : vector<1x2048xf32> to vector<16x2048xf32>
    %29 = arith.mulf %26, %28 : vector<16x2048xf32>
    %30 = arith.addf %24, %29 : vector<16x2048xf32>
    %c0_18 = arith.constant 0 : index
    %c0_19 = arith.constant 0 : index
    %31 = vector.load %arg5[%c0_18, %c0_19] : memref<16x1xf32, #tpu.memory_space<vmem>>, vector<16x1xf32>
    %32 = vector.broadcast %31 : vector<16x1xf32> to vector<16x2048xf32>
    %33 = arith.addf %30, %32 : vector<16x2048xf32>
    %cst_20 = arith.constant 0.000000e+00 : f32
    %34 = vector.broadcast %cst_20 : f32 to vector<16x2048xf32>
    %35 = arith.maximumf %33, %34 : vector<16x2048xf32>
    %c0_21 = arith.constant 0 : index
    %c0_22 = arith.constant 0 : index
    %36 = vector.load %arg6[%c0_21, %c0_22] : memref<24x16xf32, #tpu.memory_space<vmem>>, vector<24x16xf32>
    %cst_23 = arith.constant dense<0.000000e+00> : vector<24x2048xf32>
    %37 = tpu.matmul %36, %35, %cst_23 {dimension_numbers = #tpu.dot_dimension_numbers<[1], [0], [0], [1], [0, 0, 1, 1], [], []>} : vector<24x16xf32>, vector<16x2048xf32>, vector<24x2048xf32> -> vector<24x2048xf32>
    %38 = vector.extract_strided_slice %37 {offsets = [0, 0], sizes = [8, 2048], strides = [1, 1]} : vector<24x2048xf32> to vector<8x2048xf32>
    %c256_i32 = arith.constant 256 : i32
    %39 = tpu.dynamic_rotate %38 by %c256_i32 dim 1 : vector<8x2048xf32>, i32 -> vector<8x2048xf32>
    %40 = vector.extract_strided_slice %37 {offsets = [8, 0], sizes = [8, 2048], strides = [1, 1]} : vector<24x2048xf32> to vector<8x2048xf32>
    %41 = arith.addf %39, %40 : vector<8x2048xf32>
    %42 = vector.extract_strided_slice %37 {offsets = [16, 0], sizes = [8, 2048], strides = [1, 1]} : vector<24x2048xf32> to vector<8x2048xf32>
    %c1792_i32 = arith.constant 1792 : i32
    %43 = tpu.dynamic_rotate %42 by %c1792_i32 dim 1 : vector<8x2048xf32>, i32 -> vector<8x2048xf32>
    %44 = arith.addf %41, %43 : vector<8x2048xf32>
    %c0_24 = arith.constant 0 : index
    %c0_25 = arith.constant 0 : index
    %45 = vector.load %arg7[%c0_24, %c0_25] : memref<8x1xf32, #tpu.memory_space<vmem>>, vector<8x1xf32>
    %46 = vector.broadcast %45 : vector<8x1xf32> to vector<8x2048xf32>
    %47 = arith.addf %44, %46 : vector<8x2048xf32>
    %cst_26 = arith.constant 0.00999999977 : f32
    %48 = vector.broadcast %cst_26 : f32 to vector<8x2048xf32>
    %49 = arith.mulf %48, %47 : vector<8x2048xf32>
    %50 = arith.maximumf %47, %49 : vector<8x2048xf32>
    %51 = vector.extract_strided_slice %50 {offsets = [0, 0], sizes = [8, 256], strides = [1, 1]} : vector<8x2048xf32> to vector<8x256xf32>
    %52 = vector.extract_strided_slice %50 {offsets = [0, 256], sizes = [8, 256], strides = [1, 1]} : vector<8x2048xf32> to vector<8x256xf32>
    %53 = vector.extract_strided_slice %50 {offsets = [0, 512], sizes = [8, 256], strides = [1, 1]} : vector<8x2048xf32> to vector<8x256xf32>
    %54 = vector.extract_strided_slice %50 {offsets = [0, 768], sizes = [8, 256], strides = [1, 1]} : vector<8x2048xf32> to vector<8x256xf32>
    %55 = vector.extract_strided_slice %50 {offsets = [0, 1024], sizes = [8, 256], strides = [1, 1]} : vector<8x2048xf32> to vector<8x256xf32>
    %56 = vector.extract_strided_slice %50 {offsets = [0, 1280], sizes = [8, 256], strides = [1, 1]} : vector<8x2048xf32> to vector<8x256xf32>
    %57 = vector.extract_strided_slice %50 {offsets = [0, 1536], sizes = [8, 256], strides = [1, 1]} : vector<8x2048xf32> to vector<8x256xf32>
    %58 = vector.extract_strided_slice %50 {offsets = [0, 1792], sizes = [8, 256], strides = [1, 1]} : vector<8x2048xf32> to vector<8x256xf32>
    %59 = tpu.concatenate %51, %52, %53, %54, %55, %56, %57, %58 in 0 : vector<8x256xf32>, vector<8x256xf32>, vector<8x256xf32>, vector<8x256xf32>, vector<8x256xf32>, vector<8x256xf32>, vector<8x256xf32>, vector<8x256xf32> -> vector<64x256xf32>
    %cst_27 = arith.constant dense<0.000000e+00> : vector<64xf32>
    %60 = vector.multi_reduction <add>, %59, %cst_27 [1] : vector<64x256xf32> to vector<64xf32>
    %61 = vector.shape_cast %60 : vector<64xf32> to vector<64x1xf32>
    %cst_28 = arith.constant 3.906250e-03 : f32
    %62 = vector.broadcast %cst_28 : f32 to vector<64x1xf32>
    %63 = arith.mulf %61, %62 : vector<64x1xf32>
    %c0_29 = arith.constant 0 : index
    %c0_30 = arith.constant 0 : index
    %64 = vector.load %arg15[%c0_29, %c0_30] : memref<8x64xf32, #tpu.memory_space<vmem>>, vector<8x64xf32>
    %c0_31 = arith.constant 0 : index
    %c0_32 = arith.constant 0 : index
    %65 = vector.load %arg16[%c0_31, %c0_32] : memref<64x8xf32, #tpu.memory_space<vmem>>, vector<64x8xf32>
    %66 = vector.broadcast %63 : vector<64x1xf32> to vector<64x8xf32>
    %67 = arith.mulf %65, %66 : vector<64x8xf32>
    %cst_33 = arith.constant dense<0.000000e+00> : vector<8x8xf32>
    %68 = tpu.matmul %64, %67, %cst_33 {dimension_numbers = #tpu.dot_dimension_numbers<[1], [0], [0], [1], [0, 0, 1, 1], [], []>} : vector<8x64xf32>, vector<64x8xf32>, vector<8x8xf32> -> vector<8x8xf32>
    %cst_34 = arith.constant dense<0.000000e+00> : vector<8x8xf32>
    %69 = tpu.matmul %68, %68, %cst_34 {dimension_numbers = #tpu.dot_dimension_numbers<[1], [1], [0], [0], [0, 0, 1, 0], [], []>} : vector<8x8xf32>, vector<8x8xf32>, vector<8x8xf32> -> vector<8x8xf32>
    %cst_35 = arith.constant 0.353553385 : f32
    %70 = vector.broadcast %cst_35 : f32 to vector<8x8xf32>
    %71 = arith.mulf %69, %70 : vector<8x8xf32>
    %cst_36 = arith.constant 9.99999997E-7 : f32
    %72 = vector.broadcast %cst_36 : f32 to vector<8x8xf32>
    %73 = arith.addf %71, %72 : vector<8x8xf32>
    %cst_37 = arith.constant dense<0xFF800000> : vector<8xf32>
    %74 = vector.multi_reduction <maximumf>, %73, %cst_37 [1] : vector<8x8xf32> to vector<8xf32>
    %75 = vector.shape_cast %74 : vector<8xf32> to vector<8x1xf32>
    %76 = vector.broadcast %75 : vector<8x1xf32> to vector<8x8xf32>
    %77 = arith.subf %73, %76 : vector<8x8xf32>
    %78 = math.exp %77 : vector<8x8xf32>
    %cst_38 = arith.constant dense<0.000000e+00> : vector<8xf32>
    %79 = vector.multi_reduction <add>, %78, %cst_38 [1] : vector<8x8xf32> to vector<8xf32>
    %80 = vector.shape_cast %79 : vector<8xf32> to vector<8x1xf32>
    %81 = vector.broadcast %80 : vector<8x1xf32> to vector<8x8xf32>
    %82 = arith.divf %78, %81 : vector<8x8xf32>
    %cst_39 = arith.constant dense<0.000000e+00> : vector<8x8xf32>
    %83 = tpu.matmul %82, %68, %cst_39 {dimension_numbers = #tpu.dot_dimension_numbers<[1], [0], [0], [1], [0, 0, 1, 1], [], []>} : vector<8x8xf32>, vector<8x8xf32>, vector<8x8xf32> -> vector<8x8xf32>
    %c0_40 = arith.constant 0 : index
    %c0_41 = arith.constant 0 : index
    %84 = vector.load %arg12[%c0_40, %c0_41] : memref<8x16xf32, #tpu.memory_space<vmem>>, vector<8x16xf32>
    %cst_42 = arith.constant dense<0.000000e+00> : vector<8x16xf32>
    %85 = tpu.matmul %83, %84, %cst_42 {dimension_numbers = #tpu.dot_dimension_numbers<[1], [0], [0], [1], [0, 0, 1, 1], [], []>} : vector<8x8xf32>, vector<8x16xf32>, vector<8x16xf32> -> vector<8x16xf32>
    %cst_43 = arith.constant 0.000000e+00 : f32
    %86 = vector.broadcast %cst_43 : f32 to vector<8x16xf32>
    %87 = arith.maximumf %85, %86 : vector<8x16xf32>
    %c0_44 = arith.constant 0 : index
    %c0_45 = arith.constant 0 : index
    %88 = vector.load %arg13[%c0_44, %c0_45] : memref<16x8xf32, #tpu.memory_space<vmem>>, vector<16x8xf32>
    %cst_46 = arith.constant dense<0.000000e+00> : vector<8x8xf32>
    %89 = tpu.matmul %87, %88, %cst_46 {dimension_numbers = #tpu.dot_dimension_numbers<[1], [0], [0], [1], [0, 0, 1, 1], [], []>} : vector<8x16xf32>, vector<16x8xf32>, vector<8x8xf32> -> vector<8x8xf32>
    %cst_47 = arith.constant 0.000000e+00 : f32
    %90 = vector.broadcast %cst_47 : f32 to vector<8x8xf32>
    %91 = arith.subf %90, %89 : vector<8x8xf32>
    %92 = math.exp %91 : vector<8x8xf32>
    %cst_48 = arith.constant 1.000000e+00 : f32
    %93 = vector.broadcast %cst_48 : f32 to vector<8x8xf32>
    %94 = arith.addf %93, %92 : vector<8x8xf32>
    %cst_49 = arith.constant 1.000000e+00 : f32
    %95 = vector.broadcast %cst_49 : f32 to vector<8x8xf32>
    %96 = arith.divf %95, %94 : vector<8x8xf32>
    %c0_50 = arith.constant 0 : index
    %c0_51 = arith.constant 0 : index
    %97 = vector.load %arg14[%c0_50, %c0_51] : memref<64x8xf32, #tpu.memory_space<vmem>>, vector<64x8xf32>
    %cst_52 = arith.constant dense<0.000000e+00> : vector<64x8xf32>
    %98 = tpu.matmul %97, %96, %cst_52 {dimension_numbers = #tpu.dot_dimension_numbers<[1], [0], [0], [1], [0, 0, 1, 1], [], []>} : vector<64x8xf32>, vector<8x8xf32>, vector<64x8xf32> -> vector<64x8xf32>
    %c0_53 = arith.constant 0 : index
    %c0_54 = arith.constant 0 : index
    %99 = vector.load %arg16[%c0_53, %c0_54] : memref<64x8xf32, #tpu.memory_space<vmem>>, vector<64x8xf32>
    %100 = arith.mulf %98, %99 : vector<64x8xf32>
    %cst_55 = arith.constant dense<0.000000e+00> : vector<64xf32>
    %101 = vector.multi_reduction <add>, %100, %cst_55 [1] : vector<64x8xf32> to vector<64xf32>
    %102 = vector.shape_cast %101 : vector<64xf32> to vector<64x1xf32>
    %c0_56 = arith.constant 0 : index
    %c0_57 = arith.constant 0 : index
    %103 = vector.load %arg14[%c0_56, %c0_57] : memref<64x8xf32, #tpu.memory_space<vmem>>, vector<64x8xf32>
    %cst_58 = arith.constant dense<0.000000e+00> : vector<64x8xf32>
    %104 = tpu.matmul %103, %82, %cst_58 {dimension_numbers = #tpu.dot_dimension_numbers<[1], [0], [0], [1], [0, 0, 1, 1], [], []>} : vector<64x8xf32>, vector<8x8xf32>, vector<64x8xf32> -> vector<64x8xf32>
    %c0_59 = arith.constant 0 : index
    %c0_60 = arith.constant 0 : index
    %105 = vector.load %arg15[%c0_59, %c0_60] : memref<8x64xf32, #tpu.memory_space<vmem>>, vector<8x64xf32>
    %cst_61 = arith.constant dense<0.000000e+00> : vector<64x64xf32>
    %106 = tpu.matmul %104, %105, %cst_61 {dimension_numbers = #tpu.dot_dimension_numbers<[1], [0], [0], [1], [0, 0, 1, 1], [], []>} : vector<64x8xf32>, vector<8x64xf32>, vector<64x64xf32> -> vector<64x64xf32>
    %107 = vector.broadcast %102 : vector<64x1xf32> to vector<64x64xf32>
    %108 = arith.mulf %107, %106 : vector<64x64xf32>
    %c0_62 = arith.constant 0 : index
    %c0_63 = arith.constant 0 : index
    %109 = vector.load %arg17[%c0_62, %c0_63] : memref<64x64xf32, #tpu.memory_space<vmem>>, vector<64x64xf32>
    %110 = arith.mulf %108, %109 : vector<64x64xf32>
    %c0_64 = arith.constant 0 : index
    %c0_65 = arith.constant 0 : index
    %111 = vector.load %arg18[%c0_64, %c0_65] : memref<64x64xf32, #tpu.memory_space<vmem>>, vector<64x64xf32>
    %112 = arith.addf %110, %111 : vector<64x64xf32>
    %cst_66 = arith.constant dense<0.000000e+00> : vector<64x256xf32>
    %113 = tpu.matmul %112, %59, %cst_66 {dimension_numbers = #tpu.dot_dimension_numbers<[1], [0], [0], [1], [0, 0, 1, 1], [], []>} : vector<64x64xf32>, vector<64x256xf32>, vector<64x256xf32> -> vector<64x256xf32>
    %c0_67 = arith.constant 0 : index
    %c0_68 = arith.constant 0 : index
    %114 = vector.load %arg19[%c0_67, %c0_68] : memref<64x1xf32, #tpu.memory_space<vmem>>, vector<64x1xf32>
    %115 = vector.broadcast %114 : vector<64x1xf32> to vector<64x256xf32>
    %116 = arith.addf %113, %115 : vector<64x256xf32>
    %c0_69 = arith.constant 0 : index
    %c0_70 = arith.constant 0 : index
    %c0_71 = arith.constant 0 : index
    %117 = vector.load %arg20[%c0_69, %c0_70, %c0_71] : memref<1x64x256xf32, #tpu.memory_space<vmem>>, vector<1x64x256xf32>
    %118 = vector.shape_cast %117 : vector<1x64x256xf32> to vector<64x256xf32>
    %119 = vector.shape_cast %116 : vector<64x256xf32> to vector<1x64x256xf32>
    tpu.vector_store %arg20[%c0_69, %c0_70, %c0_71], %119 {strides = array<i32>} : memref<1x64x256xf32, #tpu.memory_space<vmem>>, vector<1x64x256xf32>,
    return
  }
  func.func @transform_0(%arg0: i32) -> (i32, i32, i32) {
    %c0_i32 = arith.constant 0 : i32
    %c0_i32_0 = arith.constant 0 : i32
    %c0_i32_1 = arith.constant 0 : i32
    return %arg0, %c0_i32, %c0_i32_0 : i32, i32, i32
  }
  func.func @transform_1(%arg0: i32) -> (i32, i32) {
    %c0_i32 = arith.constant 0 : i32
    %c0_i32_0 = arith.constant 0 : i32
    %c0_i32_1 = arith.constant 0 : i32
    return %c0_i32, %c0_i32_0 : i32, i32
  }
  func.func @transform_2(%arg0: i32) -> (i32, i32) {
    %c0_i32 = arith.constant 0 : i32
    %c0_i32_0 = arith.constant 0 : i32
    %c0_i32_1 = arith.constant 0 : i32
    return %c0_i32, %c0_i32_0 : i32, i32
  }
  func.func @transform_3(%arg0: i32) -> (i32, i32) {
    %c0_i32 = arith.constant 0 : i32
    %c0_i32_0 = arith.constant 0 : i32
    %c0_i32_1 = arith.constant 0 : i32
    return %c0_i32, %c0_i32_0 : i32, i32
  }
  func.func @transform_4(%arg0: i32) -> (i32, i32) {
    %c0_i32 = arith.constant 0 : i32
    %c0_i32_0 = arith.constant 0 : i32
    %c0_i32_1 = arith.constant 0 : i32
    return %c0_i32, %c0_i32_0 : i32, i32
  }
  func.func @transform_5(%arg0: i32) -> (i32, i32) {
    %c0_i32 = arith.constant 0 : i32
    %c0_i32_0 = arith.constant 0 : i32
    %c0_i32_1 = arith.constant 0 : i32
    return %c0_i32, %c0_i32_0 : i32, i32
  }
  func.func @transform_6(%arg0: i32) -> (i32, i32) {
    %c0_i32 = arith.constant 0 : i32
    %c0_i32_0 = arith.constant 0 : i32
    %c0_i32_1 = arith.constant 0 : i32
    return %c0_i32, %c0_i32_0 : i32, i32
  }
  func.func @transform_7(%arg0: i32) -> (i32, i32) {
    %c0_i32 = arith.constant 0 : i32
    %c0_i32_0 = arith.constant 0 : i32
    %c0_i32_1 = arith.constant 0 : i32
    return %c0_i32, %c0_i32_0 : i32, i32
  }
  func.func @transform_8(%arg0: i32) -> (i32, i32) {
    %c0_i32 = arith.constant 0 : i32
    %c0_i32_0 = arith.constant 0 : i32
    %c0_i32_1 = arith.constant 0 : i32
    return %c0_i32, %c0_i32_0 : i32, i32
  }
  func.func @transform_9(%arg0: i32) -> (i32, i32) {
    %c0_i32 = arith.constant 0 : i32
    %c0_i32_0 = arith.constant 0 : i32
    %c0_i32_1 = arith.constant 0 : i32
    return %c0_i32, %c0_i32_0 : i32, i32
  }
  func.func @transform_10(%arg0: i32) -> (i32, i32) {
    %c0_i32 = arith.constant 0 : i32
    %c0_i32_0 = arith.constant 0 : i32
    %c0_i32_1 = arith.constant 0 : i32
    return %c0_i32, %c0_i32_0 : i32, i32
  }
  func.func @transform_11(%arg0: i32) -> (i32, i32) {
    %c0_i32 = arith.constant 0 : i32
    %c0_i32_0 = arith.constant 0 : i32
    %c0_i32_1 = arith.constant 0 : i32
    return %c0_i32, %c0_i32_0 : i32, i32
  }
  func.func @transform_12(%arg0: i32) -> (i32, i32) {
    %c0_i32 = arith.constant 0 : i32
    %c0_i32_0 = arith.constant 0 : i32
    %c0_i32_1 = arith.constant 0 : i32
    return %c0_i32, %c0_i32_0 : i32, i32
  }
  func.func @transform_13(%arg0: i32) -> (i32, i32) {
    %c0_i32 = arith.constant 0 : i32
    %c0_i32_0 = arith.constant 0 : i32
    %c0_i32_1 = arith.constant 0 : i32
    return %c0_i32, %c0_i32_0 : i32, i32
  }
  func.func @transform_14(%arg0: i32) -> (i32, i32) {
    %c0_i32 = arith.constant 0 : i32
    %c0_i32_0 = arith.constant 0 : i32
    %c0_i32_1 = arith.constant 0 : i32
    return %c0_i32, %c0_i32_0 : i32, i32
  }
  func.func @transform_15(%arg0: i32) -> (i32, i32) {
    %c0_i32 = arith.constant 0 : i32
    %c0_i32_0 = arith.constant 0 : i32
    %c0_i32_1 = arith.constant 0 : i32
    return %c0_i32, %c0_i32_0 : i32, i32
  }
  func.func @transform_16(%arg0: i32) -> (i32, i32) {
    %c0_i32 = arith.constant 0 : i32
    %c0_i32_0 = arith.constant 0 : i32
    %c0_i32_1 = arith.constant 0 : i32
    return %c0_i32, %c0_i32_0 : i32, i32
  }
  func.func @transform_17(%arg0: i32) -> (i32, i32) {
    %c0_i32 = arith.constant 0 : i32
    %c0_i32_0 = arith.constant 0 : i32
    %c0_i32_1 = arith.constant 0 : i32
    return %c0_i32, %c0_i32_0 : i32, i32
  }
  func.func @transform_18(%arg0: i32) -> (i32, i32) {
    %c0_i32 = arith.constant 0 : i32
    %c0_i32_0 = arith.constant 0 : i32
    %c0_i32_1 = arith.constant 0 : i32
    return %c0_i32, %c0_i32_0 : i32, i32
  }
  func.func @transform_19(%arg0: i32) -> (i32, i32, i32) {
    %c0_i32 = arith.constant 0 : i32
    %c0_i32_0 = arith.constant 0 : i32
    %c0_i32_1 = arith.constant 0 : i32
    return %arg0, %c0_i32, %c0_i32_0 : i32, i32, i32
  }
}

</mosaic_0001>

<llo_original>
// kernel: tile.8
$region0: #{tile.8}
  #allocation0 [shape = 's32[1]{0}', space=sflag, size = 0x4, scoped, tag = 'scoped memory for tile.8']
  %s0 = inlined_call_operand.vmem [shape: f32[8], index: 0, kind: input, shape index: {}]
  %s1 = inlined_call_operand.vmem [shape: f32[8,8], index: 1, kind: output, shape index: {}]
  // Predicated region
  $region2: #{tile.8} parent=0 // pred_check
    _
  $region3: #{tile.8} parent=0 // pred_check_branch
    %3 = sbr.rel (0) target = $region5
  $region4: #{tile.8} parent=0 // pred_region
    _
  $region5: #{tile.8} parent=0 // pred_fallthru
    _
  %v4 = vld [vmem:[%s0] ss:$0 sm:$0xff]
  %5 = vst [vmem:[%s1] sm:$0xff] %v4

// kernel: tile.0
$region0: #{tile.0}
  %s0 = inlined_call_operand.vmem [shape: f32[8,8], index: 0, kind: input, shape index: {}]
  %s1 = inlined_call_operand.vmem [shape: f32[64,1], index: 1, kind: output, shape index: {}]
  %v2 = vld [vmem:[%s0] sm:$0xff]
  %vm3 = vcmask 7168
  %4 = vst.msk [vmem:[%s1] ss:$8 sm:$0xf] %vm3, %v2
  %5 = vst.msk [vmem:[%s1] ss:$8 sm:$0xf0] %vm3, %v2
  %v6 = vld [vmem:[%s0] sm:$0xff]
  %7 = vrot.lane.b32.xlu0 %v6, 127
  %v8 = vpop.permute.xlu0 %7
  %vm9 = vcmask 7168
  %s10 = scalar_lea.vmem %s1, 1
  %11 = vst.msk [vmem:[%s10] ss:$8 sm:$0xf] %vm9, %v8
  %s12 = scalar_lea.vmem %s1, 1
  %13 = vst.msk [vmem:[%s12] ss:$8 sm:$0xf0] %vm9, %v8
  %v14 = vld [vmem:[%s0] sm:$0xff]
  %15 = vrot.lane.b32.xlu0 %v14, 126
  %v16 = vpop.permute.xlu0 %15
  %vm17 = vcmask 7168
  %s18 = scalar_lea.vmem %s1, 2
  %19 = vst.msk [vmem:[%s18] ss:$8 sm:$0xf] %vm17, %v16
  %s20 = scalar_lea.vmem %s1, 2
  %21 = vst.msk [vmem:[%s20] ss:$8 sm:$0xf0] %vm17, %v16
  %v22 = vld [vmem:[%s0] sm:$0xff]
  %23 = vrot.lane.b32.xlu0 %v22, 125
  %v24 = vpop.permute.xlu0 %23
  %vm25 = vcmask 7168
  %s26 = scalar_lea.vmem %s1, 3
  %27 = vst.msk [vmem:[%s26] ss:$8 sm:$0xf] %vm25, %v24
  %s28 = scalar_lea.vmem %s1, 3
  %29 = vst.msk [vmem:[%s28] ss:$8 sm:$0xf0] %vm25, %v24
  %v30 = vld [vmem:[%s0] sm:$0xff]
  %31 = vrot.lane.b32.xlu0 %v30, 124
  %v32 = vpop.permute.xlu0 %31
  %vm33 = vcmask 7168
  %s34 = scalar_lea.vmem %s1, 4
  %35 = vst.msk [vmem:[%s34] ss:$8 sm:$0xf] %vm33, %v32
  %s36 = scalar_lea.vmem %s1, 4
  %37 = vst.msk [vmem:[%s36] ss:$8 sm:$0xf0] %vm33, %v32
  %v38 = vld [vmem:[%s0] sm:$0xff]
  %39 = vrot.lane.b32.xlu0 %v38, 123
  %v40 = vpop.permute.xlu0 %39
  %vm41 = vcmask 7168
  %s42 = scalar_lea.vmem %s1, 5
  %43 = vst.msk [vmem:[%s42] ss:$8 sm:$0xf] %vm41, %v40
  %s44 = scalar_lea.vmem %s1, 5
  %45 = vst.msk [vmem:[%s44] ss:$8 sm:$0xf0] %vm41, %v40
  %v46 = vld [vmem:[%s0] sm:$0xff]
  %47 = vrot.lane.b32.xlu0 %v46, 122
  %v48 = vpop.permute.xlu0 %47
  %vm49 = vcmask 7168
  %s50 = scalar_lea.vmem %s1, 6
  %51 = vst.msk [vmem:[%s50] ss:$8 sm:$0xf] %vm49, %v48
  %s52 = scalar_lea.vmem %s1, 6
  %53 = vst.msk [vmem:[%s52] ss:$8 sm:$0xf0] %vm49, %v48
  %v54 = vld [vmem:[%s0] sm:$0xff]
  %55 = vrot.lane.b32.xlu0 %v54, 121
  %v56 = vpop.permute.xlu0 %55
  %vm57 = vcmask 7168
  %s58 = scalar_lea.vmem %s1, 7
  %59 = vst.msk [vmem:[%s58] ss:$8 sm:$0xf] %vm57, %v56
  %s60 = scalar_lea.vmem %s1, 7
  %61 = vst.msk [vmem:[%s60] ss:$8 sm:$0xf0] %vm57, %v56

// kernel: ta_se_block_new_batched.1
$region0: #{ta_se_block_new_batched.1}
  #allocation0 [shape = 'u32[]', space=smem, size = 0x4, offset = 0x4, fixed_abs, tag = 'smem constant byte address 0x4 - core index']
  #allocation1 [shape = 'u32[72,128]{1,0:T(1,128)}', space=vmem, size = 0x9000, scoped, tag = 'internal scratch']
  %s0 = inlined_call_operand.vmem [shape: f32[2,16,2048], index: 0, kind: input, shape index: {}]
  %s1 = inlined_call_operand.vmem [shape: f32[48,16], index: 1, kind: input, shape index: {}]
  %s2 = inlined_call_operand.vmem [shape: f32[48,16], index: 2, kind: input, shape index: {}]
  %s3 = inlined_call_operand.vmem [shape: f32[48,16], index: 3, kind: input, shape index: {}]
  %s4 = inlined_call_operand.vmem [shape: f32[16,1], index: 4, kind: input, shape index: {}]
  %s5 = inlined_call_operand.vmem [shape: f32[24,16], index: 5, kind: input, shape index: {}]
  %s6 = inlined_call_operand.vmem [shape: f32[8,1], index: 6, kind: input, shape index: {}]
  %s7 = inlined_call_operand.vmem [shape: f32[1,2048], index: 7, kind: input, shape index: {}]
  %s8 = inlined_call_operand.vmem [shape: f32[1,2048], index: 8, kind: input, shape index: {}]
  %s9 = inlined_call_operand.vmem [shape: f32[1,2048], index: 9, kind: input, shape index: {}]
  %s10 = inlined_call_operand.vmem [shape: f32[1,2048], index: 10, kind: input, shape index: {}]
  %s11 = inlined_call_operand.vmem [shape: f32[8,16], index: 11, kind: input, shape index: {}]
  %s12 = inlined_call_operand.vmem [shape: f32[16,8], index: 12, kind: input, shape index: {}]
  %s13 = inlined_call_operand.vmem [shape: f32[64,8], index: 13, kind: input, shape index: {}]
  %s14 = inlined_call_operand.vmem [shape: f32[8,64], index: 14, kind: input, shape index: {}]
  %s15 = inlined_call_operand.vmem [shape: f32[64,8], index: 15, kind: input, shape index: {}]
  %s16 = inlined_call_operand.vmem [shape: f32[64,64], index: 16, kind: input, shape index: {}]
  %s17 = inlined_call_operand.vmem [shape: f32[64,64], index: 17, kind: input, shape index: {}]
  %s18 = inlined_call_operand.vmem [shape: f32[64,1], index: 18, kind: input, shape index: {}]
  %s19 = inlined_call_operand.vmem [shape: f32[2,64,256], index: 19, kind: output, shape index: {}]
  %s20 = sld [smem:[#allocation0]]
  $region109: #{ta_se_block_new_batched.1} parent=0
    _
  %s22 = ssub.s32 1, %s20
  %s23 = scalar_select 0, %s22, %s20
  loop: start=0, step=1, limit=4
  $region2: #{ta_se_block_new_batched.1} parent=0 // loop_pre_header
    _
  $region3: #{ta_se_block_new_batched.1} parent=0 // loop_header
    %s25 = sphi 0, %s29
    %p26 = scmp.ge.s32.totalorder %s25, 4
    %s35 = sphi 0, %s37
    %s38 = sphi 0, %s35
    %s39 = sphi 0, %s38
    %s55 = sphi 0, %s39
    %s59 = sphi 0, %s59
    %s61 = sphi 0, %s59
    %s62 = sphi 0, %s61
    %s76 = sphi 0, %s62
    %s80 = sphi 0, %s80
    %s82 = sphi 0, %s80
    %s83 = sphi 0, %s82
    %s97 = sphi 0, %s83
    %s101 = sphi 0, %s101
    %s103 = sphi 0, %s101
    %s104 = sphi 0, %s103
    %s118 = sphi 0, %s104
    %s122 = sphi 0, %s122
    %s124 = sphi 0, %s122
    %s125 = sphi 0, %s124
    %s139 = sphi 0, %s125
    %s143 = sphi 0, %s143
    %s145 = sphi 0, %s143
    %s146 = sphi 0, %s145
    %s160 = sphi 0, %s146
    %s164 = sphi 0, %s164
    %s166 = sphi 0, %s164
    %s167 = sphi 0, %s166
    %s181 = sphi 0, %s167
    %s185 = sphi 0, %s185
    %s187 = sphi 0, %s185
    %s188 = sphi 0, %s187
    %s202 = sphi 0, %s188
    %s206 = sphi 0, %s206
    %s208 = sphi 0, %s206
    %s209 = sphi 0, %s208
    %s223 = sphi 0, %s209
    %s227 = sphi 0, %s227
    %s229 = sphi 0, %s227
    %s230 = sphi 0, %s229
    %s244 = sphi 0, %s230
    %s248 = sphi 0, %s248
    %s250 = sphi 0, %s248
    %s251 = sphi 0, %s250
    %s265 = sphi 0, %s251
    %s269 = sphi 0, %s269
    %s271 = sphi 0, %s269
    %s272 = sphi 0, %s271
    %s286 = sphi 0, %s272
    %s290 = sphi 0, %s290
    %s292 = sphi 0, %s290
    %s293 = sphi 0, %s292
    %s307 = sphi 0, %s293
    %s311 = sphi 0, %s311
    %s313 = sphi 0, %s311
    %s314 = sphi 0, %s313
    %s328 = sphi 0, %s314
    %s332 = sphi 0, %s332
    %s334 = sphi 0, %s332
    %s335 = sphi 0, %s334
    %s349 = sphi 0, %s335
    %s353 = sphi 0, %s353
    %s355 = sphi 0, %s353
    %s356 = sphi 0, %s355
    %s370 = sphi 0, %s356
    %s374 = sphi 0, %s374
    %s376 = sphi 0, %s374
    %s377 = sphi 0, %s376
    %s391 = sphi 0, %s377
    %s395 = sphi 0, %s395
    %s397 = sphi 0, %s395
    %s398 = sphi 0, %s397
    %s412 = sphi 0, %s398
    %s416 = sphi 0, %s416
    %s418 = sphi 0, %s416
    %s419 = sphi 0, %s418
    %s433 = sphi 0, %s419
    %s439 = sphi 0, %s441
    %s442 = sphi 0, %s439
    %s443 = sphi 0, %s442
    %s459 = sphi 0, %s443
  $region4: #{ta_se_block_new_batched.1} parent=0 // loop_header_branch
    %28 = sbr.rel (%p26) target = $region8
  $region5: #{ta_se_block_new_batched.1} parent=0 // loop_body
    %s30 = ssub.s32 %s25, 1
    %s31 = ssub.s32 %s25, 2
    %s32 = sadd.s32 %s25, 1
    %s33 = ssub.s32 %s25, %s32
    %p34 = scmp.eq.s32.totalorder %s33, 0
    %s36 = sadd.s32 %s35, 1
    %s37 = scalar_select %p34, %s35, %s36
    %p40 = pneg %p34
    %p41 = scmp.eq.s32.totalorder %s25, 1
    %p42 = por %p40, %p41
    %p43 = scmp.ne.s32.totalorder %s35, %s38
    %p44 = scmp.eq.s32.totalorder %s25, 0
    %p45 = por %p43, %p44
    %p46 = scmp.ne.s32.totalorder %s35, %s38
    %p47 = scmp.eq.s32.totalorder %s30, 1
    %p48 = por %p46, %p47
    %p49 = scmp.ne.s32.totalorder %s38, %s39
    %p50 = scmp.eq.s32.totalorder %s30, 0
    %p51 = por %p49, %p50
    %p52 = scmp.ne.s32.totalorder %s38, %s39
    %p53 = scmp.eq.s32.totalorder %s31, 1
    %p54 = por %p52, %p53
    %p56 = scmp.ne.s32.totalorder %s39, %s55
    %p57 = scmp.eq.s32.totalorder %s31, 0
    %p58 = por %p56, %p57
    %s60 = sadd.s32 %s59, 1
    %p63 = scmp.eq.s32.totalorder %s25, 1
    %p64 = scmp.ne.s32.totalorder %s59, %s61
    %p65 = scmp.eq.s32.totalorder %s25, 0
    %p66 = por %p64, %p65
    %p67 = scmp.ne.s32.totalorder %s59, %s61
    %p68 = scmp.eq.s32.totalorder %s30, 1
    %p69 = por %p67, %p68
    %p70 = scmp.ne.s32.totalorder %s61, %s62
    %p71 = scmp.eq.s32.totalorder %s30, 0
    %p72 = por %p70, %p71
    %p73 = scmp.ne.s32.totalorder %s61, %s62
    %p74 = scmp.eq.s32.totalorder %s31, 1
    %p75 = por %p73, %p74
    %p77 = scmp.ne.s32.totalorder %s62, %s76
    %p78 = scmp.eq.s32.totalorder %s31, 0
    %p79 = por %p77, %p78
    %s81 = sadd.s32 %s80, 1
    %p84 = scmp.eq.s32.totalorder %s25, 1
    %p85 = scmp.ne.s32.totalorder %s80, %s82
    %p86 = scmp.eq.s32.totalorder %s25, 0
    %p87 = por %p85, %p86
    %p88 = scmp.ne.s32.totalorder %s80, %s82
    %p89 = scmp.eq.s32.totalorder %s30, 1
    %p90 = por %p88, %p89
    %p91 = scmp.ne.s32.totalorder %s82, %s83
    %p92 = scmp.eq.s32.totalorder %s30, 0
    %p93 = por %p91, %p92
    %p94 = scmp.ne.s32.totalorder %s82, %s83
    %p95 = scmp.eq.s32.totalorder %s31, 1
    %p96 = por %p94, %p95
    %p98 = scmp.ne.s32.totalorder %s83, %s97
    %p99 = scmp.eq.s32.totalorder %s31, 0
    %p100 = por %p98, %p99
    %s102 = sadd.s32 %s101, 1
    %p105 = scmp.eq.s32.totalorder %s25, 1
    %p106 = scmp.ne.s32.totalorder %s101, %s103
    %p107 = scmp.eq.s32.totalorder %s25, 0
    %p108 = por %p106, %p107
    %p109 = scmp.ne.s32.totalorder %s101, %s103
    %p110 = scmp.eq.s32.totalorder %s30, 1
    %p111 = por %p109, %p110
    %p112 = scmp.ne.s32.totalorder %s103, %s104
    %p113 = scmp.eq.s32.totalorder %s30, 0
    %p114 = por %p112, %p113
    %p115 = scmp.ne.s32.totalorder %s103, %s104
    %p116 = scmp.eq.s32.totalorder %s31, 1
    %p117 = por %p115, %p116
    %p119 = scmp.ne.s32.totalorder %s104, %s118
    %p120 = scmp.eq.s32.totalorder %s31, 0
    %p121 = por %p119, %p120
    %s123 = sadd.s32 %s122, 1
    %p126 = scmp.eq.s32.totalorder %s25, 1
    %p127 = scmp.ne.s32.totalorder %s122, %s124
    %p128 = scmp.eq.s32.totalorder %s25, 0
    %p129 = por %p127, %p128
    %p130 = scmp.ne.s32.totalorder %s122, %s124
    %p131 = scmp.eq.s32.totalorder %s30, 1
    %p132 = por %p130, %p131
    %p133 = scmp.ne.s32.totalorder %s124, %s125
    %p134 = scmp.eq.s32.totalorder %s30, 0
    %p135 = por %p133, %p134
    %p136 = scmp.ne.s32.totalorder %s124, %s125
    %p137 = scmp.eq.s32.totalorder %s31, 1
    %p138 = por %p136, %p137
    %p140 = scmp.ne.s32.totalorder %s125, %s139
    %p141 = scmp.eq.s32.totalorder %s31, 0
    %p142 = por %p140, %p141
    %s144 = sadd.s32 %s143, 1
    %p147 = scmp.eq.s32.totalorder %s25, 1
    %p148 = scmp.ne.s32.totalorder %s143, %s145
    %p149 = scmp.eq.s32.totalorder %s25, 0
    %p150 = por %p148, %p149
    %p151 = scmp.ne.s32.totalorder %s143, %s145
    %p152 = scmp.eq.s32.totalorder %s30, 1
    %p153 = por %p151, %p152
    %p154 = scmp.ne.s32.totalorder %s145, %s146
    %p155 = scmp.eq.s32.totalorder %s30, 0
    %p156 = por %p154, %p155
    %p157 = scmp.ne.s32.totalorder %s145, %s146
    %p158 = scmp.eq.s32.totalorder %s31, 1
    %p159 = por %p157, %p158
    %p161 = scmp.ne.s32.totalorder %s146, %s160
    %p162 = scmp.eq.s32.totalorder %s31, 0
    %p163 = por %p161, %p162
    %s165 = sadd.s32 %s164, 1
    %p168 = scmp.eq.s32.totalorder %s25, 1
    %p169 = scmp.ne.s32.totalorder %s164, %s166
    %p170 = scmp.eq.s32.totalorder %s25, 0
    %p171 = por %p169, %p170
    %p172 = scmp.ne.s32.totalorder %s164, %s166
    %p173 = scmp.eq.s32.totalorder %s30, 1
    %p174 = por %p172, %p173
    %p175 = scmp.ne.s32.totalorder %s166, %s167
    %p176 = scmp.eq.s32.totalorder %s30, 0
    %p177 = por %p175, %p176
    %p178 = scmp.ne.s32.totalorder %s166, %s167
    %p179 = scmp.eq.s32.totalorder %s31, 1
    %p180 = por %p178, %p179
    %p182 = scmp.ne.s32.totalorder %s167, %s181
    %p183 = scmp.eq.s32.totalorder %s31, 0
    %p184 = por %p182, %p183
    %s186 = sadd.s32 %s185, 1
    %p189 = scmp.eq.s32.totalorder %s25, 1
    %p190 = scmp.ne.s32.totalorder %s185, %s187
    %p191 = scmp.eq.s32.totalorder %s25, 0
    %p192 = por %p190, %p191
    %p193 = scmp.ne.s32.totalorder %s185, %s187
    %p194 = scmp.eq.s32.totalorder %s30, 1
    %p195 = por %p193, %p194
    %p196 = scmp.ne.s32.totalorder %s187, %s188
    %p197 = scmp.eq.s32.totalorder %s30, 0
    %p198 = por %p196, %p197
    %p199 = scmp.ne.s32.totalorder %s187, %s188
    %p200 = scmp.eq.s32.totalorder %s31, 1
    %p201 = por %p199, %p200
    %p203 = scmp.ne.s32.totalorder %s188, %s202
    %p204 = scmp.eq.s32.totalorder %s31, 0
    %p205 = por %p203, %p204
    %s207 = sadd.s32 %s206, 1
    %p210 = scmp.eq.s32.totalorder %s25, 1
    %p211 = scmp.ne.s32.totalorder %s206, %s208
    %p212 = scmp.eq.s32.totalorder %s25, 0
    %p213 = por %p211, %p212
    %p214 = scmp.ne.s32.totalorder %s206, %s208
    %p215 = scmp.eq.s32.totalorder %s30, 1
    %p216 = por %p214, %p215
    %p217 = scmp.ne.s32.totalorder %s208, %s209
    %p218 = scmp.eq.s32.totalorder %s30, 0
    %p219 = por %p217, %p218
    %p220 = scmp.ne.s32.totalorder %s208, %s209
    %p221 = scmp.eq.s32.totalorder %s31, 1
    %p222 = por %p220, %p221
    %p224 = scmp.ne.s32.totalorder %s209, %s223
    %p225 = scmp.eq.s32.totalorder %s31, 0
    %p226 = por %p224, %p225
    %s228 = sadd.s32 %s227, 1
    %p231 = scmp.eq.s32.totalorder %s25, 1
    %p232 = scmp.ne.s32.totalorder %s227, %s229
    %p233 = scmp.eq.s32.totalorder %s25, 0
    %p234 = por %p232, %p233
    %p235 = scmp.ne.s32.totalorder %s227, %s229
    %p236 = scmp.eq.s32.totalorder %s30, 1
    %p237 = por %p235, %p236
    %p238 = scmp.ne.s32.totalorder %s229, %s230
    %p239 = scmp.eq.s32.totalorder %s30, 0
    %p240 = por %p238, %p239
    %p241 = scmp.ne.s32.totalorder %s229, %s230
    %p242 = scmp.eq.s32.totalorder %s31, 1
    %p243 = por %p241, %p242
    %p245 = scmp.ne.s32.totalorder %s230, %s244
    %p246 = scmp.eq.s32.totalorder %s31, 0
    %p247 = por %p245, %p246
    %s249 = sadd.s32 %s248, 1
    %p252 = scmp.eq.s32.totalorder %s25, 1
    %p253 = scmp.ne.s32.totalorder %s248, %s250
    %p254 = scmp.eq.s32.totalorder %s25, 0
    %p255 = por %p253, %p254
    %p256 = scmp.ne.s32.totalorder %s248, %s250
    %p257 = scmp.eq.s32.totalorder %s30, 1
    %p258 = por %p256, %p257
    %p259 = scmp.ne.s32.totalorder %s250, %s251
    %p260 = scmp.eq.s32.totalorder %s30, 0
    %p261 = por %p259, %p260
    %p262 = scmp.ne.s32.totalorder %s250, %s251
    %p263 = scmp.eq.s32.totalorder %s31, 1
    %p264 = por %p262, %p263
    %p266 = scmp.ne.s32.totalorder %s251, %s265
    %p267 = scmp.eq.s32.totalorder %s31, 0
    %p268 = por %p266, %p267
    %s270 = sadd.s32 %s269, 1
    %p273 = scmp.eq.s32.totalorder %s25, 1
    %p274 = scmp.ne.s32.totalorder %s269, %s271
    %p275 = scmp.eq.s32.totalorder %s25, 0
    %p276 = por %p274, %p275
    %p277 = scmp.ne.s32.totalorder %s269, %s271
    %p278 = scmp.eq.s32.totalorder %s30, 1
    %p279 = por %p277, %p278
    %p280 = scmp.ne.s32.totalorder %s271, %s272
    %p281 = scmp.eq.s32.totalorder %s30, 0
    %p282 = por %p280, %p281
    %p283 = scmp.ne.s32.totalorder %s271, %s272
    %p284 = scmp.eq.s32.totalorder %s31, 1
    %p285 = por %p283, %p284
    %p287 = scmp.ne.s32.totalorder %s272, %s286
    %p288 = scmp.eq.s32.totalorder %s31, 0
    %p289 = por %p287, %p288
    %s291 = sadd.s32 %s290, 1
    %p294 = scmp.eq.s32.totalorder %s25, 1
    %p295 = scmp.ne.s32.totalorder %s290, %s292
    %p296 = scmp.eq.s32.totalorder %s25, 0
    %p297 = por %p295, %p296
    %p298 = scmp.ne.s32.totalorder %s290, %s292
    %p299 = scmp.eq.s32.totalorder %s30, 1
    %p300 = por %p298, %p299
    %p301 = scmp.ne.s32.totalorder %s292, %s293
    %p302 = scmp.eq.s32.totalorder %s30, 0
    %p303 = por %p301, %p302
    %p304 = scmp.ne.s32.totalorder %s292, %s293
    %p305 = scmp.eq.s32.totalorder %s31, 1
    %p306 = por %p304, %p305
    %p308 = scmp.ne.s32.totalorder %s293, %s307
    %p309 = scmp.eq.s32.totalorder %s31, 0
    %p310 = por %p308, %p309
    %s312 = sadd.s32 %s311, 1
    %p315 = scmp.eq.s32.totalorder %s25, 1
    %p316 = scmp.ne.s32.totalorder %s311, %s313
    %p317 = scmp.eq.s32.totalorder %s25, 0
    %p318 = por %p316, %p317
    %p319 = scmp.ne.s32.totalorder %s311, %s313
    %p320 = scmp.eq.s32.totalorder %s30, 1
    %p321 = por %p319, %p320
    %p322 = scmp.ne.s32.totalorder %s313, %s314
    %p323 = scmp.eq.s32.totalorder %s30, 0
    %p324 = por %p322, %p323
    %p325 = scmp.ne.s32.totalorder %s313, %s314
    %p326 = scmp.eq.s32.totalorder %s31, 1
    %p327 = por %p325, %p326
    %p329 = scmp.ne.s32.totalorder %s314, %s328
    %p330 = scmp.eq.s32.totalorder %s31, 0
    %p331 = por %p329, %p330
    %s333 = sadd.s32 %s332, 1
    %p336 = scmp.eq.s32.totalorder %s25, 1
    %p337 = scmp.ne.s32.totalorder %s332, %s334
    %p338 = scmp.eq.s32.totalorder %s25, 0
    %p339 = por %p337, %p338
    %p340 = scmp.ne.s32.totalorder %s332, %s334
    %p341 = scmp.eq.s32.totalorder %s30, 1
    %p342 = por %p340, %p341
    %p343 = scmp.ne.s32.totalorder %s334, %s335
    %p344 = scmp.eq.s32.totalorder %s30, 0
    %p345 = por %p343, %p344
    %p346 = scmp.ne.s32.totalorder %s334, %s335
    %p347 = scmp.eq.s32.totalorder %s31, 1
    %p348 = por %p346, %p347
    %p350 = scmp.ne.s32.totalorder %s335, %s349
    %p351 = scmp.eq.s32.totalorder %s31, 0
    %p352 = por %p350, %p351
    %s354 = sadd.s32 %s353, 1
    %p357 = scmp.eq.s32.totalorder %s25, 1
    %p358 = scmp.ne.s32.totalorder %s353, %s355
    %p359 = scmp.eq.s32.totalorder %s25, 0
    %p360 = por %p358, %p359
    %p361 = scmp.ne.s32.totalorder %s353, %s355
    %p362 = scmp.eq.s32.totalorder %s30, 1
    %p363 = por %p361, %p362
    %p364 = scmp.ne.s32.totalorder %s355, %s356
    %p365 = scmp.eq.s32.totalorder %s30, 0
    %p366 = por %p364, %p365
    %p367 = scmp.ne.s32.totalorder %s355, %s356
    %p368 = scmp.eq.s32.totalorder %s31, 1
    %p369 = por %p367, %p368
    %p371 = scmp.ne.s32.totalorder %s356, %s370
    %p372 = scmp.eq.s32.totalorder %s31, 0
    %p373 = por %p371, %p372
    %s375 = sadd.s32 %s374, 1
    %p378 = scmp.eq.s32.totalorder %s25, 1
    %p379 = scmp.ne.s32.totalorder %s374, %s376
    %p380 = scmp.eq.s32.totalorder %s25, 0
    %p381 = por %p379, %p380
    %p382 = scmp.ne.s32.totalorder %s374, %s376
    %p383 = scmp.eq.s32.totalorder %s30, 1
    %p384 = por %p382, %p383
    %p385 = scmp.ne.s32.totalorder %s376, %s377
    %p386 = scmp.eq.s32.totalorder %s30, 0
    %p387 = por %p385, %p386
    %p388 = scmp.ne.s32.totalorder %s376, %s377
    %p389 = scmp.eq.s32.totalorder %s31, 1
    %p390 = por %p388, %p389
    %p392 = scmp.ne.s32.totalorder %s377, %s391
    %p393 = scmp.eq.s32.totalorder %s31, 0
    %p394 = por %p392, %p393
    %s396 = sadd.s32 %s395, 1
    %p399 = scmp.eq.s32.totalorder %s25, 1
    %p400 = scmp.ne.s32.totalorder %s395, %s397
    %p401 = scmp.eq.s32.totalorder %s25, 0
    %p402 = por %p400, %p401
    %p403 = scmp.ne.s32.totalorder %s395, %s397
    %p404 = scmp.eq.s32.totalorder %s30, 1
    %p405 = por %p403, %p404
    %p406 = scmp.ne.s32.totalorder %s397, %s398
    %p407 = scmp.eq.s32.totalorder %s30, 0
    %p408 = por %p406, %p407
    %p409 = scmp.ne.s32.totalorder %s397, %s398
    %p410 = scmp.eq.s32.totalorder %s31, 1
    %p411 = por %p409, %p410
    %p413 = scmp.ne.s32.totalorder %s398, %s412
    %p414 = scmp.eq.s32.totalorder %s31, 0
    %p415 = por %p413, %p414
    %s417 = sadd.s32 %s416, 1
    %p420 = scmp.eq.s32.totalorder %s25, 1
    %p421 = scmp.ne.s32.totalorder %s416, %s418
    %p422 = scmp.eq.s32.totalorder %s25, 0
    %p423 = por %p421, %p422
    %p424 = scmp.ne.s32.totalorder %s416, %s418
    %p425 = scmp.eq.s32.totalorder %s30, 1
    %p426 = por %p424, %p425
    %p427 = scmp.ne.s32.totalorder %s418, %s419
    %p428 = scmp.eq.s32.totalorder %s30, 0
    %p429 = por %p427, %p428
    %p430 = scmp.ne.s32.totalorder %s418, %s419
    %p431 = scmp.eq.s32.totalorder %s31, 1
    %p432 = por %p430, %p431
    %p434 = scmp.ne.s32.totalorder %s419, %s433
    %p435 = scmp.eq.s32.totalorder %s31, 0
    %p436 = por %p434, %p435
    %s437 = ssub.s32 %s25, %s32
    %p438 = scmp.eq.s32.totalorder %s437, 0
    %s440 = sadd.s32 %s439, 1
    %s441 = scalar_select %p438, %s439, %s440
    %p444 = pneg %p438
    %p445 = scmp.eq.s32.totalorder %s25, 1
    %p446 = por %p444, %p445
    %p447 = scmp.ne.s32.totalorder %s439, %s442
    %p448 = scmp.eq.s32.totalorder %s25, 0
    %p449 = por %p447, %p448
    %p450 = scmp.ne.s32.totalorder %s439, %s442
    %p451 = scmp.eq.s32.totalorder %s30, 1
    %p452 = por %p450, %p451
    %p453 = scmp.ne.s32.totalorder %s442, %s443
    %p454 = scmp.eq.s32.totalorder %s30, 0
    %p455 = por %p453, %p454
    %p456 = scmp.ne.s32.totalorder %s442, %s443
    %p457 = scmp.eq.s32.totalorder %s31, 1
    %p458 = por %p456, %p457
    %p460 = scmp.ne.s32.totalorder %s443, %s459
    %p461 = scmp.eq.s32.totalorder %s31, 0
    %p462 = por %p460, %p461
    %p463 = scmp.le.s32.totalorder 1, %s25
    %p464 = scmp.lt.s32.totalorder %s25, 3
    %p465 = pnand %p463, %p464
    %p466 = pneg %p465
    // Predicated region
    $region9: #{ta_se_block_new_batched.1} parent=5 // pred_check
      _
    $region10: #{ta_se_block_new_batched.1} parent=5 // pred_check_branch
      %468 = sbr.rel (%p465) target = $region12
    $region11: #{ta_se_block_new_batched.1} parent=5 // pred_region
      %s469 = ssub.s32 %s25, 1
      // Predicated region
      $region13: #{ta_se_block_new_batched.1} parent=11 // pred_check
        %p470 = pneg %p72
      $region14: #{ta_se_block_new_batched.1} parent=11 // pred_check_branch
        %472 = sbr.rel (%p470) target = $region16
      $region15: #{ta_se_block_new_batched.1} parent=11 // pred_region
        _
      $region16: #{ta_se_block_new_batched.1} parent=11 // pred_fallthru
        _
      // Predicated region
      $region17: #{ta_se_block_new_batched.1} parent=11 // pred_check
        %p473 = pneg %p93
      $region18: #{ta_se_block_new_batched.1} parent=11 // pred_check_branch
        %475 = sbr.rel (%p473) target = $region20
      $region19: #{ta_se_block_new_batched.1} parent=11 // pred_region
        _
      $region20: #{ta_se_block_new_batched.1} parent=11 // pred_fallthru
        _
      // Predicated region
      $region21: #{ta_se_block_new_batched.1} parent=11 // pred_check
        %p476 = pneg %p114
      $region22: #{ta_se_block_new_batched.1} parent=11 // pred_check_branch
        %478 = sbr.rel (%p476) target = $region24
      $region23: #{ta_se_block_new_batched.1} parent=11 // pred_region
        _
      $region24: #{ta_se_block_new_batched.1} parent=11 // pred_fallthru
        _
      // Predicated region
      $region25: #{ta_se_block_new_batched.1} parent=11 // pred_check
        %p479 = pneg %p135
      $region26: #{ta_se_block_new_batched.1} parent=11 // pred_check_branch
        %481 = sbr.rel (%p479) target = $region28
      $region27: #{ta_se_block_new_batched.1} parent=11 // pred_region
        _
      $region28: #{ta_se_block_new_batched.1} parent=11 // pred_fallthru
        _
      // Predicated region
      $region29: #{ta_se_block_new_batched.1} parent=11 // pred_check
        %p482 = pneg %p156
      $region30: #{ta_se_block_new_batched.1} parent=11 // pred_check_branch
        %484 = sbr.rel (%p482) target = $region32
      $region31: #{ta_se_block_new_batched.1} parent=11 // pred_region
        _
      $region32: #{ta_se_block_new_batched.1} parent=11 // pred_fallthru
        _
      // Predicated region
      $region33: #{ta_se_block_new_batched.1} parent=11 // pred_check
        %p485 = pneg %p177
      $region34: #{ta_se_block_new_batched.1} parent=11 // pred_check_branch
        %487 = sbr.rel (%p485) target = $region36
      $region35: #{ta_se_block_new_batched.1} parent=11 // pred_region
        _
      $region36: #{ta_se_block_new_batched.1} parent=11 // pred_fallthru
        _
      // Predicated region
      $region37: #{ta_se_block_new_batched.1} parent=11 // pred_check
        %p488 = pneg %p198
      $region38: #{ta_se_block_new_batched.1} parent=11 // pred_check_branch
        %490 = sbr.rel (%p488) target = $region40
      $region39: #{ta_se_block_new_batched.1} parent=11 // pred_region
        _
      $region40: #{ta_se_block_new_batched.1} parent=11 // pred_fallthru
        _
      // Predicated region
      $region41: #{ta_se_block_new_batched.1} parent=11 // pred_check
        %p491 = pneg %p219
      $region42: #{ta_se_block_new_batched.1} parent=11 // pred_check_branch
        %493 = sbr.rel (%p491) target = $region44
      $region43: #{ta_se_block_new_batched.1} parent=11 // pred_region
        _
      $region44: #{ta_se_block_new_batched.1} parent=11 // pred_fallthru
        _
      // Predicated region
      $region45: #{ta_se_block_new_batched.1} parent=11 // pred_check
        %p494 = pneg %p240
      $region46: #{ta_se_block_new_batched.1} parent=11 // pred_check_branch
        %496 = sbr.rel (%p494) target = $region48
      $region47: #{ta_se_block_new_batched.1} parent=11 // pred_region
        _
      $region48: #{ta_se_block_new_batched.1} parent=11 // pred_fallthru
        _
      // Predicated region
      $region49: #{ta_se_block_new_batched.1} parent=11 // pred_check
        %p497 = pneg %p261
      $region50: #{ta_se_block_new_batched.1} parent=11 // pred_check_branch
        %499 = sbr.rel (%p497) target = $region52
      $region51: #{ta_se_block_new_batched.1} parent=11 // pred_region
        _
      $region52: #{ta_se_block_new_batched.1} parent=11 // pred_fallthru
        _
      // Predicated region
      $region53: #{ta_se_block_new_batched.1} parent=11 // pred_check
        %p500 = pneg %p282
      $region54: #{ta_se_block_new_batched.1} parent=11 // pred_check_branch
        %502 = sbr.rel (%p500) target = $region56
      $region55: #{ta_se_block_new_batched.1} parent=11 // pred_region
        _
      $region56: #{ta_se_block_new_batched.1} parent=11 // pred_fallthru
        _
      // Predicated region
      $region57: #{ta_se_block_new_batched.1} parent=11 // pred_check
        %p503 = pneg %p303
      $region58: #{ta_se_block_new_batched.1} parent=11 // pred_check_branch
        %505 = sbr.rel (%p503) target = $region60
      $region59: #{ta_se_block_new_batched.1} parent=11 // pred_region
        _
      $region60: #{ta_se_block_new_batched.1} parent=11 // pred_fallthru
        _
      // Predicated region
      $region61: #{ta_se_block_new_batched.1} parent=11 // pred_check
        %p506 = pneg %p324
      $region62: #{ta_se_block_new_batched.1} parent=11 // pred_check_branch
        %508 = sbr.rel (%p506) target = $region64
      $region63: #{ta_se_block_new_batched.1} parent=11 // pred_region
        _
      $region64: #{ta_se_block_new_batched.1} parent=11 // pred_fallthru
        _
      // Predicated region
      $region65: #{ta_se_block_new_batched.1} parent=11 // pred_check
        %p509 = pneg %p345
      $region66: #{ta_se_block_new_batched.1} parent=11 // pred_check_branch
        %511 = sbr.rel (%p509) target = $region68
      $region67: #{ta_se_block_new_batched.1} parent=11 // pred_region
        _
      $region68: #{ta_se_block_new_batched.1} parent=11 // pred_fallthru
        _
      // Predicated region
      $region69: #{ta_se_block_new_batched.1} parent=11 // pred_check
        %p512 = pneg %p366
      $region70: #{ta_se_block_new_batched.1} parent=11 // pred_check_branch
        %514 = sbr.rel (%p512) target = $region72
      $region71: #{ta_se_block_new_batched.1} parent=11 // pred_region
        _
      $region72: #{ta_se_block_new_batched.1} parent=11 // pred_fallthru
        _
      // Predicated region
      $region73: #{ta_se_block_new_batched.1} parent=11 // pred_check
        %p515 = pneg %p387
      $region74: #{ta_se_block_new_batched.1} parent=11 // pred_check_branch
        %517 = sbr.rel (%p515) target = $region76
      $region75: #{ta_se_block_new_batched.1} parent=11 // pred_region
        _
      $region76: #{ta_se_block_new_batched.1} parent=11 // pred_fallthru
        _
      // Predicated region
      $region77: #{ta_se_block_new_batched.1} parent=11 // pred_check
        %p518 = pneg %p408
      $region78: #{ta_se_block_new_batched.1} parent=11 // pred_check_branch
        %520 = sbr.rel (%p518) target = $region80
      $region79: #{ta_se_block_new_batched.1} parent=11 // pred_region
        _
      $region80: #{ta_se_block_new_batched.1} parent=11 // pred_fallthru
        _
      // Predicated region
      $region81: #{ta_se_block_new_batched.1} parent=11 // pred_check
        %p521 = pneg %p429
      $region82: #{ta_se_block_new_batched.1} parent=11 // pred_check_branch
        %523 = sbr.rel (%p521) target = $region84
      $region83: #{ta_se_block_new_batched.1} parent=11 // pred_region
        _
      $region84: #{ta_se_block_new_batched.1} parent=11 // pred_fallthru
        _
    $region12: #{ta_se_block_new_batched.1} parent=5 // pred_fallthru
      _
    %p524 = scmp.lt.s32.totalorder %s25, 2
    // Predicated region
    $region85: #{ta_se_block_new_batched.1} parent=5 // pred_check
      %p525 = pneg %p524
    $region86: #{ta_se_block_new_batched.1} parent=5 // pred_check_branch
      %527 = sbr.rel (%p525) target = $region88
    $region87: #{ta_se_block_new_batched.1} parent=5 // pred_region
      // Predicated region
      $region89: #{ta_se_block_new_batched.1} parent=87 // pred_check
        %p528 = pneg %p45
      $region90: #{ta_se_block_new_batched.1} parent=87 // pred_check_branch
        %530 = sbr.rel (%p528) target = $region92
      $region91: #{ta_se_block_new_batched.1} parent=87 // pred_region
        %p531 = scmp.lt.s32.totalorder %s25, 1
        %s532 = scalar_select %p531, %s25, 1
        %s533 = smul.addr %s532, 32
        %s534 = smul.addr %s533, 8
        %s535 = scalar_lea.vmem %s0, %s534
      $region92: #{ta_se_block_new_batched.1} parent=87 // pred_fallthru
        _
    $region88: #{ta_se_block_new_batched.1} parent=5 // pred_fallthru
      _
    %p536 = scmp.le.s32.totalorder 1, %s25
    %p537 = scmp.lt.s32.totalorder %s25, 3
    %p538 = pnand %p536, %p537
    %p539 = pneg %p538
    // Predicated region
    $region93: #{ta_se_block_new_batched.1} parent=5 // pred_check
      _
    $region94: #{ta_se_block_new_batched.1} parent=5 // pred_check_branch
      %541 = sbr.rel (%p538) target = $region96
    $region95: #{ta_se_block_new_batched.1} parent=5 // pred_region
      %s542 = ssub.s32 %s25, 1
      %p543 = scmp.lt.s32.totalorder %s30, 1
      %s544 = scalar_select %p543, %s30, 1
      %s545 = smul.addr %s544, 32
      %s546 = smul.addr %s545, 8
      %s547 = scalar_lea.vmem %s0, %s546
      %p548 = pneg %p51
      %p549 = pneg %p48
      %p550 = pneg %p72
      %p551 = pneg %p69
      %p552 = pneg %p93
      %p553 = pneg %p90
      %p554 = pneg %p114
      %p555 = pneg %p111
      %p556 = pneg %p135
      %p557 = pneg %p132
      %p558 = pneg %p156
      %p559 = pneg %p153
      %p560 = pneg %p177
      %p561 = pneg %p174
      %p562 = pneg %p198
      %p563 = pneg %p195
      %p564 = pneg %p219
      %p565 = pneg %p216
      %p566 = pneg %p240
      %p567 = pneg %p237
      %p568 = pneg %p261
      %p569 = pneg %p258
      %p570 = pneg %p282
      %p571 = pneg %p279
      %p572 = pneg %p303
      %p573 = pneg %p300
      %p574 = pneg %p324
      %p575 = pneg %p321
      %p576 = pneg %p345
      %p577 = pneg %p342
      %p578 = pneg %p366
      %p579 = pneg %p363
      %p580 = pneg %p387
      %p581 = pneg %p384
      %p582 = pneg %p408
      %p583 = pneg %p405
      %p584 = pneg %p429
      %p585 = pneg %p426
      %p586 = pneg %p455
      %p587 = pneg %p452
      %p588 = scmp.lt.s32.totalorder %s30, 1
      %s589 = scalar_select %p588, %s30, 1
      %s590 = smul.addr %s589, 16
      %s591 = smul.addr %s590, 8
      %s592 = scalar_lea.vmem %s19, %s591
      %p593 = scmp.lt.s32.totalorder %s30, 1
      %s594 = scalar_select %p593, %s30, 1
      %s595 = smul.addr %s594, 32
      %s596 = smul.addr %s595, 8
      %s597 = scalar_lea.vmem %s0, %s596
      %p598 = scmp.lt.s32.totalorder %s30, 1
      %s599 = scalar_select %p598, %s30, 1
      %s600 = smul.addr %s599, 16
      %s601 = smul.addr %s600, 8
      %s602 = scalar_lea.vmem %s19, %s601
      %v603 = vld [vmem:[%s597] sm:$0xff]
      %v604 = vld [vmem:[%s597 + $0x8] sm:$0xff]
      %v605 = vld [vmem:[%s597 + $0x10] sm:$0xff]
      %v606 = vld [vmem:[%s597 + $0x18] sm:$0xff]
      %v607 = vld [vmem:[%s597 + $0x20] sm:$0xff]
      %v608 = vld [vmem:[%s597 + $0x28] sm:$0xff]
      %v609 = vld [vmem:[%s597 + $0x30] sm:$0xff]
      %v610 = vld [vmem:[%s597 + $0x38] sm:$0xff]
      %v611 = vld [vmem:[%s597 + $0x40] sm:$0xff]
      %v612 = vld [vmem:[%s597 + $0x48] sm:$0xff]
      %v613 = vld [vmem:[%s597 + $0x50] sm:$0xff]
      %v614 = vld [vmem:[%s597 + $0x58] sm:$0xff]
      %v615 = vld [vmem:[%s597 + $0x60] sm:$0xff]
      %v616 = vld [vmem:[%s597 + $0x68] sm:$0xff]
      %v617 = vld [vmem:[%s597 + $0x70] sm:$0xff]
      %v618 = vld [vmem:[%s597 + $0x78] sm:$0xff]
      %v619 = vld [vmem:[%s597 + $0x80] sm:$0xff]
      %v620 = vld [vmem:[%s597 + $0x88] sm:$0xff]
      %v621 = vld [vmem:[%s597 + $0x90] sm:$0xff]
      %v622 = vld [vmem:[%s597 + $0x98] sm:$0xff]
      %v623 = vld [vmem:[%s597 + $0xa0] sm:$0xff]
      %v624 = vld [vmem:[%s597 + $0xa8] sm:$0xff]
      %v625 = vld [vmem:[%s597 + $0xb0] sm:$0xff]
      %v626 = vld [vmem:[%s597 + $0xb8] sm:$0xff]
      %v627 = vld [vmem:[%s597 + $0xc0] sm:$0xff]
      %v628 = vld [vmem:[%s597 + $0xc8] sm:$0xff]
      %v629 = vld [vmem:[%s597 + $0xd0] sm:$0xff]
      %v630 = vld [vmem:[%s597 + $0xd8] sm:$0xff]
      %v631 = vld [vmem:[%s597 + $0xe0] sm:$0xff]
      %v632 = vld [vmem:[%s597 + $0xe8] sm:$0xff]
      %v633 = vld [vmem:[%s597 + $0xf0] sm:$0xff]
      %v634 = vld [vmem:[%s597 + $0xf8] sm:$0xff]
      %635 = vrot.lane.b32.xlu0 %v603, 1
      %v636 = vpop.permute.xlu0 %635
      %637 = vrot.lane.b32.xlu0 %v619, 1
      %v638 = vpop.permute.xlu0 %637
      %639 = vrot.lane.b32.xlu0 %v604, 1
      %v640 = vpop.permute.xlu0 %639
      %641 = vrot.lane.b32.xlu0 %v620, 1
      %v642 = vpop.permute.xlu0 %641
      %643 = vrot.lane.b32.xlu0 %v605, 1
      %v644 = vpop.permute.xlu0 %643
      %645 = vrot.lane.b32.xlu0 %v621, 1
      %v646 = vpop.permute.xlu0 %645
      %647 = vrot.lane.b32.xlu0 %v606, 1
      %v648 = vpop.permute.xlu0 %647
      %649 = vrot.lane.b32.xlu0 %v622, 1
      %v650 = vpop.permute.xlu0 %649
      %651 = vrot.lane.b32.xlu0 %v607, 1
      %v652 = vpop.permute.xlu0 %651
      %653 = vrot.lane.b32.xlu0 %v623, 1
      %v654 = vpop.permute.xlu0 %653
      %655 = vrot.lane.b32.xlu0 %v608, 1
      %v656 = vpop.permute.xlu0 %655
      %657 = vrot.lane.b32.xlu0 %v624, 1
      %v658 = vpop.permute.xlu0 %657
      %659 = vrot.lane.b32.xlu0 %v609, 1
      %v660 = vpop.permute.xlu0 %659
      %661 = vrot.lane.b32.xlu0 %v625, 1
      %v662 = vpop.permute.xlu0 %661
      %663 = vrot.lane.b32.xlu0 %v610, 1
      %v664 = vpop.permute.xlu0 %663
      %665 = vrot.lane.b32.xlu0 %v626, 1
      %v666 = vpop.permute.xlu0 %665
      %667 = vrot.lane.b32.xlu0 %v611, 1
      %v668 = vpop.permute.xlu0 %667
      %669 = vrot.lane.b32.xlu0 %v627, 1
      %v670 = vpop.permute.xlu0 %669
      %671 = vrot.lane.b32.xlu0 %v612, 1
      %v672 = vpop.permute.xlu0 %671
      %673 = vrot.lane.b32.xlu0 %v628, 1
      %v674 = vpop.permute.xlu0 %673
      %675 = vrot.lane.b32.xlu0 %v613, 1
      %v676 = vpop.permute.xlu0 %675
      %677 = vrot.lane.b32.xlu0 %v629, 1
      %v678 = vpop.permute.xlu0 %677
      %679 = vrot.lane.b32.xlu0 %v614, 1
      %v680 = vpop.permute.xlu0 %679
      %681 = vrot.lane.b32.xlu0 %v630, 1
      %v682 = vpop.permute.xlu0 %681
      %683 = vrot.lane.b32.xlu0 %v615, 1
      %v684 = vpop.permute.xlu0 %683
      %685 = vrot.lane.b32.xlu0 %v631, 1
      %v686 = vpop.permute.xlu0 %685
      %687 = vrot.lane.b32.xlu0 %v616, 1
      %v688 = vpop.permute.xlu0 %687
      %689 = vrot.lane.b32.xlu0 %v632, 1
      %v690 = vpop.permute.xlu0 %689
      %691 = vrot.lane.b32.xlu0 %v617, 1
      %v692 = vpop.permute.xlu0 %691
      %693 = vrot.lane.b32.xlu0 %v633, 1
      %v694 = vpop.permute.xlu0 %693
      %695 = vrot.lane.b32.xlu0 %v618, 1
      %v696 = vpop.permute.xlu0 %695
      %697 = vrot.lane.b32.xlu0 %v634, 1
      %v698 = vpop.permute.xlu0 %697
      %v699 = vlaneseq
      %v700 = vand.u32 %v699, 127
      %vm701 = vcmp.lt.s32.totalorder %v700, 1
      %v702 = vsel %vm701, %v692, %v696
      %v703 = vsel %vm701, %v694, %v698
      %v704 = vsel %vm701, %v688, %v692
      %v705 = vsel %vm701, %v690, %v694
      %v706 = vsel %vm701, %v684, %v688
      %v707 = vsel %vm701, %v686, %v690
      %v708 = vsel %vm701, %v680, %v684
      %v709 = vsel %vm701, %v682, %v686
      %v710 = vsel %vm701, %v676, %v680
      %v711 = vsel %vm701, %v678, %v682
      %v712 = vsel %vm701, %v672, %v676
      %v713 = vsel %vm701, %v674, %v678
      %v714 = vsel %vm701, %v668, %v672
      %v715 = vsel %vm701, %v670, %v674
      %v716 = vsel %vm701, %v664, %v668
      %v717 = vsel %vm701, %v666, %v670
      %v718 = vsel %vm701, %v660, %v664
      %v719 = vsel %vm701, %v662, %v666
      %v720 = vsel %vm701, %v656, %v660
      %v721 = vsel %vm701, %v658, %v662
      %v722 = vsel %vm701, %v652, %v656
      %v723 = vsel %vm701, %v654, %v658
      %v724 = vsel %vm701, %v648, %v652
      %v725 = vsel %vm701, %v650, %v654
      %v726 = vsel %vm701, %v644, %v648
      %v727 = vsel %vm701, %v646, %v650
      %v728 = vsel %vm701, %v640, %v644
      %v729 = vsel %vm701, %v642, %v646
      %v730 = vsel %vm701, %v636, %v640
      %v731 = vsel %vm701, %v638, %v642
      %v732 = vsel %vm701, %v696, %v636
      %v733 = vsel %vm701, %v698, %v638
      %v734 = vld [vmem:[%s7] sm:$0xff]
      %v735 = vld [vmem:[%s7 + $0x8] sm:$0xff]
      %v738 = vperm.slane %v734, 0
      %v739 = vperm.slane %v734, 1
      %v740 = vperm.slane %v734, 2
      %v741 = vperm.slane %v734, 3
      %v742 = vperm.slane %v734, 4
      %v743 = vperm.slane %v734, 5
      %v744 = vperm.slane %v734, 6
      %v745 = vperm.slane %v734, 7
      %v746 = vperm.slane %v735, 0
      %v747 = vperm.slane %v735, 1
      %v748 = vperm.slane %v735, 2
      %v749 = vperm.slane %v735, 3
      %v750 = vperm.slane %v735, 4
      %v751 = vperm.slane %v735, 5
      %v752 = vperm.slane %v735, 6
      %v753 = vperm.slane %v735, 7
      %v770 = vmul.f32 %v732, %v738
      %v771 = vmul.f32 %v730, %v739
      %v772 = vmul.f32 %v728, %v740
      %v773 = vmul.f32 %v726, %v741
      %v774 = vmul.f32 %v724, %v742
      %v775 = vmul.f32 %v722, %v743
      %v776 = vmul.f32 %v720, %v744
      %v777 = vmul.f32 %v718, %v745
      %v778 = vmul.f32 %v716, %v746
      %v779 = vmul.f32 %v714, %v747
      %v780 = vmul.f32 %v712, %v748
      %v781 = vmul.f32 %v710, %v749
      %v782 = vmul.f32 %v708, %v750
      %v783 = vmul.f32 %v706, %v751
      %v784 = vmul.f32 %v704, %v752
      %v785 = vmul.f32 %v702, %v753
      %v786 = vmul.f32 %v733, %v738
      %v787 = vmul.f32 %v731, %v739
      %v788 = vmul.f32 %v729, %v740
      %v789 = vmul.f32 %v727, %v741
      %v790 = vmul.f32 %v725, %v742
      %v791 = vmul.f32 %v723, %v743
      %v792 = vmul.f32 %v721, %v744
      %v793 = vmul.f32 %v719, %v745
      %v794 = vmul.f32 %v717, %v746
      %v795 = vmul.f32 %v715, %v747
      %v796 = vmul.f32 %v713, %v748
      %v797 = vmul.f32 %v711, %v749
      %v798 = vmul.f32 %v709, %v750
      %v799 = vmul.f32 %v707, %v751
      %v800 = vmul.f32 %v705, %v752
      %v801 = vmul.f32 %v703, %v753
      %802 = vrot.lane.b32.xlu0 %v603, 127
      %v803 = vpop.permute.xlu0 %802
      %804 = vrot.lane.b32.xlu0 %v619, 127
      %v805 = vpop.permute.xlu0 %804
      %806 = vrot.lane.b32.xlu0 %v604, 127
      %v807 = vpop.permute.xlu0 %806
      %808 = vrot.lane.b32.xlu0 %v620, 127
      %v809 = vpop.permute.xlu0 %808
      %810 = vrot.lane.b32.xlu0 %v605, 127
      %v811 = vpop.permute.xlu0 %810
      %812 = vrot.lane.b32.xlu0 %v621, 127
      %v813 = vpop.permute.xlu0 %812
      %814 = vrot.lane.b32.xlu0 %v606, 127
      %v815 = vpop.permute.xlu0 %814
      %816 = vrot.lane.b32.xlu0 %v622, 127
      %v817 = vpop.permute.xlu0 %816
      %818 = vrot.lane.b32.xlu0 %v607, 127
      %v819 = vpop.permute.xlu0 %818
      %820 = vrot.lane.b32.xlu0 %v623, 127
      %v821 = vpop.permute.xlu0 %820
      %822 = vrot.lane.b32.xlu0 %v608, 127
      %v823 = vpop.permute.xlu0 %822
      %824 = vrot.lane.b32.xlu0 %v624, 127
      %v825 = vpop.permute.xlu0 %824
      %826 = vrot.lane.b32.xlu0 %v609, 127
      %v827 = vpop.permute.xlu0 %826
      %828 = vrot.lane.b32.xlu0 %v625, 127
      %v829 = vpop.permute.xlu0 %828
      %830 = vrot.lane.b32.xlu0 %v610, 127
      %v831 = vpop.permute.xlu0 %830
      %832 = vrot.lane.b32.xlu0 %v626, 127
      %v833 = vpop.permute.xlu0 %832
      %834 = vrot.lane.b32.xlu0 %v611, 127
      %v835 = vpop.permute.xlu0 %834
      %836 = vrot.lane.b32.xlu0 %v627, 127
      %v837 = vpop.permute.xlu0 %836
      %838 = vrot.lane.b32.xlu0 %v612, 127
      %v839 = vpop.permute.xlu0 %838
      %840 = vrot.lane.b32.xlu0 %v628, 127
      %v841 = vpop.permute.xlu0 %840
      %842 = vrot.lane.b32.xlu0 %v613, 127
      %v843 = vpop.permute.xlu0 %842
      %844 = vrot.lane.b32.xlu0 %v629, 127
      %v845 = vpop.permute.xlu0 %844
      %846 = vrot.lane.b32.xlu0 %v614, 127
      %v847 = vpop.permute.xlu0 %846
      %848 = vrot.lane.b32.xlu0 %v630, 127
      %v849 = vpop.permute.xlu0 %848
      %850 = vrot.lane.b32.xlu0 %v615, 127
      %v851 = vpop.permute.xlu0 %850
      %852 = vrot.lane.b32.xlu0 %v631, 127
      %v853 = vpop.permute.xlu0 %852
      %854 = vrot.lane.b32.xlu0 %v616, 127
      %v855 = vpop.permute.xlu0 %854
      %856 = vrot.lane.b32.xlu0 %v632, 127
      %v857 = vpop.permute.xlu0 %856
      %858 = vrot.lane.b32.xlu0 %v617, 127
      %v859 = vpop.permute.xlu0 %858
      %860 = vrot.lane.b32.xlu0 %v633, 127
      %v861 = vpop.permute.xlu0 %860
      %862 = vrot.lane.b32.xlu0 %v618, 127
      %v863 = vpop.permute.xlu0 %862
      %864 = vrot.lane.b32.xlu0 %v634, 127
      %v865 = vpop.permute.xlu0 %864
      %vm866 = vcmp.lt.s32.totalorder %v700, 127
      %v867 = vsel %vm866, %v859, %v863
      %v868 = vsel %vm866, %v861, %v865
      %v869 = vsel %vm866, %v855, %v859
      %v870 = vsel %vm866, %v857, %v861
      %v871 = vsel %vm866, %v851, %v855
      %v872 = vsel %vm866, %v853, %v857
      %v873 = vsel %vm866, %v847, %v851
      %v874 = vsel %vm866, %v849, %v853
      %v875 = vsel %vm866, %v843, %v847
      %v876 = vsel %vm866, %v845, %v849
      %v877 = vsel %vm866, %v839, %v843
      %v878 = vsel %vm866, %v841, %v845
      %v879 = vsel %vm866, %v835, %v839
      %v880 = vsel %vm866, %v837, %v841
      %v881 = vsel %vm866, %v831, %v835
      %v882 = vsel %vm866, %v833, %v837
      %v883 = vsel %vm866, %v827, %v831
      %v884 = vsel %vm866, %v829, %v833
      %v885 = vsel %vm866, %v823, %v827
      %v886 = vsel %vm866, %v825, %v829
      %v887 = vsel %vm866, %v819, %v823
      %v888 = vsel %vm866, %v821, %v825
      %v889 = vsel %vm866, %v815, %v819
      %v890 = vsel %vm866, %v817, %v821
      %v891 = vsel %vm866, %v811, %v815
      %v892 = vsel %vm866, %v813, %v817
      %v893 = vsel %vm866, %v807, %v811
      %v894 = vsel %vm866, %v809, %v813
      %v895 = vsel %vm866, %v803, %v807
      %v896 = vsel %vm866, %v805, %v809
      %v897 = vsel %vm866, %v863, %v803
      %v898 = vsel %vm866, %v865, %v805
      %v899 = vld [vmem:[%s8] sm:$0xff]
      %v900 = vld [vmem:[%s8 + $0x8] sm:$0xff]
      %v903 = vperm.slane %v899, 0
      %v904 = vperm.slane %v899, 1
      %v905 = vperm.slane %v899, 2
      %v906 = vperm.slane %v899, 3
      %v907 = vperm.slane %v899, 4
      %v908 = vperm.slane %v899, 5
      %v909 = vperm.slane %v899, 6
      %v910 = vperm.slane %v899, 7
      %v911 = vperm.slane %v900, 0
      %v912 = vperm.slane %v900, 1
      %v913 = vperm.slane %v900, 2
      %v914 = vperm.slane %v900, 3
      %v915 = vperm.slane %v900, 4
      %v916 = vperm.slane %v900, 5
      %v917 = vperm.slane %v900, 6
      %v918 = vperm.slane %v900, 7
      %v935 = vmul.f32 %v895, %v903
      %v936 = vmul.f32 %v893, %v904
      %v937 = vmul.f32 %v891, %v905
      %v938 = vmul.f32 %v889, %v906
      %v939 = vmul.f32 %v887, %v907
      %v940 = vmul.f32 %v885, %v908
      %v941 = vmul.f32 %v883, %v909
      %v942 = vmul.f32 %v881, %v910
      %v943 = vmul.f32 %v879, %v911
      %v944 = vmul.f32 %v877, %v912
      %v945 = vmul.f32 %v875, %v913
      %v946 = vmul.f32 %v873, %v914
      %v947 = vmul.f32 %v871, %v915
      %v948 = vmul.f32 %v869, %v916
      %v949 = vmul.f32 %v867, %v917
      %v950 = vmul.f32 %v897, %v918
      %v951 = vmul.f32 %v896, %v903
      %v952 = vmul.f32 %v894, %v904
      %v953 = vmul.f32 %v892, %v905
      %v954 = vmul.f32 %v890, %v906
      %v955 = vmul.f32 %v888, %v907
      %v956 = vmul.f32 %v886, %v908
      %v957 = vmul.f32 %v884, %v909
      %v958 = vmul.f32 %v882, %v910
      %v959 = vmul.f32 %v880, %v911
      %v960 = vmul.f32 %v878, %v912
      %v961 = vmul.f32 %v876, %v913
      %v962 = vmul.f32 %v874, %v914
      %v963 = vmul.f32 %v872, %v915
      %v964 = vmul.f32 %v870, %v916
      %v965 = vmul.f32 %v868, %v917
      %v966 = vmul.f32 %v898, %v918
      %v967 = vld [vmem:[%s1] sm:$0xff]
      %v968 = vld [vmem:[%s1 + $0x8] sm:$0xff]
      %v969 = vld [vmem:[%s1 + $0x10] sm:$0xff]
      %v970 = vld [vmem:[%s1 + $0x18] sm:$0xff]
      %v971 = vld [vmem:[%s1 + $0x20] sm:$0xff]
      %v972 = vld [vmem:[%s1 + $0x28] sm:$0xff]
      %v973 = vld [vmem:[%s2] sm:$0xff]
      %v974 = vld [vmem:[%s2 + $0x8] sm:$0xff]
      %v975 = vld [vmem:[%s2 + $0x10] sm:$0xff]
      %v976 = vld [vmem:[%s2 + $0x18] sm:$0xff]
      %v977 = vld [vmem:[%s2 + $0x20] sm:$0xff]
      %v978 = vld [vmem:[%s2 + $0x28] sm:$0xff]
      %vm979 = vcmask 130048
      %v981 = vsel %vm979, %v973, 0
      %v984 = vsel %vm979, %v974, 0
      %v987 = vsel %vm979, %v975, 0
      %v990 = vsel %vm979, %v976, 0
      %v993 = vsel %vm979, %v977, 0
      %v996 = vsel %vm979, %v978, 0
      %998 = vmatpush.msra.mxu0 0.0
      %999 = vmatpush.msra.mxu0 0.0
      %1000 = vmatpush.msra.mxu0 0.0
      %1001 = vmatpush.msra.mxu0 0.0
      %1002 = vmatpush.msra.mxu0 0.0
      %1003 = vmatpush.msra.mxu0 0.0
      %1004 = vmatpush.msra.mxu0 0.0
      %1005 = vmatpush.msra.mxu0 0.0
      %1006 = vmatpush.msra.mxu0 0.0
      %1007 = vmatpush.msra.mxu0 0.0
      %1008 = vmatpush.msra.mxu0 0.0
      %1009 = vmatpush.msra.mxu0 0.0
      %1010 = vmatpush.msra.mxu0 0.0
      %1011 = vmatpush.msra.mxu0 0.0
      %1012 = vmatpush.msra.mxu0 %v619
      %1013 = vmatpush.msra.mxu0 %v603
      %1014 = vmatmul.f32.gmra.mxu0 %v981
      %v1015 = vpop.f32.mrf.mxu0
      %v1016 = vadd.f32 0.0, %v1015
      %1017 = vmatmul.f32.gmra.mxu0 %v984
      %v1018 = vpop.f32.mrf.mxu0
      %v1019 = vadd.f32 0.0, %v1018
      %1020 = vmatmul.f32.gmra.mxu0 %v987
      %v1021 = vpop.f32.mrf.mxu0
      %v1022 = vadd.f32 0.0, %v1021
      %1023 = vmatmul.f32.gmra.mxu0 %v990
      %v1024 = vpop.f32.mrf.mxu0
      %v1025 = vadd.f32 0.0, %v1024
      %1026 = vmatmul.f32.gmra.mxu0 %v993
      %v1027 = vpop.f32.mrf.mxu0
      %v1028 = vadd.f32 0.0, %v1027
      %1029 = vmatmul.f32.gmra.mxu0 %v996
      %v1030 = vpop.f32.mrf.mxu0
      %v1031 = vadd.f32 0.0, %v1030
      %1032 = vdwg.mxu0
      %1033 = vmatpush.msra.mxu0 0.0
      %1034 = vmatpush.msra.mxu0 0.0
      %1035 = vmatpush.msra.mxu0 0.0
      %1036 = vmatpush.msra.mxu0 0.0
      %1037 = vmatpush.msra.mxu0 0.0
      %1038 = vmatpush.msra.mxu0 0.0
      %1039 = vmatpush.msra.mxu0 0.0
      %1040 = vmatpush.msra.mxu0 0.0
      %1041 = vmatpush.msra.mxu0 0.0
      %1042 = vmatpush.msra.mxu0 0.0
      %1043 = vmatpush.msra.mxu0 0.0
      %1044 = vmatpush.msra.mxu0 0.0
      %1045 = vmatpush.msra.mxu0 0.0
      %1046 = vmatpush.msra.mxu0 0.0
      %1047 = vmatpush.msra.mxu0 %v620
      %1048 = vmatpush.msra.mxu0 %v604
      %1049 = vmatmul.f32.gmra.mxu0 %v981
      %v1050 = vpop.f32.mrf.mxu0
      %v1051 = vadd.f32 0.0, %v1050
      %1052 = vmatmul.f32.gmra.mxu0 %v984
      %v1053 = vpop.f32.mrf.mxu0
      %v1054 = vadd.f32 0.0, %v1053
      %1055 = vmatmul.f32.gmra.mxu0 %v987
      %v1056 = vpop.f32.mrf.mxu0
      %v1057 = vadd.f32 0.0, %v1056
      %1058 = vmatmul.f32.gmra.mxu0 %v990
      %v1059 = vpop.f32.mrf.mxu0
      %v1060 = vadd.f32 0.0, %v1059
      %1061 = vmatmul.f32.gmra.mxu0 %v993
      %v1062 = vpop.f32.mrf.mxu0
      %v1063 = vadd.f32 0.0, %v1062
      %1064 = vmatmul.f32.gmra.mxu0 %v996
      %v1065 = vpop.f32.mrf.mxu0
      %v1066 = vadd.f32 0.0, %v1065
      %1067 = vdwg.mxu0
      %1068 = vmatpush.msra.mxu0 0.0
      %1069 = vmatpush.msra.mxu0 0.0
      %1070 = vmatpush.msra.mxu0 0.0
      %1071 = vmatpush.msra.mxu0 0.0
      %1072 = vmatpush.msra.mxu0 0.0
      %1073 = vmatpush.msra.mxu0 0.0
      %1074 = vmatpush.msra.mxu0 0.0
      %1075 = vmatpush.msra.mxu0 0.0
      %1076 = vmatpush.msra.mxu0 0.0
      %1077 = vmatpush.msra.mxu0 0.0
      %1078 = vmatpush.msra.mxu0 0.0
      %1079 = vmatpush.msra.mxu0 0.0
      %1080 = vmatpush.msra.mxu0 0.0
      %1081 = vmatpush.msra.mxu0 0.0
      %1082 = vmatpush.msra.mxu0 %v621
      %1083 = vmatpush.msra.mxu0 %v605
      %1084 = vmatmul.f32.gmra.mxu0 %v981
      %v1085 = vpop.f32.mrf.mxu0
      %v1086 = vadd.f32 0.0, %v1085
      %1087 = vmatmul.f32.gmra.mxu0 %v984
      %v1088 = vpop.f32.mrf.mxu0
      %v1089 = vadd.f32 0.0, %v1088
      %1090 = vmatmul.f32.gmra.mxu0 %v987
      %v1091 = vpop.f32.mrf.mxu0
      %v1092 = vadd.f32 0.0, %v1091
      %1093 = vmatmul.f32.gmra.mxu0 %v990
      %v1094 = vpop.f32.mrf.mxu0
      %v1095 = vadd.f32 0.0, %v1094
      %1096 = vmatmul.f32.gmra.mxu0 %v993
      %v1097 = vpop.f32.mrf.mxu0
      %v1098 = vadd.f32 0.0, %v1097
      %1099 = vmatmul.f32.gmra.mxu0 %v996
      %v1100 = vpop.f32.mrf.mxu0
      %v1101 = vadd.f32 0.0, %v1100
      %1102 = vdwg.mxu0
      %1103 = vmatpush.msra.mxu0 0.0
      %1104 = vmatpush.msra.mxu0 0.0
      %1105 = vmatpush.msra.mxu0 0.0
      %1106 = vmatpush.msra.mxu0 0.0
      %1107 = vmatpush.msra.mxu0 0.0
      %1108 = vmatpush.msra.mxu0 0.0
      %1109 = vmatpush.msra.mxu0 0.0
      %1110 = vmatpush.msra.mxu0 0.0
      %1111 = vmatpush.msra.mxu0 0.0
      %1112 = vmatpush.msra.mxu0 0.0
      %1113 = vmatpush.msra.mxu0 0.0
      %1114 = vmatpush.msra.mxu0 0.0
      %1115 = vmatpush.msra.mxu0 0.0
      %1116 = vmatpush.msra.mxu0 0.0
      %1117 = vmatpush.msra.mxu0 %v622
      %1118 = vmatpush.msra.mxu0 %v606
      %1119 = vmatmul.f32.gmra.mxu0 %v981
      %v1120 = vpop.f32.mrf.mxu0
      %v1121 = vadd.f32 0.0, %v1120
      %1122 = vmatmul.f32.gmra.mxu0 %v984
      %v1123 = vpop.f32.mrf.mxu0
      %v1124 = vadd.f32 0.0, %v1123
      %1125 = vmatmul.f32.gmra.mxu0 %v987
      %v1126 = vpop.f32.mrf.mxu0
      %v1127 = vadd.f32 0.0, %v1126
      %1128 = vmatmul.f32.gmra.mxu0 %v990
      %v1129 = vpop.f32.mrf.mxu0
      %v1130 = vadd.f32 0.0, %v1129
      %1131 = vmatmul.f32.gmra.mxu0 %v993
      %v1132 = vpop.f32.mrf.mxu0
      %v1133 = vadd.f32 0.0, %v1132
      %1134 = vmatmul.f32.gmra.mxu0 %v996
      %v1135 = vpop.f32.mrf.mxu0
      %v1136 = vadd.f32 0.0, %v1135
      %1137 = vdwg.mxu0
      %1138 = vmatpush.msra.mxu0 0.0
      %1139 = vmatpush.msra.mxu0 0.0
      %1140 = vmatpush.msra.mxu0 0.0
      %1141 = vmatpush.msra.mxu0 0.0
      %1142 = vmatpush.msra.mxu0 0.0
      %1143 = vmatpush.msra.mxu0 0.0
      %1144 = vmatpush.msra.mxu0 0.0
      %1145 = vmatpush.msra.mxu0 0.0
      %1146 = vmatpush.msra.mxu0 0.0
      %1147 = vmatpush.msra.mxu0 0.0
      %1148 = vmatpush.msra.mxu0 0.0
      %1149 = vmatpush.msra.mxu0 0.0
      %1150 = vmatpush.msra.mxu0 0.0
      %1151 = vmatpush.msra.mxu0 0.0
      %1152 = vmatpush.msra.mxu0 %v623
      %1153 = vmatpush.msra.mxu0 %v607
      %1154 = vmatmul.f32.gmra.mxu0 %v981
      %v1155 = vpop.f32.mrf.mxu0
      %v1156 = vadd.f32 0.0, %v1155
      %1157 = vmatmul.f32.gmra.mxu0 %v984
      %v1158 = vpop.f32.mrf.mxu0
      %v1159 = vadd.f32 0.0, %v1158
      %1160 = vmatmul.f32.gmra.mxu0 %v987
      %v1161 = vpop.f32.mrf.mxu0
      %v1162 = vadd.f32 0.0, %v1161
      %1163 = vmatmul.f32.gmra.mxu0 %v990
      %v1164 = vpop.f32.mrf.mxu0
      %v1165 = vadd.f32 0.0, %v1164
      %1166 = vmatmul.f32.gmra.mxu0 %v993
      %v1167 = vpop.f32.mrf.mxu0
      %v1168 = vadd.f32 0.0, %v1167
      %1169 = vmatmul.f32.gmra.mxu0 %v996
      %v1170 = vpop.f32.mrf.mxu0
      %v1171 = vadd.f32 0.0, %v1170
      %1172 = vdwg.mxu0
      %1173 = vmatpush.msra.mxu0 0.0
      %1174 = vmatpush.msra.mxu0 0.0
      %1175 = vmatpush.msra.mxu0 0.0
      %1176 = vmatpush.msra.mxu0 0.0
      %1177 = vmatpush.msra.mxu0 0.0
      %1178 = vmatpush.msra.mxu0 0.0
      %1179 = vmatpush.msra.mxu0 0.0
      %1180 = vmatpush.msra.mxu0 0.0
      %1181 = vmatpush.msra.mxu0 0.0
      %1182 = vmatpush.msra.mxu0 0.0
      %1183 = vmatpush.msra.mxu0 0.0
      %1184 = vmatpush.msra.mxu0 0.0
      %1185 = vmatpush.msra.mxu0 0.0
      %1186 = vmatpush.msra.mxu0 0.0
      %1187 = vmatpush.msra.mxu0 %v624
      %1188 = vmatpush.msra.mxu0 %v608
      %1189 = vmatmul.f32.gmra.mxu0 %v981
      %v1190 = vpop.f32.mrf.mxu0
      %v1191 = vadd.f32 0.0, %v1190
      %1192 = vmatmul.f32.gmra.mxu0 %v984
      %v1193 = vpop.f32.mrf.mxu0
      %v1194 = vadd.f32 0.0, %v1193
      %1195 = vmatmul.f32.gmra.mxu0 %v987
      %v1196 = vpop.f32.mrf.mxu0
      %v1197 = vadd.f32 0.0, %v1196
      %1198 = vmatmul.f32.gmra.mxu0 %v990
      %v1199 = vpop.f32.mrf.mxu0
      %v1200 = vadd.f32 0.0, %v1199
      %1201 = vmatmul.f32.gmra.mxu0 %v993
      %v1202 = vpop.f32.mrf.mxu0
      %v1203 = vadd.f32 0.0, %v1202
      %1204 = vmatmul.f32.gmra.mxu0 %v996
      %v1205 = vpop.f32.mrf.mxu0
      %v1206 = vadd.f32 0.0, %v1205
      %1207 = vdwg.mxu0
      %1208 = vmatpush.msra.mxu0 0.0
      %1209 = vmatpush.msra.mxu0 0.0
      %1210 = vmatpush.msra.mxu0 0.0
      %1211 = vmatpush.msra.mxu0 0.0
      %1212 = vmatpush.msra.mxu0 0.0
      %1213 = vmatpush.msra.mxu0 0.0
      %1214 = vmatpush.msra.mxu0 0.0
      %1215 = vmatpush.msra.mxu0 0.0
      %1216 = vmatpush.msra.mxu0 0.0
      %1217 = vmatpush.msra.mxu0 0.0
      %1218 = vmatpush.msra.mxu0 0.0
      %1219 = vmatpush.msra.mxu0 0.0
      %1220 = vmatpush.msra.mxu0 0.0
      %1221 = vmatpush.msra.mxu0 0.0
      %1222 = vmatpush.msra.mxu0 %v625
      %1223 = vmatpush.msra.mxu0 %v609
      %1224 = vmatmul.f32.gmra.mxu0 %v981
      %v1225 = vpop.f32.mrf.mxu0
      %v1226 = vadd.f32 0.0, %v1225
      %1227 = vmatmul.f32.gmra.mxu0 %v984
      %v1228 = vpop.f32.mrf.mxu0
      %v1229 = vadd.f32 0.0, %v1228
      %1230 = vmatmul.f32.gmra.mxu0 %v987
      %v1231 = vpop.f32.mrf.mxu0
      %v1232 = vadd.f32 0.0, %v1231
      %1233 = vmatmul.f32.gmra.mxu0 %v990
      %v1234 = vpop.f32.mrf.mxu0
      %v1235 = vadd.f32 0.0, %v1234
      %1236 = vmatmul.f32.gmra.mxu0 %v993
      %v1237 = vpop.f32.mrf.mxu0
      %v1238 = vadd.f32 0.0, %v1237
      %1239 = vmatmul.f32.gmra.mxu0 %v996
      %v1240 = vpop.f32.mrf.mxu0
      %v1241 = vadd.f32 0.0, %v1240
      %1242 = vdwg.mxu0
      %1243 = vmatpush.msra.mxu0 0.0
      %1244 = vmatpush.msra.mxu0 0.0
      %1245 = vmatpush.msra.mxu0 0.0
      %1246 = vmatpush.msra.mxu0 0.0
      %1247 = vmatpush.msra.mxu0 0.0
      %1248 = vmatpush.msra.mxu0 0.0
      %1249 = vmatpush.msra.mxu0 0.0
      %1250 = vmatpush.msra.mxu0 0.0
      %1251 = vmatpush.msra.mxu0 0.0
      %1252 = vmatpush.msra.mxu0 0.0
      %1253 = vmatpush.msra.mxu0 0.0
      %1254 = vmatpush.msra.mxu0 0.0
      %1255 = vmatpush.msra.mxu0 0.0
      %1256 = vmatpush.msra.mxu0 0.0
      %1257 = vmatpush.msra.mxu0 %v626
      %1258 = vmatpush.msra.mxu0 %v610
      %1259 = vmatmul.f32.gmra.mxu0 %v981
      %v1260 = vpop.f32.mrf.mxu0
      %v1261 = vadd.f32 0.0, %v1260
      %1262 = vmatmul.f32.gmra.mxu0 %v984
      %v1263 = vpop.f32.mrf.mxu0
      %v1264 = vadd.f32 0.0, %v1263
      %1265 = vmatmul.f32.gmra.mxu0 %v987
      %v1266 = vpop.f32.mrf.mxu0
      %v1267 = vadd.f32 0.0, %v1266
      %1268 = vmatmul.f32.gmra.mxu0 %v990
      %v1269 = vpop.f32.mrf.mxu0
      %v1270 = vadd.f32 0.0, %v1269
      %1271 = vmatmul.f32.gmra.mxu0 %v993
      %v1272 = vpop.f32.mrf.mxu0
      %v1273 = vadd.f32 0.0, %v1272
      %1274 = vmatmul.f32.gmra.mxu0 %v996
      %v1275 = vpop.f32.mrf.mxu0
      %v1276 = vadd.f32 0.0, %v1275
      %1277 = vdwg.mxu0
      %1278 = vmatpush.msra.mxu0 0.0
      %1279 = vmatpush.msra.mxu0 0.0
      %1280 = vmatpush.msra.mxu0 0.0
      %1281 = vmatpush.msra.mxu0 0.0
      %1282 = vmatpush.msra.mxu0 0.0
      %1283 = vmatpush.msra.mxu0 0.0
      %1284 = vmatpush.msra.mxu0 0.0
      %1285 = vmatpush.msra.mxu0 0.0
      %1286 = vmatpush.msra.mxu0 0.0
      %1287 = vmatpush.msra.mxu0 0.0
      %1288 = vmatpush.msra.mxu0 0.0
      %1289 = vmatpush.msra.mxu0 0.0
      %1290 = vmatpush.msra.mxu0 0.0
      %1291 = vmatpush.msra.mxu0 0.0
      %1292 = vmatpush.msra.mxu0 %v627
      %1293 = vmatpush.msra.mxu0 %v611
      %1294 = vmatmul.f32.gmra.mxu0 %v981
      %v1295 = vpop.f32.mrf.mxu0
      %v1296 = vadd.f32 0.0, %v1295
      %1297 = vmatmul.f32.gmra.mxu0 %v984
      %v1298 = vpop.f32.mrf.mxu0
      %v1299 = vadd.f32 0.0, %v1298
      %1300 = vmatmul.f32.gmra.mxu0 %v987
      %v1301 = vpop.f32.mrf.mxu0
      %v1302 = vadd.f32 0.0, %v1301
      %1303 = vmatmul.f32.gmra.mxu0 %v990
      %v1304 = vpop.f32.mrf.mxu0
      %v1305 = vadd.f32 0.0, %v1304
      %1306 = vmatmul.f32.gmra.mxu0 %v993
      %v1307 = vpop.f32.mrf.mxu0
      %v1308 = vadd.f32 0.0, %v1307
      %1309 = vmatmul.f32.gmra.mxu0 %v996
      %v1310 = vpop.f32.mrf.mxu0
      %v1311 = vadd.f32 0.0, %v1310
      %1312 = vdwg.mxu0
      %1313 = vmatpush.msra.mxu0 0.0
      %1314 = vmatpush.msra.mxu0 0.0
      %1315 = vmatpush.msra.mxu0 0.0
      %1316 = vmatpush.msra.mxu0 0.0
      %1317 = vmatpush.msra.mxu0 0.0
      %1318 = vmatpush.msra.mxu0 0.0
      %1319 = vmatpush.msra.mxu0 0.0
      %1320 = vmatpush.msra.mxu0 0.0
      %1321 = vmatpush.msra.mxu0 0.0
      %1322 = vmatpush.msra.mxu0 0.0
      %1323 = vmatpush.msra.mxu0 0.0
      %1324 = vmatpush.msra.mxu0 0.0
      %1325 = vmatpush.msra.mxu0 0.0
      %1326 = vmatpush.msra.mxu0 0.0
      %1327 = vmatpush.msra.mxu0 %v628
      %1328 = vmatpush.msra.mxu0 %v612
      %1329 = vmatmul.f32.gmra.mxu0 %v981
      %v1330 = vpop.f32.mrf.mxu0
      %v1331 = vadd.f32 0.0, %v1330
      %1332 = vmatmul.f32.gmra.mxu0 %v984
      %v1333 = vpop.f32.mrf.mxu0
      %v1334 = vadd.f32 0.0, %v1333
      %1335 = vmatmul.f32.gmra.mxu0 %v987
      %v1336 = vpop.f32.mrf.mxu0
      %v1337 = vadd.f32 0.0, %v1336
      %1338 = vmatmul.f32.gmra.mxu0 %v990
      %v1339 = vpop.f32.mrf.mxu0
      %v1340 = vadd.f32 0.0, %v1339
      %1341 = vmatmul.f32.gmra.mxu0 %v993
      %v1342 = vpop.f32.mrf.mxu0
      %v1343 = vadd.f32 0.0, %v1342
      %1344 = vmatmul.f32.gmra.mxu0 %v996
      %v1345 = vpop.f32.mrf.mxu0
      %v1346 = vadd.f32 0.0, %v1345
      %1347 = vdwg.mxu0
      %1348 = vmatpush.msra.mxu0 0.0
      %1349 = vmatpush.msra.mxu0 0.0
      %1350 = vmatpush.msra.mxu0 0.0
      %1351 = vmatpush.msra.mxu0 0.0
      %1352 = vmatpush.msra.mxu0 0.0
      %1353 = vmatpush.msra.mxu0 0.0
      %1354 = vmatpush.msra.mxu0 0.0
      %1355 = vmatpush.msra.mxu0 0.0
      %1356 = vmatpush.msra.mxu0 0.0
      %1357 = vmatpush.msra.mxu0 0.0
      %1358 = vmatpush.msra.mxu0 0.0
      %1359 = vmatpush.msra.mxu0 0.0
      %1360 = vmatpush.msra.mxu0 0.0
      %1361 = vmatpush.msra.mxu0 0.0
      %1362 = vmatpush.msra.mxu0 %v629
      %1363 = vmatpush.msra.mxu0 %v613
      %1364 = vmatmul.f32.gmra.mxu0 %v981
      %v1365 = vpop.f32.mrf.mxu0
      %v1366 = vadd.f32 0.0, %v1365
      %1367 = vmatmul.f32.gmra.mxu0 %v984
      %v1368 = vpop.f32.mrf.mxu0
      %v1369 = vadd.f32 0.0, %v1368
      %1370 = vmatmul.f32.gmra.mxu0 %v987
      %v1371 = vpop.f32.mrf.mxu0
      %v1372 = vadd.f32 0.0, %v1371
      %1373 = vmatmul.f32.gmra.mxu0 %v990
      %v1374 = vpop.f32.mrf.mxu0
      %v1375 = vadd.f32 0.0, %v1374
      %1376 = vmatmul.f32.gmra.mxu0 %v993
      %v1377 = vpop.f32.mrf.mxu0
      %v1378 = vadd.f32 0.0, %v1377
      %1379 = vmatmul.f32.gmra.mxu0 %v996
      %v1380 = vpop.f32.mrf.mxu0
      %v1381 = vadd.f32 0.0, %v1380
      %1382 = vdwg.mxu0
      %1383 = vmatpush.msra.mxu0 0.0
      %1384 = vmatpush.msra.mxu0 0.0
      %1385 = vmatpush.msra.mxu0 0.0
      %1386 = vmatpush.msra.mxu0 0.0
      %1387 = vmatpush.msra.mxu0 0.0
      %1388 = vmatpush.msra.mxu0 0.0
      %1389 = vmatpush.msra.mxu0 0.0
      %1390 = vmatpush.msra.mxu0 0.0
      %1391 = vmatpush.msra.mxu0 0.0
      %1392 = vmatpush.msra.mxu0 0.0
      %1393 = vmatpush.msra.mxu0 0.0
      %1394 = vmatpush.msra.mxu0 0.0
      %1395 = vmatpush.msra.mxu0 0.0
      %1396 = vmatpush.msra.mxu0 0.0
      %1397 = vmatpush.msra.mxu0 %v630
      %1398 = vmatpush.msra.mxu0 %v614
      %1399 = vmatmul.f32.gmra.mxu0 %v981
      %v1400 = vpop.f32.mrf.mxu0
      %v1401 = vadd.f32 0.0, %v1400
      %1402 = vmatmul.f32.gmra.mxu0 %v984
      %v1403 = vpop.f32.mrf.mxu0
      %v1404 = vadd.f32 0.0, %v1403
      %1405 = vmatmul.f32.gmra.mxu0 %v987
      %v1406 = vpop.f32.mrf.mxu0
      %v1407 = vadd.f32 0.0, %v1406
      %1408 = vmatmul.f32.gmra.mxu0 %v990
      %v1409 = vpop.f32.mrf.mxu0
      %v1410 = vadd.f32 0.0, %v1409
      %1411 = vmatmul.f32.gmra.mxu0 %v993
      %v1412 = vpop.f32.mrf.mxu0
      %v1413 = vadd.f32 0.0, %v1412
      %1414 = vmatmul.f32.gmra.mxu0 %v996
      %v1415 = vpop.f32.mrf.mxu0
      %v1416 = vadd.f32 0.0, %v1415
      %1417 = vdwg.mxu0
      %1418 = vmatpush.msra.mxu0 0.0
      %1419 = vmatpush.msra.mxu0 0.0
      %1420 = vmatpush.msra.mxu0 0.0
      %1421 = vmatpush.msra.mxu0 0.0
      %1422 = vmatpush.msra.mxu0 0.0
      %1423 = vmatpush.msra.mxu0 0.0
      %1424 = vmatpush.msra.mxu0 0.0
      %1425 = vmatpush.msra.mxu0 0.0
      %1426 = vmatpush.msra.mxu0 0.0
      %1427 = vmatpush.msra.mxu0 0.0
      %1428 = vmatpush.msra.mxu0 0.0
      %1429 = vmatpush.msra.mxu0 0.0
      %1430 = vmatpush.msra.mxu0 0.0
      %1431 = vmatpush.msra.mxu0 0.0
      %1432 = vmatpush.msra.mxu0 %v631
      %1433 = vmatpush.msra.mxu0 %v615
      %1434 = vmatmul.f32.gmra.mxu0 %v981
      %v1435 = vpop.f32.mrf.mxu0
      %v1436 = vadd.f32 0.0, %v1435
      %1437 = vmatmul.f32.gmra.mxu0 %v984
      %v1438 = vpop.f32.mrf.mxu0
      %v1439 = vadd.f32 0.0, %v1438
      %1440 = vmatmul.f32.gmra.mxu0 %v987
      %v1441 = vpop.f32.mrf.mxu0
      %v1442 = vadd.f32 0.0, %v1441
      %1443 = vmatmul.f32.gmra.mxu0 %v990
      %v1444 = vpop.f32.mrf.mxu0
      %v1445 = vadd.f32 0.0, %v1444
      %1446 = vmatmul.f32.gmra.mxu0 %v993
      %v1447 = vpop.f32.mrf.mxu0
      %v1448 = vadd.f32 0.0, %v1447
      %1449 = vmatmul.f32.gmra.mxu0 %v996
      %v1450 = vpop.f32.mrf.mxu0
      %v1451 = vadd.f32 0.0, %v1450
      %1452 = vdwg.mxu0
      %1453 = vmatpush.msra.mxu0 0.0
      %1454 = vmatpush.msra.mxu0 0.0
      %1455 = vmatpush.msra.mxu0 0.0
      %1456 = vmatpush.msra.mxu0 0.0
      %1457 = vmatpush.msra.mxu0 0.0
      %1458 = vmatpush.msra.mxu0 0.0
      %1459 = vmatpush.msra.mxu0 0.0
      %1460 = vmatpush.msra.mxu0 0.0
      %1461 = vmatpush.msra.mxu0 0.0
      %1462 = vmatpush.msra.mxu0 0.0
      %1463 = vmatpush.msra.mxu0 0.0
      %1464 = vmatpush.msra.mxu0 0.0
      %1465 = vmatpush.msra.mxu0 0.0
      %1466 = vmatpush.msra.mxu0 0.0
      %1467 = vmatpush.msra.mxu0 %v632
      %1468 = vmatpush.msra.mxu0 %v616
      %1469 = vmatmul.f32.gmra.mxu0 %v981
      %v1470 = vpop.f32.mrf.mxu0
      %v1471 = vadd.f32 0.0, %v1470
      %1472 = vmatmul.f32.gmra.mxu0 %v984
      %v1473 = vpop.f32.mrf.mxu0
      %v1474 = vadd.f32 0.0, %v1473
      %1475 = vmatmul.f32.gmra.mxu0 %v987
      %v1476 = vpop.f32.mrf.mxu0
      %v1477 = vadd.f32 0.0, %v1476
      %1478 = vmatmul.f32.gmra.mxu0 %v990
      %v1479 = vpop.f32.mrf.mxu0
      %v1480 = vadd.f32 0.0, %v1479
      %1481 = vmatmul.f32.gmra.mxu0 %v993
      %v1482 = vpop.f32.mrf.mxu0
      %v1483 = vadd.f32 0.0, %v1482
      %1484 = vmatmul.f32.gmra.mxu0 %v996
      %v1485 = vpop.f32.mrf.mxu0
      %v1486 = vadd.f32 0.0, %v1485
      %1487 = vdwg.mxu0
      %1488 = vmatpush.msra.mxu0 0.0
      %1489 = vmatpush.msra.mxu0 0.0
      %1490 = vmatpush.msra.mxu0 0.0
      %1491 = vmatpush.msra.mxu0 0.0
      %1492 = vmatpush.msra.mxu0 0.0
      %1493 = vmatpush.msra.mxu0 0.0
      %1494 = vmatpush.msra.mxu0 0.0
      %1495 = vmatpush.msra.mxu0 0.0
      %1496 = vmatpush.msra.mxu0 0.0
      %1497 = vmatpush.msra.mxu0 0.0
      %1498 = vmatpush.msra.mxu0 0.0
      %1499 = vmatpush.msra.mxu0 0.0
      %1500 = vmatpush.msra.mxu0 0.0
      %1501 = vmatpush.msra.mxu0 0.0
      %1502 = vmatpush.msra.mxu0 %v633
      %1503 = vmatpush.msra.mxu0 %v617
      %1504 = vmatmul.f32.gmra.mxu0 %v981
      %v1505 = vpop.f32.mrf.mxu0
      %v1506 = vadd.f32 0.0, %v1505
      %1507 = vmatmul.f32.gmra.mxu0 %v984
      %v1508 = vpop.f32.mrf.mxu0
      %v1509 = vadd.f32 0.0, %v1508
      %1510 = vmatmul.f32.gmra.mxu0 %v987
      %v1511 = vpop.f32.mrf.mxu0
      %v1512 = vadd.f32 0.0, %v1511
      %1513 = vmatmul.f32.gmra.mxu0 %v990
      %v1514 = vpop.f32.mrf.mxu0
      %v1515 = vadd.f32 0.0, %v1514
      %1516 = vmatmul.f32.gmra.mxu0 %v993
      %v1517 = vpop.f32.mrf.mxu0
      %v1518 = vadd.f32 0.0, %v1517
      %1519 = vmatmul.f32.gmra.mxu0 %v996
      %v1520 = vpop.f32.mrf.mxu0
      %v1521 = vadd.f32 0.0, %v1520
      %1522 = vdwg.mxu0
      %1523 = vmatpush.msra.mxu0 0.0
      %1524 = vmatpush.msra.mxu0 0.0
      %1525 = vmatpush.msra.mxu0 0.0
      %1526 = vmatpush.msra.mxu0 0.0
      %1527 = vmatpush.msra.mxu0 0.0
      %1528 = vmatpush.msra.mxu0 0.0
      %1529 = vmatpush.msra.mxu0 0.0
      %1530 = vmatpush.msra.mxu0 0.0
      %1531 = vmatpush.msra.mxu0 0.0
      %1532 = vmatpush.msra.mxu0 0.0
      %1533 = vmatpush.msra.mxu0 0.0
      %1534 = vmatpush.msra.mxu0 0.0
      %1535 = vmatpush.msra.mxu0 0.0
      %1536 = vmatpush.msra.mxu0 0.0
      %1537 = vmatpush.msra.mxu0 %v634
      %1538 = vmatpush.msra.mxu0 %v618
      %1539 = vmatmul.f32.gmra.mxu0 %v981
      %v1540 = vpop.f32.mrf.mxu0
      %v1541 = vadd.f32 0.0, %v1540
      %1542 = vmatmul.f32.gmra.mxu0 %v984
      %v1543 = vpop.f32.mrf.mxu0
      %v1544 = vadd.f32 0.0, %v1543
      %1545 = vmatmul.f32.gmra.mxu0 %v987
      %v1546 = vpop.f32.mrf.mxu0
      %v1547 = vadd.f32 0.0, %v1546
      %1548 = vmatmul.f32.gmra.mxu0 %v990
      %v1549 = vpop.f32.mrf.mxu0
      %v1550 = vadd.f32 0.0, %v1549
      %1551 = vmatmul.f32.gmra.mxu0 %v993
      %v1552 = vpop.f32.mrf.mxu0
      %v1553 = vadd.f32 0.0, %v1552
      %1554 = vmatmul.f32.gmra.mxu0 %v996
      %v1555 = vpop.f32.mrf.mxu0
      %v1556 = vadd.f32 0.0, %v1555
      %1557 = vdwg.mxu0
      %v1559 = vsel %vm979, %v967, 0
      %v1562 = vsel %vm979, %v968, 0
      %v1565 = vsel %vm979, %v969, 0
      %v1568 = vsel %vm979, %v970, 0
      %v1571 = vsel %vm979, %v971, 0
      %v1574 = vsel %vm979, %v972, 0
      %1576 = vmatpush.msra.mxu0 0.0
      %1577 = vmatpush.msra.mxu0 0.0
      %1578 = vmatpush.msra.mxu0 0.0
      %1579 = vmatpush.msra.mxu0 0.0
      %1580 = vmatpush.msra.mxu0 0.0
      %1581 = vmatpush.msra.mxu0 0.0
      %1582 = vmatpush.msra.mxu0 0.0
      %1583 = vmatpush.msra.mxu0 0.0
      %1584 = vmatpush.msra.mxu0 0.0
      %1585 = vmatpush.msra.mxu0 0.0
      %1586 = vmatpush.msra.mxu0 0.0
      %1587 = vmatpush.msra.mxu0 0.0
      %1588 = vmatpush.msra.mxu0 0.0
      %1589 = vmatpush.msra.mxu0 0.0
      %1590 = vmatpush.msra.mxu0 %v786
      %1591 = vmatpush.msra.mxu0 %v770
      %1592 = vmatmul.f32.gmra.mxu0 %v1559
      %v1593 = vpop.f32.mrf.mxu0
      %v1594 = vadd.f32 %v1016, %v1593
      %1595 = vmatmul.f32.gmra.mxu0 %v1562
      %v1596 = vpop.f32.mrf.mxu0
      %v1597 = vadd.f32 %v1019, %v1596
      %1598 = vmatmul.f32.gmra.mxu0 %v1565
      %v1599 = vpop.f32.mrf.mxu0
      %v1600 = vadd.f32 %v1022, %v1599
      %1601 = vmatmul.f32.gmra.mxu0 %v1568
      %v1602 = vpop.f32.mrf.mxu0
      %v1603 = vadd.f32 %v1025, %v1602
      %1604 = vmatmul.f32.gmra.mxu0 %v1571
      %v1605 = vpop.f32.mrf.mxu0
      %v1606 = vadd.f32 %v1028, %v1605
      %1607 = vmatmul.f32.gmra.mxu0 %v1574
      %v1608 = vpop.f32.mrf.mxu0
      %v1609 = vadd.f32 %v1031, %v1608
      %1610 = vdwg.mxu0
      %1611 = vmatpush.msra.mxu0 0.0
      %1612 = vmatpush.msra.mxu0 0.0
      %1613 = vmatpush.msra.mxu0 0.0
      %1614 = vmatpush.msra.mxu0 0.0
      %1615 = vmatpush.msra.mxu0 0.0
      %1616 = vmatpush.msra.mxu0 0.0
      %1617 = vmatpush.msra.mxu0 0.0
      %1618 = vmatpush.msra.mxu0 0.0
      %1619 = vmatpush.msra.mxu0 0.0
      %1620 = vmatpush.msra.mxu0 0.0
      %1621 = vmatpush.msra.mxu0 0.0
      %1622 = vmatpush.msra.mxu0 0.0
      %1623 = vmatpush.msra.mxu0 0.0
      %1624 = vmatpush.msra.mxu0 0.0
      %1625 = vmatpush.msra.mxu0 %v787
      %1626 = vmatpush.msra.mxu0 %v771
      %1627 = vmatmul.f32.gmra.mxu0 %v1559
      %v1628 = vpop.f32.mrf.mxu0
      %v1629 = vadd.f32 %v1051, %v1628
      %1630 = vmatmul.f32.gmra.mxu0 %v1562
      %v1631 = vpop.f32.mrf.mxu0
      %v1632 = vadd.f32 %v1054, %v1631
      %1633 = vmatmul.f32.gmra.mxu0 %v1565
      %v1634 = vpop.f32.mrf.mxu0
      %v1635 = vadd.f32 %v1057, %v1634
      %1636 = vmatmul.f32.gmra.mxu0 %v1568
      %v1637 = vpop.f32.mrf.mxu0
      %v1638 = vadd.f32 %v1060, %v1637
      %1639 = vmatmul.f32.gmra.mxu0 %v1571
      %v1640 = vpop.f32.mrf.mxu0
      %v1641 = vadd.f32 %v1063, %v1640
      %1642 = vmatmul.f32.gmra.mxu0 %v1574
      %v1643 = vpop.f32.mrf.mxu0
      %v1644 = vadd.f32 %v1066, %v1643
      %1645 = vdwg.mxu0
      %1646 = vmatpush.msra.mxu0 0.0
      %1647 = vmatpush.msra.mxu0 0.0
      %1648 = vmatpush.msra.mxu0 0.0
      %1649 = vmatpush.msra.mxu0 0.0
      %1650 = vmatpush.msra.mxu0 0.0
      %1651 = vmatpush.msra.mxu0 0.0
      %1652 = vmatpush.msra.mxu0 0.0
      %1653 = vmatpush.msra.mxu0 0.0
      %1654 = vmatpush.msra.mxu0 0.0
      %1655 = vmatpush.msra.mxu0 0.0
      %1656 = vmatpush.msra.mxu0 0.0
      %1657 = vmatpush.msra.mxu0 0.0
      %1658 = vmatpush.msra.mxu0 0.0
      %1659 = vmatpush.msra.mxu0 0.0
      %1660 = vmatpush.msra.mxu0 %v788
      %1661 = vmatpush.msra.mxu0 %v772
      %1662 = vmatmul.f32.gmra.mxu0 %v1559
      %v1663 = vpop.f32.mrf.mxu0
      %v1664 = vadd.f32 %v1086, %v1663
      %1665 = vmatmul.f32.gmra.mxu0 %v1562
      %v1666 = vpop.f32.mrf.mxu0
      %v1667 = vadd.f32 %v1089, %v1666
      %1668 = vmatmul.f32.gmra.mxu0 %v1565
      %v1669 = vpop.f32.mrf.mxu0
      %v1670 = vadd.f32 %v1092, %v1669
      %1671 = vmatmul.f32.gmra.mxu0 %v1568
      %v1672 = vpop.f32.mrf.mxu0
      %v1673 = vadd.f32 %v1095, %v1672
      %1674 = vmatmul.f32.gmra.mxu0 %v1571
      %v1675 = vpop.f32.mrf.mxu0
      %v1676 = vadd.f32 %v1098, %v1675
      %1677 = vmatmul.f32.gmra.mxu0 %v1574
      %v1678 = vpop.f32.mrf.mxu0
      %v1679 = vadd.f32 %v1101, %v1678
      %1680 = vdwg.mxu0
      %1681 = vmatpush.msra.mxu0 0.0
      %1682 = vmatpush.msra.mxu0 0.0
      %1683 = vmatpush.msra.mxu0 0.0
      %1684 = vmatpush.msra.mxu0 0.0
      %1685 = vmatpush.msra.mxu0 0.0
      %1686 = vmatpush.msra.mxu0 0.0
      %1687 = vmatpush.msra.mxu0 0.0
      %1688 = vmatpush.msra.mxu0 0.0
      %1689 = vmatpush.msra.mxu0 0.0
      %1690 = vmatpush.msra.mxu0 0.0
      %1691 = vmatpush.msra.mxu0 0.0
      %1692 = vmatpush.msra.mxu0 0.0
      %1693 = vmatpush.msra.mxu0 0.0
      %1694 = vmatpush.msra.mxu0 0.0
      %1695 = vmatpush.msra.mxu0 %v789
      %1696 = vmatpush.msra.mxu0 %v773
      %1697 = vmatmul.f32.gmra.mxu0 %v1559
      %v1698 = vpop.f32.mrf.mxu0
      %v1699 = vadd.f32 %v1121, %v1698
      %1700 = vmatmul.f32.gmra.mxu0 %v1562
      %v1701 = vpop.f32.mrf.mxu0
      %v1702 = vadd.f32 %v1124, %v1701
      %1703 = vmatmul.f32.gmra.mxu0 %v1565
      %v1704 = vpop.f32.mrf.mxu0
      %v1705 = vadd.f32 %v1127, %v1704
      %1706 = vmatmul.f32.gmra.mxu0 %v1568
      %v1707 = vpop.f32.mrf.mxu0
      %v1708 = vadd.f32 %v1130, %v1707
      %1709 = vmatmul.f32.gmra.mxu0 %v1571
      %v1710 = vpop.f32.mrf.mxu0
      %v1711 = vadd.f32 %v1133, %v1710
      %1712 = vmatmul.f32.gmra.mxu0 %v1574
      %v1713 = vpop.f32.mrf.mxu0
      %v1714 = vadd.f32 %v1136, %v1713
      %1715 = vdwg.mxu0
      %1716 = vmatpush.msra.mxu0 0.0
      %1717 = vmatpush.msra.mxu0 0.0
      %1718 = vmatpush.msra.mxu0 0.0
      %1719 = vmatpush.msra.mxu0 0.0
      %1720 = vmatpush.msra.mxu0 0.0
      %1721 = vmatpush.msra.mxu0 0.0
      %1722 = vmatpush.msra.mxu0 0.0
      %1723 = vmatpush.msra.mxu0 0.0
      %1724 = vmatpush.msra.mxu0 0.0
      %1725 = vmatpush.msra.mxu0 0.0
      %1726 = vmatpush.msra.mxu0 0.0
      %1727 = vmatpush.msra.mxu0 0.0
      %1728 = vmatpush.msra.mxu0 0.0
      %1729 = vmatpush.msra.mxu0 0.0
      %1730 = vmatpush.msra.mxu0 %v790
      %1731 = vmatpush.msra.mxu0 %v774
      %1732 = vmatmul.f32.gmra.mxu0 %v1559
      %v1733 = vpop.f32.mrf.mxu0
      %v1734 = vadd.f32 %v1156, %v1733
      %1735 = vmatmul.f32.gmra.mxu0 %v1562
      %v1736 = vpop.f32.mrf.mxu0
      %v1737 = vadd.f32 %v1159, %v1736
      %1738 = vmatmul.f32.gmra.mxu0 %v1565
      %v1739 = vpop.f32.mrf.mxu0
      %v1740 = vadd.f32 %v1162, %v1739
      %1741 = vmatmul.f32.gmra.mxu0 %v1568
      %v1742 = vpop.f32.mrf.mxu0
      %v1743 = vadd.f32 %v1165, %v1742
      %1744 = vmatmul.f32.gmra.mxu0 %v1571
      %v1745 = vpop.f32.mrf.mxu0
      %v1746 = vadd.f32 %v1168, %v1745
      %1747 = vmatmul.f32.gmra.mxu0 %v1574
      %v1748 = vpop.f32.mrf.mxu0
      %v1749 = vadd.f32 %v1171, %v1748
      %1750 = vdwg.mxu0
      %1751 = vmatpush.msra.mxu0 0.0
      %1752 = vmatpush.msra.mxu0 0.0
      %1753 = vmatpush.msra.mxu0 0.0
      %1754 = vmatpush.msra.mxu0 0.0
      %1755 = vmatpush.msra.mxu0 0.0
      %1756 = vmatpush.msra.mxu0 0.0
      %1757 = vmatpush.msra.mxu0 0.0
      %1758 = vmatpush.msra.mxu0 0.0
      %1759 = vmatpush.msra.mxu0 0.0
      %1760 = vmatpush.msra.mxu0 0.0
      %1761 = vmatpush.msra.mxu0 0.0
      %1762 = vmatpush.msra.mxu0 0.0
      %1763 = vmatpush.msra.mxu0 0.0
      %1764 = vmatpush.msra.mxu0 0.0
      %1765 = vmatpush.msra.mxu0 %v791
      %1766 = vmatpush.msra.mxu0 %v775
      %1767 = vmatmul.f32.gmra.mxu0 %v1559
      %v1768 = vpop.f32.mrf.mxu0
      %v1769 = vadd.f32 %v1191, %v1768
      %1770 = vmatmul.f32.gmra.mxu0 %v1562
      %v1771 = vpop.f32.mrf.mxu0
      %v1772 = vadd.f32 %v1194, %v1771
      %1773 = vmatmul.f32.gmra.mxu0 %v1565
      %v1774 = vpop.f32.mrf.mxu0
      %v1775 = vadd.f32 %v1197, %v1774
      %1776 = vmatmul.f32.gmra.mxu0 %v1568
      %v1777 = vpop.f32.mrf.mxu0
      %v1778 = vadd.f32 %v1200, %v1777
      %1779 = vmatmul.f32.gmra.mxu0 %v1571
      %v1780 = vpop.f32.mrf.mxu0
      %v1781 = vadd.f32 %v1203, %v1780
      %1782 = vmatmul.f32.gmra.mxu0 %v1574
      %v1783 = vpop.f32.mrf.mxu0
      %v1784 = vadd.f32 %v1206, %v1783
      %1785 = vdwg.mxu0
      %1786 = vmatpush.msra.mxu0 0.0
      %1787 = vmatpush.msra.mxu0 0.0
      %1788 = vmatpush.msra.mxu0 0.0
      %1789 = vmatpush.msra.mxu0 0.0
      %1790 = vmatpush.msra.mxu0 0.0
      %1791 = vmatpush.msra.mxu0 0.0
      %1792 = vmatpush.msra.mxu0 0.0
      %1793 = vmatpush.msra.mxu0 0.0
      %1794 = vmatpush.msra.mxu0 0.0
      %1795 = vmatpush.msra.mxu0 0.0
      %1796 = vmatpush.msra.mxu0 0.0
      %1797 = vmatpush.msra.mxu0 0.0
      %1798 = vmatpush.msra.mxu0 0.0
      %1799 = vmatpush.msra.mxu0 0.0
      %1800 = vmatpush.msra.mxu0 %v792
      %1801 = vmatpush.msra.mxu0 %v776
      %1802 = vmatmul.f32.gmra.mxu0 %v1559
      %v1803 = vpop.f32.mrf.mxu0
      %v1804 = vadd.f32 %v1226, %v1803
      %1805 = vmatmul.f32.gmra.mxu0 %v1562
      %v1806 = vpop.f32.mrf.mxu0
      %v1807 = vadd.f32 %v1229, %v1806
      %1808 = vmatmul.f32.gmra.mxu0 %v1565
      %v1809 = vpop.f32.mrf.mxu0
      %v1810 = vadd.f32 %v1232, %v1809
      %1811 = vmatmul.f32.gmra.mxu0 %v1568
      %v1812 = vpop.f32.mrf.mxu0
      %v1813 = vadd.f32 %v1235, %v1812
      %1814 = vmatmul.f32.gmra.mxu0 %v1571
      %v1815 = vpop.f32.mrf.mxu0
      %v1816 = vadd.f32 %v1238, %v1815
      %1817 = vmatmul.f32.gmra.mxu0 %v1574
      %v1818 = vpop.f32.mrf.mxu0
      %v1819 = vadd.f32 %v1241, %v1818
      %1820 = vdwg.mxu0
      %1821 = vmatpush.msra.mxu0 0.0
      %1822 = vmatpush.msra.mxu0 0.0
      %1823 = vmatpush.msra.mxu0 0.0
      %1824 = vmatpush.msra.mxu0 0.0
      %1825 = vmatpush.msra.mxu0 0.0
      %1826 = vmatpush.msra.mxu0 0.0
      %1827 = vmatpush.msra.mxu0 0.0
      %1828 = vmatpush.msra.mxu0 0.0
      %1829 = vmatpush.msra.mxu0 0.0
      %1830 = vmatpush.msra.mxu0 0.0
      %1831 = vmatpush.msra.mxu0 0.0
      %1832 = vmatpush.msra.mxu0 0.0
      %1833 = vmatpush.msra.mxu0 0.0
      %1834 = vmatpush.msra.mxu0 0.0
      %1835 = vmatpush.msra.mxu0 %v793
      %1836 = vmatpush.msra.mxu0 %v777
      %1837 = vmatmul.f32.gmra.mxu0 %v1559
      %v1838 = vpop.f32.mrf.mxu0
      %v1839 = vadd.f32 %v1261, %v1838
      %1840 = vmatmul.f32.gmra.mxu0 %v1562
      %v1841 = vpop.f32.mrf.mxu0
      %v1842 = vadd.f32 %v1264, %v1841
      %1843 = vmatmul.f32.gmra.mxu0 %v1565
      %v1844 = vpop.f32.mrf.mxu0
      %v1845 = vadd.f32 %v1267, %v1844
      %1846 = vmatmul.f32.gmra.mxu0 %v1568
      %v1847 = vpop.f32.mrf.mxu0
      %v1848 = vadd.f32 %v1270, %v1847
      %1849 = vmatmul.f32.gmra.mxu0 %v1571
      %v1850 = vpop.f32.mrf.mxu0
      %v1851 = vadd.f32 %v1273, %v1850
      %1852 = vmatmul.f32.gmra.mxu0 %v1574
      %v1853 = vpop.f32.mrf.mxu0
      %v1854 = vadd.f32 %v1276, %v1853
      %1855 = vdwg.mxu0
      %1856 = vmatpush.msra.mxu0 0.0
      %1857 = vmatpush.msra.mxu0 0.0
      %1858 = vmatpush.msra.mxu0 0.0
      %1859 = vmatpush.msra.mxu0 0.0
      %1860 = vmatpush.msra.mxu0 0.0
      %1861 = vmatpush.msra.mxu0 0.0
      %1862 = vmatpush.msra.mxu0 0.0
      %1863 = vmatpush.msra.mxu0 0.0
      %1864 = vmatpush.msra.mxu0 0.0
      %1865 = vmatpush.msra.mxu0 0.0
      %1866 = vmatpush.msra.mxu0 0.0
      %1867 = vmatpush.msra.mxu0 0.0
      %1868 = vmatpush.msra.mxu0 0.0
      %1869 = vmatpush.msra.mxu0 0.0
      %1870 = vmatpush.msra.mxu0 %v794
      %1871 = vmatpush.msra.mxu0 %v778
      %1872 = vmatmul.f32.gmra.mxu0 %v1559
      %v1873 = vpop.f32.mrf.mxu0
      %v1874 = vadd.f32 %v1296, %v1873
      %1875 = vmatmul.f32.gmra.mxu0 %v1562
      %v1876 = vpop.f32.mrf.mxu0
      %v1877 = vadd.f32 %v1299, %v1876
      %1878 = vmatmul.f32.gmra.mxu0 %v1565
      %v1879 = vpop.f32.mrf.mxu0
      %v1880 = vadd.f32 %v1302, %v1879
      %1881 = vmatmul.f32.gmra.mxu0 %v1568
      %v1882 = vpop.f32.mrf.mxu0
      %v1883 = vadd.f32 %v1305, %v1882
      %1884 = vmatmul.f32.gmra.mxu0 %v1571
      %v1885 = vpop.f32.mrf.mxu0
      %v1886 = vadd.f32 %v1308, %v1885
      %1887 = vmatmul.f32.gmra.mxu0 %v1574
      %v1888 = vpop.f32.mrf.mxu0
      %v1889 = vadd.f32 %v1311, %v1888
      %1890 = vdwg.mxu0
      %1891 = vmatpush.msra.mxu0 0.0
      %1892 = vmatpush.msra.mxu0 0.0
      %1893 = vmatpush.msra.mxu0 0.0
      %1894 = vmatpush.msra.mxu0 0.0
      %1895 = vmatpush.msra.mxu0 0.0
      %1896 = vmatpush.msra.mxu0 0.0
      %1897 = vmatpush.msra.mxu0 0.0
      %1898 = vmatpush.msra.mxu0 0.0
      %1899 = vmatpush.msra.mxu0 0.0
      %1900 = vmatpush.msra.mxu0 0.0
      %1901 = vmatpush.msra.mxu0 0.0
      %1902 = vmatpush.msra.mxu0 0.0
      %1903 = vmatpush.msra.mxu0 0.0
      %1904 = vmatpush.msra.mxu0 0.0
      %1905 = vmatpush.msra.mxu0 %v795
      %1906 = vmatpush.msra.mxu0 %v779
      %1907 = vmatmul.f32.gmra.mxu0 %v1559
      %v1908 = vpop.f32.mrf.mxu0
      %v1909 = vadd.f32 %v1331, %v1908
      %1910 = vmatmul.f32.gmra.mxu0 %v1562
      %v1911 = vpop.f32.mrf.mxu0
      %v1912 = vadd.f32 %v1334, %v1911
      %1913 = vmatmul.f32.gmra.mxu0 %v1565
      %v1914 = vpop.f32.mrf.mxu0
      %v1915 = vadd.f32 %v1337, %v1914
      %1916 = vmatmul.f32.gmra.mxu0 %v1568
      %v1917 = vpop.f32.mrf.mxu0
      %v1918 = vadd.f32 %v1340, %v1917
      %1919 = vmatmul.f32.gmra.mxu0 %v1571
      %v1920 = vpop.f32.mrf.mxu0
      %v1921 = vadd.f32 %v1343, %v1920
      %1922 = vmatmul.f32.gmra.mxu0 %v1574
      %v1923 = vpop.f32.mrf.mxu0
      %v1924 = vadd.f32 %v1346, %v1923
      %1925 = vdwg.mxu0
      %1926 = vmatpush.msra.mxu0 0.0
      %1927 = vmatpush.msra.mxu0 0.0
      %1928 = vmatpush.msra.mxu0 0.0
      %1929 = vmatpush.msra.mxu0 0.0
      %1930 = vmatpush.msra.mxu0 0.0
      %1931 = vmatpush.msra.mxu0 0.0
      %1932 = vmatpush.msra.mxu0 0.0
      %1933 = vmatpush.msra.mxu0 0.0
      %1934 = vmatpush.msra.mxu0 0.0
      %1935 = vmatpush.msra.mxu0 0.0
      %1936 = vmatpush.msra.mxu0 0.0
      %1937 = vmatpush.msra.mxu0 0.0
      %1938 = vmatpush.msra.mxu0 0.0
      %1939 = vmatpush.msra.mxu0 0.0
      %1940 = vmatpush.msra.mxu0 %v796
      %1941 = vmatpush.msra.mxu0 %v780
      %1942 = vmatmul.f32.gmra.mxu0 %v1559
      %v1943 = vpop.f32.mrf.mxu0
      %v1944 = vadd.f32 %v1366, %v1943
      %1945 = vmatmul.f32.gmra.mxu0 %v1562
      %v1946 = vpop.f32.mrf.mxu0
      %v1947 = vadd.f32 %v1369, %v1946
      %1948 = vmatmul.f32.gmra.mxu0 %v1565
      %v1949 = vpop.f32.mrf.mxu0
      %v1950 = vadd.f32 %v1372, %v1949
      %1951 = vmatmul.f32.gmra.mxu0 %v1568
      %v1952 = vpop.f32.mrf.mxu0
      %v1953 = vadd.f32 %v1375, %v1952
      %1954 = vmatmul.f32.gmra.mxu0 %v1571
      %v1955 = vpop.f32.mrf.mxu0
      %v1956 = vadd.f32 %v1378, %v1955
      %1957 = vmatmul.f32.gmra.mxu0 %v1574
      %v1958 = vpop.f32.mrf.mxu0
      %v1959 = vadd.f32 %v1381, %v1958
      %1960 = vdwg.mxu0
      %1961 = vmatpush.msra.mxu0 0.0
      %1962 = vmatpush.msra.mxu0 0.0
      %1963 = vmatpush.msra.mxu0 0.0
      %1964 = vmatpush.msra.mxu0 0.0
      %1965 = vmatpush.msra.mxu0 0.0
      %1966 = vmatpush.msra.mxu0 0.0
      %1967 = vmatpush.msra.mxu0 0.0
      %1968 = vmatpush.msra.mxu0 0.0
      %1969 = vmatpush.msra.mxu0 0.0
      %1970 = vmatpush.msra.mxu0 0.0
      %1971 = vmatpush.msra.mxu0 0.0
      %1972 = vmatpush.msra.mxu0 0.0
      %1973 = vmatpush.msra.mxu0 0.0
      %1974 = vmatpush.msra.mxu0 0.0
      %1975 = vmatpush.msra.mxu0 %v797
      %1976 = vmatpush.msra.mxu0 %v781
      %1977 = vmatmul.f32.gmra.mxu0 %v1559
      %v1978 = vpop.f32.mrf.mxu0
      %v1979 = vadd.f32 %v1401, %v1978
      %1980 = vmatmul.f32.gmra.mxu0 %v1562
      %v1981 = vpop.f32.mrf.mxu0
      %v1982 = vadd.f32 %v1404, %v1981
      %1983 = vmatmul.f32.gmra.mxu0 %v1565
      %v1984 = vpop.f32.mrf.mxu0
      %v1985 = vadd.f32 %v1407, %v1984
      %1986 = vmatmul.f32.gmra.mxu0 %v1568
      %v1987 = vpop.f32.mrf.mxu0
      %v1988 = vadd.f32 %v1410, %v1987
      %1989 = vmatmul.f32.gmra.mxu0 %v1571
      %v1990 = vpop.f32.mrf.mxu0
      %v1991 = vadd.f32 %v1413, %v1990
      %1992 = vmatmul.f32.gmra.mxu0 %v1574
      %v1993 = vpop.f32.mrf.mxu0
      %v1994 = vadd.f32 %v1416, %v1993
      %1995 = vdwg.mxu0
      %1996 = vmatpush.msra.mxu0 0.0
      %1997 = vmatpush.msra.mxu0 0.0
      %1998 = vmatpush.msra.mxu0 0.0
      %1999 = vmatpush.msra.mxu0 0.0
      %2000 = vmatpush.msra.mxu0 0.0
      %2001 = vmatpush.msra.mxu0 0.0
      %2002 = vmatpush.msra.mxu0 0.0
      %2003 = vmatpush.msra.mxu0 0.0
      %2004 = vmatpush.msra.mxu0 0.0
      %2005 = vmatpush.msra.mxu0 0.0
      %2006 = vmatpush.msra.mxu0 0.0
      %2007 = vmatpush.msra.mxu0 0.0
      %2008 = vmatpush.msra.mxu0 0.0
      %2009 = vmatpush.msra.mxu0 0.0
      %2010 = vmatpush.msra.mxu0 %v798
      %2011 = vmatpush.msra.mxu0 %v782
      %2012 = vmatmul.f32.gmra.mxu0 %v1559
      %v2013 = vpop.f32.mrf.mxu0
      %v2014 = vadd.f32 %v1436, %v2013
      %2015 = vmatmul.f32.gmra.mxu0 %v1562
      %v2016 = vpop.f32.mrf.mxu0
      %v2017 = vadd.f32 %v1439, %v2016
      %2018 = vmatmul.f32.gmra.mxu0 %v1565
      %v2019 = vpop.f32.mrf.mxu0
      %v2020 = vadd.f32 %v1442, %v2019
      %2021 = vmatmul.f32.gmra.mxu0 %v1568
      %v2022 = vpop.f32.mrf.mxu0
      %v2023 = vadd.f32 %v1445, %v2022
      %2024 = vmatmul.f32.gmra.mxu0 %v1571
      %v2025 = vpop.f32.mrf.mxu0
      %v2026 = vadd.f32 %v1448, %v2025
      %2027 = vmatmul.f32.gmra.mxu0 %v1574
      %v2028 = vpop.f32.mrf.mxu0
      %v2029 = vadd.f32 %v1451, %v2028
      %2030 = vdwg.mxu0
      %2031 = vmatpush.msra.mxu0 0.0
      %2032 = vmatpush.msra.mxu0 0.0
      %2033 = vmatpush.msra.mxu0 0.0
      %2034 = vmatpush.msra.mxu0 0.0
      %2035 = vmatpush.msra.mxu0 0.0
      %2036 = vmatpush.msra.mxu0 0.0
      %2037 = vmatpush.msra.mxu0 0.0
      %2038 = vmatpush.msra.mxu0 0.0
      %2039 = vmatpush.msra.mxu0 0.0
      %2040 = vmatpush.msra.mxu0 0.0
      %2041 = vmatpush.msra.mxu0 0.0
      %2042 = vmatpush.msra.mxu0 0.0
      %2043 = vmatpush.msra.mxu0 0.0
      %2044 = vmatpush.msra.mxu0 0.0
      %2045 = vmatpush.msra.mxu0 %v799
      %2046 = vmatpush.msra.mxu0 %v783
      %2047 = vmatmul.f32.gmra.mxu0 %v1559
      %v2048 = vpop.f32.mrf.mxu0
      %v2049 = vadd.f32 %v1471, %v2048
      %2050 = vmatmul.f32.gmra.mxu0 %v1562
      %v2051 = vpop.f32.mrf.mxu0
      %v2052 = vadd.f32 %v1474, %v2051
      %2053 = vmatmul.f32.gmra.mxu0 %v1565
      %v2054 = vpop.f32.mrf.mxu0
      %v2055 = vadd.f32 %v1477, %v2054
      %2056 = vmatmul.f32.gmra.mxu0 %v1568
      %v2057 = vpop.f32.mrf.mxu0
      %v2058 = vadd.f32 %v1480, %v2057
      %2059 = vmatmul.f32.gmra.mxu0 %v1571
      %v2060 = vpop.f32.mrf.mxu0
      %v2061 = vadd.f32 %v1483, %v2060
      %2062 = vmatmul.f32.gmra.mxu0 %v1574
      %v2063 = vpop.f32.mrf.mxu0
      %v2064 = vadd.f32 %v1486, %v2063
      %2065 = vdwg.mxu0
      %2066 = vmatpush.msra.mxu0 0.0
      %2067 = vmatpush.msra.mxu0 0.0
      %2068 = vmatpush.msra.mxu0 0.0
      %2069 = vmatpush.msra.mxu0 0.0
      %2070 = vmatpush.msra.mxu0 0.0
      %2071 = vmatpush.msra.mxu0 0.0
      %2072 = vmatpush.msra.mxu0 0.0
      %2073 = vmatpush.msra.mxu0 0.0
      %2074 = vmatpush.msra.mxu0 0.0
      %2075 = vmatpush.msra.mxu0 0.0
      %2076 = vmatpush.msra.mxu0 0.0
      %2077 = vmatpush.msra.mxu0 0.0
      %2078 = vmatpush.msra.mxu0 0.0
      %2079 = vmatpush.msra.mxu0 0.0
      %2080 = vmatpush.msra.mxu0 %v800
      %2081 = vmatpush.msra.mxu0 %v784
      %2082 = vmatmul.f32.gmra.mxu0 %v1559
      %v2083 = vpop.f32.mrf.mxu0
      %v2084 = vadd.f32 %v1506, %v2083
      %2085 = vmatmul.f32.gmra.mxu0 %v1562
      %v2086 = vpop.f32.mrf.mxu0
      %v2087 = vadd.f32 %v1509, %v2086
      %2088 = vmatmul.f32.gmra.mxu0 %v1565
      %v2089 = vpop.f32.mrf.mxu0
      %v2090 = vadd.f32 %v1512, %v2089
      %2091 = vmatmul.f32.gmra.mxu0 %v1568
      %v2092 = vpop.f32.mrf.mxu0
      %v2093 = vadd.f32 %v1515, %v2092
      %2094 = vmatmul.f32.gmra.mxu0 %v1571
      %v2095 = vpop.f32.mrf.mxu0
      %v2096 = vadd.f32 %v1518, %v2095
      %2097 = vmatmul.f32.gmra.mxu0 %v1574
      %v2098 = vpop.f32.mrf.mxu0
      %v2099 = vadd.f32 %v1521, %v2098
      %2100 = vdwg.mxu0
      %2101 = vmatpush.msra.mxu0 0.0
      %2102 = vmatpush.msra.mxu0 0.0
      %2103 = vmatpush.msra.mxu0 0.0
      %2104 = vmatpush.msra.mxu0 0.0
      %2105 = vmatpush.msra.mxu0 0.0
      %2106 = vmatpush.msra.mxu0 0.0
      %2107 = vmatpush.msra.mxu0 0.0
      %2108 = vmatpush.msra.mxu0 0.0
      %2109 = vmatpush.msra.mxu0 0.0
      %2110 = vmatpush.msra.mxu0 0.0
      %2111 = vmatpush.msra.mxu0 0.0
      %2112 = vmatpush.msra.mxu0 0.0
      %2113 = vmatpush.msra.mxu0 0.0
      %2114 = vmatpush.msra.mxu0 0.0
      %2115 = vmatpush.msra.mxu0 %v801
      %2116 = vmatpush.msra.mxu0 %v785
      %2117 = vmatmul.f32.gmra.mxu0 %v1559
      %v2118 = vpop.f32.mrf.mxu0
      %v2119 = vadd.f32 %v1541, %v2118
      %2120 = vmatmul.f32.gmra.mxu0 %v1562
      %v2121 = vpop.f32.mrf.mxu0
      %v2122 = vadd.f32 %v1544, %v2121
      %2123 = vmatmul.f32.gmra.mxu0 %v1565
      %v2124 = vpop.f32.mrf.mxu0
      %v2125 = vadd.f32 %v1547, %v2124
      %2126 = vmatmul.f32.gmra.mxu0 %v1568
      %v2127 = vpop.f32.mrf.mxu0
      %v2128 = vadd.f32 %v1550, %v2127
      %2129 = vmatmul.f32.gmra.mxu0 %v1571
      %v2130 = vpop.f32.mrf.mxu0
      %v2131 = vadd.f32 %v1553, %v2130
      %2132 = vmatmul.f32.gmra.mxu0 %v1574
      %v2133 = vpop.f32.mrf.mxu0
      %v2134 = vadd.f32 %v1556, %v2133
      %2135 = vdwg.mxu0
      %v2136 = vld [vmem:[%s3] sm:$0xff]
      %v2137 = vld [vmem:[%s3 + $0x8] sm:$0xff]
      %v2138 = vld [vmem:[%s3 + $0x10] sm:$0xff]
      %v2139 = vld [vmem:[%s3 + $0x18] sm:$0xff]
      %v2140 = vld [vmem:[%s3 + $0x20] sm:$0xff]
      %v2141 = vld [vmem:[%s3 + $0x28] sm:$0xff]
      %v2143 = vsel %vm979, %v2136, 0
      %v2146 = vsel %vm979, %v2137, 0
      %v2149 = vsel %vm979, %v2138, 0
      %v2152 = vsel %vm979, %v2139, 0
      %v2155 = vsel %vm979, %v2140, 0
      %v2158 = vsel %vm979, %v2141, 0
      %2160 = vmatpush.msra.mxu0 0.0
      %2161 = vmatpush.msra.mxu0 0.0
      %2162 = vmatpush.msra.mxu0 0.0
      %2163 = vmatpush.msra.mxu0 0.0
      %2164 = vmatpush.msra.mxu0 0.0
      %2165 = vmatpush.msra.mxu0 0.0
      %2166 = vmatpush.msra.mxu0 0.0
      %2167 = vmatpush.msra.mxu0 0.0
      %2168 = vmatpush.msra.mxu0 0.0
      %2169 = vmatpush.msra.mxu0 0.0
      %2170 = vmatpush.msra.mxu0 0.0
      %2171 = vmatpush.msra.mxu0 0.0
      %2172 = vmatpush.msra.mxu0 0.0
      %2173 = vmatpush.msra.mxu0 0.0
      %2174 = vmatpush.msra.mxu0 %v951
      %2175 = vmatpush.msra.mxu0 %v935
      %2176 = vmatmul.f32.gmra.mxu0 %v2143
      %v2177 = vpop.f32.mrf.mxu0
      %v2178 = vadd.f32 0.0, %v2177
      %2179 = vmatmul.f32.gmra.mxu0 %v2146
      %v2180 = vpop.f32.mrf.mxu0
      %v2181 = vadd.f32 0.0, %v2180
      %2182 = vmatmul.f32.gmra.mxu0 %v2149
      %v2183 = vpop.f32.mrf.mxu0
      %v2184 = vadd.f32 0.0, %v2183
      %2185 = vmatmul.f32.gmra.mxu0 %v2152
      %v2186 = vpop.f32.mrf.mxu0
      %v2187 = vadd.f32 0.0, %v2186
      %2188 = vmatmul.f32.gmra.mxu0 %v2155
      %v2189 = vpop.f32.mrf.mxu0
      %v2190 = vadd.f32 0.0, %v2189
      %2191 = vmatmul.f32.gmra.mxu0 %v2158
      %v2192 = vpop.f32.mrf.mxu0
      %v2193 = vadd.f32 0.0, %v2192
      %2194 = vdwg.mxu0
      %2195 = vmatpush.msra.mxu0 0.0
      %2196 = vmatpush.msra.mxu0 0.0
      %2197 = vmatpush.msra.mxu0 0.0
      %2198 = vmatpush.msra.mxu0 0.0
      %2199 = vmatpush.msra.mxu0 0.0
      %2200 = vmatpush.msra.mxu0 0.0
      %2201 = vmatpush.msra.mxu0 0.0
      %2202 = vmatpush.msra.mxu0 0.0
      %2203 = vmatpush.msra.mxu0 0.0
      %2204 = vmatpush.msra.mxu0 0.0
      %2205 = vmatpush.msra.mxu0 0.0
      %2206 = vmatpush.msra.mxu0 0.0
      %2207 = vmatpush.msra.mxu0 0.0
      %2208 = vmatpush.msra.mxu0 0.0
      %2209 = vmatpush.msra.mxu0 %v952
      %2210 = vmatpush.msra.mxu0 %v936
      %2211 = vmatmul.f32.gmra.mxu0 %v2143
      %v2212 = vpop.f32.mrf.mxu0
      %v2213 = vadd.f32 0.0, %v2212
      %2214 = vmatmul.f32.gmra.mxu0 %v2146
      %v2215 = vpop.f32.mrf.mxu0
      %v2216 = vadd.f32 0.0, %v2215
      %2217 = vmatmul.f32.gmra.mxu0 %v2149
      %v2218 = vpop.f32.mrf.mxu0
      %v2219 = vadd.f32 0.0, %v2218
      %2220 = vmatmul.f32.gmra.mxu0 %v2152
      %v2221 = vpop.f32.mrf.mxu0
      %v2222 = vadd.f32 0.0, %v2221
      %2223 = vmatmul.f32.gmra.mxu0 %v2155
      %v2224 = vpop.f32.mrf.mxu0
      %v2225 = vadd.f32 0.0, %v2224
      %2226 = vmatmul.f32.gmra.mxu0 %v2158
      %v2227 = vpop.f32.mrf.mxu0
      %v2228 = vadd.f32 0.0, %v2227
      %2229 = vdwg.mxu0
      %2230 = vmatpush.msra.mxu0 0.0
      %2231 = vmatpush.msra.mxu0 0.0
      %2232 = vmatpush.msra.mxu0 0.0
      %2233 = vmatpush.msra.mxu0 0.0
      %2234 = vmatpush.msra.mxu0 0.0
      %2235 = vmatpush.msra.mxu0 0.0
      %2236 = vmatpush.msra.mxu0 0.0
      %2237 = vmatpush.msra.mxu0 0.0
      %2238 = vmatpush.msra.mxu0 0.0
      %2239 = vmatpush.msra.mxu0 0.0
      %2240 = vmatpush.msra.mxu0 0.0
      %2241 = vmatpush.msra.mxu0 0.0
      %2242 = vmatpush.msra.mxu0 0.0
      %2243 = vmatpush.msra.mxu0 0.0
      %2244 = vmatpush.msra.mxu0 %v953
      %2245 = vmatpush.msra.mxu0 %v937
      %2246 = vmatmul.f32.gmra.mxu0 %v2143
      %v2247 = vpop.f32.mrf.mxu0
      %v2248 = vadd.f32 0.0, %v2247
      %2249 = vmatmul.f32.gmra.mxu0 %v2146
      %v2250 = vpop.f32.mrf.mxu0
      %v2251 = vadd.f32 0.0, %v2250
      %2252 = vmatmul.f32.gmra.mxu0 %v2149
      %v2253 = vpop.f32.mrf.mxu0
      %v2254 = vadd.f32 0.0, %v2253
      %2255 = vmatmul.f32.gmra.mxu0 %v2152
      %v2256 = vpop.f32.mrf.mxu0
      %v2257 = vadd.f32 0.0, %v2256
      %2258 = vmatmul.f32.gmra.mxu0 %v2155
      %v2259 = vpop.f32.mrf.mxu0
      %v2260 = vadd.f32 0.0, %v2259
      %2261 = vmatmul.f32.gmra.mxu0 %v2158
      %v2262 = vpop.f32.mrf.mxu0
      %v2263 = vadd.f32 0.0, %v2262
      %2264 = vdwg.mxu0
      %2265 = vmatpush.msra.mxu0 0.0
      %2266 = vmatpush.msra.mxu0 0.0
      %2267 = vmatpush.msra.mxu0 0.0
      %2268 = vmatpush.msra.mxu0 0.0
      %2269 = vmatpush.msra.mxu0 0.0
      %2270 = vmatpush.msra.mxu0 0.0
      %2271 = vmatpush.msra.mxu0 0.0
      %2272 = vmatpush.msra.mxu0 0.0
      %2273 = vmatpush.msra.mxu0 0.0
      %2274 = vmatpush.msra.mxu0 0.0
      %2275 = vmatpush.msra.mxu0 0.0
      %2276 = vmatpush.msra.mxu0 0.0
      %2277 = vmatpush.msra.mxu0 0.0
      %2278 = vmatpush.msra.mxu0 0.0
      %2279 = vmatpush.msra.mxu0 %v954
      %2280 = vmatpush.msra.mxu0 %v938
      %2281 = vmatmul.f32.gmra.mxu0 %v2143
      %v2282 = vpop.f32.mrf.mxu0
      %v2283 = vadd.f32 0.0, %v2282
      %2284 = vmatmul.f32.gmra.mxu0 %v2146
      %v2285 = vpop.f32.mrf.mxu0
      %v2286 = vadd.f32 0.0, %v2285
      %2287 = vmatmul.f32.gmra.mxu0 %v2149
      %v2288 = vpop.f32.mrf.mxu0
      %v2289 = vadd.f32 0.0, %v2288
      %2290 = vmatmul.f32.gmra.mxu0 %v2152
      %v2291 = vpop.f32.mrf.mxu0
      %v2292 = vadd.f32 0.0, %v2291
      %2293 = vmatmul.f32.gmra.mxu0 %v2155
      %v2294 = vpop.f32.mrf.mxu0
      %v2295 = vadd.f32 0.0, %v2294
      %2296 = vmatmul.f32.gmra.mxu0 %v2158
      %v2297 = vpop.f32.mrf.mxu0
      %v2298 = vadd.f32 0.0, %v2297
      %2299 = vdwg.mxu0
      %2300 = vmatpush.msra.mxu0 0.0
      %2301 = vmatpush.msra.mxu0 0.0
      %2302 = vmatpush.msra.mxu0 0.0
      %2303 = vmatpush.msra.mxu0 0.0
      %2304 = vmatpush.msra.mxu0 0.0
      %2305 = vmatpush.msra.mxu0 0.0
      %2306 = vmatpush.msra.mxu0 0.0
      %2307 = vmatpush.msra.mxu0 0.0
      %2308 = vmatpush.msra.mxu0 0.0
      %2309 = vmatpush.msra.mxu0 0.0
      %2310 = vmatpush.msra.mxu0 0.0
      %2311 = vmatpush.msra.mxu0 0.0
      %2312 = vmatpush.msra.mxu0 0.0
      %2313 = vmatpush.msra.mxu0 0.0
      %2314 = vmatpush.msra.mxu0 %v955
      %2315 = vmatpush.msra.mxu0 %v939
      %2316 = vmatmul.f32.gmra.mxu0 %v2143
      %v2317 = vpop.f32.mrf.mxu0
      %v2318 = vadd.f32 0.0, %v2317
      %2319 = vmatmul.f32.gmra.mxu0 %v2146
      %v2320 = vpop.f32.mrf.mxu0
      %v2321 = vadd.f32 0.0, %v2320
      %2322 = vmatmul.f32.gmra.mxu0 %v2149
      %v2323 = vpop.f32.mrf.mxu0
      %v2324 = vadd.f32 0.0, %v2323
      %2325 = vmatmul.f32.gmra.mxu0 %v2152
      %v2326 = vpop.f32.mrf.mxu0
      %v2327 = vadd.f32 0.0, %v2326
      %2328 = vmatmul.f32.gmra.mxu0 %v2155
      %v2329 = vpop.f32.mrf.mxu0
      %v2330 = vadd.f32 0.0, %v2329
      %2331 = vmatmul.f32.gmra.mxu0 %v2158
      %v2332 = vpop.f32.mrf.mxu0
      %v2333 = vadd.f32 0.0, %v2332
      %2334 = vdwg.mxu0
      %2335 = vmatpush.msra.mxu0 0.0
      %2336 = vmatpush.msra.mxu0 0.0
      %2337 = vmatpush.msra.mxu0 0.0
      %2338 = vmatpush.msra.mxu0 0.0
      %2339 = vmatpush.msra.mxu0 0.0
      %2340 = vmatpush.msra.mxu0 0.0
      %2341 = vmatpush.msra.mxu0 0.0
      %2342 = vmatpush.msra.mxu0 0.0
      %2343 = vmatpush.msra.mxu0 0.0
      %2344 = vmatpush.msra.mxu0 0.0
      %2345 = vmatpush.msra.mxu0 0.0
      %2346 = vmatpush.msra.mxu0 0.0
      %2347 = vmatpush.msra.mxu0 0.0
      %2348 = vmatpush.msra.mxu0 0.0
      %2349 = vmatpush.msra.mxu0 %v956
      %2350 = vmatpush.msra.mxu0 %v940
      %2351 = vmatmul.f32.gmra.mxu0 %v2143
      %v2352 = vpop.f32.mrf.mxu0
      %v2353 = vadd.f32 0.0, %v2352
      %2354 = vmatmul.f32.gmra.mxu0 %v2146
      %v2355 = vpop.f32.mrf.mxu0
      %v2356 = vadd.f32 0.0, %v2355
      %2357 = vmatmul.f32.gmra.mxu0 %v2149
      %v2358 = vpop.f32.mrf.mxu0
      %v2359 = vadd.f32 0.0, %v2358
      %2360 = vmatmul.f32.gmra.mxu0 %v2152
      %v2361 = vpop.f32.mrf.mxu0
      %v2362 = vadd.f32 0.0, %v2361
      %2363 = vmatmul.f32.gmra.mxu0 %v2155
      %v2364 = vpop.f32.mrf.mxu0
      %v2365 = vadd.f32 0.0, %v2364
      %2366 = vmatmul.f32.gmra.mxu0 %v2158
      %v2367 = vpop.f32.mrf.mxu0
      %v2368 = vadd.f32 0.0, %v2367
      %2369 = vdwg.mxu0
      %2370 = vmatpush.msra.mxu0 0.0
      %2371 = vmatpush.msra.mxu0 0.0
      %2372 = vmatpush.msra.mxu0 0.0
      %2373 = vmatpush.msra.mxu0 0.0
      %2374 = vmatpush.msra.mxu0 0.0
      %2375 = vmatpush.msra.mxu0 0.0
      %2376 = vmatpush.msra.mxu0 0.0
      %2377 = vmatpush.msra.mxu0 0.0
      %2378 = vmatpush.msra.mxu0 0.0
      %2379 = vmatpush.msra.mxu0 0.0
      %2380 = vmatpush.msra.mxu0 0.0
      %2381 = vmatpush.msra.mxu0 0.0
      %2382 = vmatpush.msra.mxu0 0.0
      %2383 = vmatpush.msra.mxu0 0.0
      %2384 = vmatpush.msra.mxu0 %v957
      %2385 = vmatpush.msra.mxu0 %v941
      %2386 = vmatmul.f32.gmra.mxu0 %v2143
      %v2387 = vpop.f32.mrf.mxu0
      %v2388 = vadd.f32 0.0, %v2387
      %2389 = vmatmul.f32.gmra.mxu0 %v2146
      %v2390 = vpop.f32.mrf.mxu0
      %v2391 = vadd.f32 0.0, %v2390
      %2392 = vmatmul.f32.gmra.mxu0 %v2149
      %v2393 = vpop.f32.mrf.mxu0
      %v2394 = vadd.f32 0.0, %v2393
      %2395 = vmatmul.f32.gmra.mxu0 %v2152
      %v2396 = vpop.f32.mrf.mxu0
      %v2397 = vadd.f32 0.0, %v2396
      %2398 = vmatmul.f32.gmra.mxu0 %v2155
      %v2399 = vpop.f32.mrf.mxu0
      %v2400 = vadd.f32 0.0, %v2399
      %2401 = vmatmul.f32.gmra.mxu0 %v2158
      %v2402 = vpop.f32.mrf.mxu0
      %v2403 = vadd.f32 0.0, %v2402
      %2404 = vdwg.mxu0
      %2405 = vmatpush.msra.mxu0 0.0
      %2406 = vmatpush.msra.mxu0 0.0
      %2407 = vmatpush.msra.mxu0 0.0
      %2408 = vmatpush.msra.mxu0 0.0
      %2409 = vmatpush.msra.mxu0 0.0
      %2410 = vmatpush.msra.mxu0 0.0
      %2411 = vmatpush.msra.mxu0 0.0
      %2412 = vmatpush.msra.mxu0 0.0
      %2413 = vmatpush.msra.mxu0 0.0
      %2414 = vmatpush.msra.mxu0 0.0
      %2415 = vmatpush.msra.mxu0 0.0
      %2416 = vmatpush.msra.mxu0 0.0
      %2417 = vmatpush.msra.mxu0 0.0
      %2418 = vmatpush.msra.mxu0 0.0
      %2419 = vmatpush.msra.mxu0 %v958
      %2420 = vmatpush.msra.mxu0 %v942
      %2421 = vmatmul.f32.gmra.mxu0 %v2143
      %v2422 = vpop.f32.mrf.mxu0
      %v2423 = vadd.f32 0.0, %v2422
      %2424 = vmatmul.f32.gmra.mxu0 %v2146
      %v2425 = vpop.f32.mrf.mxu0
      %v2426 = vadd.f32 0.0, %v2425
      %2427 = vmatmul.f32.gmra.mxu0 %v2149
      %v2428 = vpop.f32.mrf.mxu0
      %v2429 = vadd.f32 0.0, %v2428
      %2430 = vmatmul.f32.gmra.mxu0 %v2152
      %v2431 = vpop.f32.mrf.mxu0
      %v2432 = vadd.f32 0.0, %v2431
      %2433 = vmatmul.f32.gmra.mxu0 %v2155
      %v2434 = vpop.f32.mrf.mxu0
      %v2435 = vadd.f32 0.0, %v2434
      %2436 = vmatmul.f32.gmra.mxu0 %v2158
      %v2437 = vpop.f32.mrf.mxu0
      %v2438 = vadd.f32 0.0, %v2437
      %2439 = vdwg.mxu0
      %2440 = vmatpush.msra.mxu0 0.0
      %2441 = vmatpush.msra.mxu0 0.0
      %2442 = vmatpush.msra.mxu0 0.0
      %2443 = vmatpush.msra.mxu0 0.0
      %2444 = vmatpush.msra.mxu0 0.0
      %2445 = vmatpush.msra.mxu0 0.0
      %2446 = vmatpush.msra.mxu0 0.0
      %2447 = vmatpush.msra.mxu0 0.0
      %2448 = vmatpush.msra.mxu0 0.0
      %2449 = vmatpush.msra.mxu0 0.0
      %2450 = vmatpush.msra.mxu0 0.0
      %2451 = vmatpush.msra.mxu0 0.0
      %2452 = vmatpush.msra.mxu0 0.0
      %2453 = vmatpush.msra.mxu0 0.0
      %2454 = vmatpush.msra.mxu0 %v959
      %2455 = vmatpush.msra.mxu0 %v943
      %2456 = vmatmul.f32.gmra.mxu0 %v2143
      %v2457 = vpop.f32.mrf.mxu0
      %v2458 = vadd.f32 0.0, %v2457
      %2459 = vmatmul.f32.gmra.mxu0 %v2146
      %v2460 = vpop.f32.mrf.mxu0
      %v2461 = vadd.f32 0.0, %v2460
      %2462 = vmatmul.f32.gmra.mxu0 %v2149
      %v2463 = vpop.f32.mrf.mxu0
      %v2464 = vadd.f32 0.0, %v2463
      %2465 = vmatmul.f32.gmra.mxu0 %v2152
      %v2466 = vpop.f32.mrf.mxu0
      %v2467 = vadd.f32 0.0, %v2466
      %2468 = vmatmul.f32.gmra.mxu0 %v2155
      %v2469 = vpop.f32.mrf.mxu0
      %v2470 = vadd.f32 0.0, %v2469
      %2471 = vmatmul.f32.gmra.mxu0 %v2158
      %v2472 = vpop.f32.mrf.mxu0
      %v2473 = vadd.f32 0.0, %v2472
      %2474 = vdwg.mxu0
      %2475 = vmatpush.msra.mxu0 0.0
      %2476 = vmatpush.msra.mxu0 0.0
      %2477 = vmatpush.msra.mxu0 0.0
      %2478 = vmatpush.msra.mxu0 0.0
      %2479 = vmatpush.msra.mxu0 0.0
      %2480 = vmatpush.msra.mxu0 0.0
      %2481 = vmatpush.msra.mxu0 0.0
      %2482 = vmatpush.msra.mxu0 0.0
      %2483 = vmatpush.msra.mxu0 0.0
      %2484 = vmatpush.msra.mxu0 0.0
      %2485 = vmatpush.msra.mxu0 0.0
      %2486 = vmatpush.msra.mxu0 0.0
      %2487 = vmatpush.msra.mxu0 0.0
      %2488 = vmatpush.msra.mxu0 0.0
      %2489 = vmatpush.msra.mxu0 %v960
      %2490 = vmatpush.msra.mxu0 %v944
      %2491 = vmatmul.f32.gmra.mxu0 %v2143
      %v2492 = vpop.f32.mrf.mxu0
      %v2493 = vadd.f32 0.0, %v2492
      %2494 = vmatmul.f32.gmra.mxu0 %v2146
      %v2495 = vpop.f32.mrf.mxu0
      %v2496 = vadd.f32 0.0, %v2495
      %2497 = vmatmul.f32.gmra.mxu0 %v2149
      %v2498 = vpop.f32.mrf.mxu0
      %v2499 = vadd.f32 0.0, %v2498
      %2500 = vmatmul.f32.gmra.mxu0 %v2152
      %v2501 = vpop.f32.mrf.mxu0
      %v2502 = vadd.f32 0.0, %v2501
      %2503 = vmatmul.f32.gmra.mxu0 %v2155
      %v2504 = vpop.f32.mrf.mxu0
      %v2505 = vadd.f32 0.0, %v2504
      %2506 = vmatmul.f32.gmra.mxu0 %v2158
      %v2507 = vpop.f32.mrf.mxu0
      %v2508 = vadd.f32 0.0, %v2507
      %2509 = vdwg.mxu0
      %2510 = vmatpush.msra.mxu0 0.0
      %2511 = vmatpush.msra.mxu0 0.0
      %2512 = vmatpush.msra.mxu0 0.0
      %2513 = vmatpush.msra.mxu0 0.0
      %2514 = vmatpush.msra.mxu0 0.0
      %2515 = vmatpush.msra.mxu0 0.0
      %2516 = vmatpush.msra.mxu0 0.0
      %2517 = vmatpush.msra.mxu0 0.0
      %2518 = vmatpush.msra.mxu0 0.0
      %2519 = vmatpush.msra.mxu0 0.0
      %2520 = vmatpush.msra.mxu0 0.0
      %2521 = vmatpush.msra.mxu0 0.0
      %2522 = vmatpush.msra.mxu0 0.0
      %2523 = vmatpush.msra.mxu0 0.0
      %2524 = vmatpush.msra.mxu0 %v961
      %2525 = vmatpush.msra.mxu0 %v945
      %2526 = vmatmul.f32.gmra.mxu0 %v2143
      %v2527 = vpop.f32.mrf.mxu0
      %v2528 = vadd.f32 0.0, %v2527
      %2529 = vmatmul.f32.gmra.mxu0 %v2146
      %v2530 = vpop.f32.mrf.mxu0
      %v2531 = vadd.f32 0.0, %v2530
      %2532 = vmatmul.f32.gmra.mxu0 %v2149
      %v2533 = vpop.f32.mrf.mxu0
      %v2534 = vadd.f32 0.0, %v2533
      %2535 = vmatmul.f32.gmra.mxu0 %v2152
      %v2536 = vpop.f32.mrf.mxu0
      %v2537 = vadd.f32 0.0, %v2536
      %2538 = vmatmul.f32.gmra.mxu0 %v2155
      %v2539 = vpop.f32.mrf.mxu0
      %v2540 = vadd.f32 0.0, %v2539
      %2541 = vmatmul.f32.gmra.mxu0 %v2158
      %v2542 = vpop.f32.mrf.mxu0
      %v2543 = vadd.f32 0.0, %v2542
      %2544 = vdwg.mxu0
      %2545 = vmatpush.msra.mxu0 0.0
      %2546 = vmatpush.msra.mxu0 0.0
      %2547 = vmatpush.msra.mxu0 0.0
      %2548 = vmatpush.msra.mxu0 0.0
      %2549 = vmatpush.msra.mxu0 0.0
      %2550 = vmatpush.msra.mxu0 0.0
      %2551 = vmatpush.msra.mxu0 0.0
      %2552 = vmatpush.msra.mxu0 0.0
      %2553 = vmatpush.msra.mxu0 0.0
      %2554 = vmatpush.msra.mxu0 0.0
      %2555 = vmatpush.msra.mxu0 0.0
      %2556 = vmatpush.msra.mxu0 0.0
      %2557 = vmatpush.msra.mxu0 0.0
      %2558 = vmatpush.msra.mxu0 0.0
      %2559 = vmatpush.msra.mxu0 %v962
      %2560 = vmatpush.msra.mxu0 %v946
      %2561 = vmatmul.f32.gmra.mxu0 %v2143
      %v2562 = vpop.f32.mrf.mxu0
      %v2563 = vadd.f32 0.0, %v2562
      %2564 = vmatmul.f32.gmra.mxu0 %v2146
      %v2565 = vpop.f32.mrf.mxu0
      %v2566 = vadd.f32 0.0, %v2565
      %2567 = vmatmul.f32.gmra.mxu0 %v2149
      %v2568 = vpop.f32.mrf.mxu0
      %v2569 = vadd.f32 0.0, %v2568
      %2570 = vmatmul.f32.gmra.mxu0 %v2152
      %v2571 = vpop.f32.mrf.mxu0
      %v2572 = vadd.f32 0.0, %v2571
      %2573 = vmatmul.f32.gmra.mxu0 %v2155
      %v2574 = vpop.f32.mrf.mxu0
      %v2575 = vadd.f32 0.0, %v2574
      %2576 = vmatmul.f32.gmra.mxu0 %v2158
      %v2577 = vpop.f32.mrf.mxu0
      %v2578 = vadd.f32 0.0, %v2577
      %2579 = vdwg.mxu0
      %2580 = vmatpush.msra.mxu0 0.0
      %2581 = vmatpush.msra.mxu0 0.0
      %2582 = vmatpush.msra.mxu0 0.0
      %2583 = vmatpush.msra.mxu0 0.0
      %2584 = vmatpush.msra.mxu0 0.0
      %2585 = vmatpush.msra.mxu0 0.0
      %2586 = vmatpush.msra.mxu0 0.0
      %2587 = vmatpush.msra.mxu0 0.0
      %2588 = vmatpush.msra.mxu0 0.0
      %2589 = vmatpush.msra.mxu0 0.0
      %2590 = vmatpush.msra.mxu0 0.0
      %2591 = vmatpush.msra.mxu0 0.0
      %2592 = vmatpush.msra.mxu0 0.0
      %2593 = vmatpush.msra.mxu0 0.0
      %2594 = vmatpush.msra.mxu0 %v963
      %2595 = vmatpush.msra.mxu0 %v947
      %2596 = vmatmul.f32.gmra.mxu0 %v2143
      %v2597 = vpop.f32.mrf.mxu0
      %v2598 = vadd.f32 0.0, %v2597
      %2599 = vmatmul.f32.gmra.mxu0 %v2146
      %v2600 = vpop.f32.mrf.mxu0
      %v2601 = vadd.f32 0.0, %v2600
      %2602 = vmatmul.f32.gmra.mxu0 %v2149
      %v2603 = vpop.f32.mrf.mxu0
      %v2604 = vadd.f32 0.0, %v2603
      %2605 = vmatmul.f32.gmra.mxu0 %v2152
      %v2606 = vpop.f32.mrf.mxu0
      %v2607 = vadd.f32 0.0, %v2606
      %2608 = vmatmul.f32.gmra.mxu0 %v2155
      %v2609 = vpop.f32.mrf.mxu0
      %v2610 = vadd.f32 0.0, %v2609
      %2611 = vmatmul.f32.gmra.mxu0 %v2158
      %v2612 = vpop.f32.mrf.mxu0
      %v2613 = vadd.f32 0.0, %v2612
      %2614 = vdwg.mxu0
      %2615 = vmatpush.msra.mxu0 0.0
      %2616 = vmatpush.msra.mxu0 0.0
      %2617 = vmatpush.msra.mxu0 0.0
      %2618 = vmatpush.msra.mxu0 0.0
      %2619 = vmatpush.msra.mxu0 0.0
      %2620 = vmatpush.msra.mxu0 0.0
      %2621 = vmatpush.msra.mxu0 0.0
      %2622 = vmatpush.msra.mxu0 0.0
      %2623 = vmatpush.msra.mxu0 0.0
      %2624 = vmatpush.msra.mxu0 0.0
      %2625 = vmatpush.msra.mxu0 0.0
      %2626 = vmatpush.msra.mxu0 0.0
      %2627 = vmatpush.msra.mxu0 0.0
      %2628 = vmatpush.msra.mxu0 0.0
      %2629 = vmatpush.msra.mxu0 %v964
      %2630 = vmatpush.msra.mxu0 %v948
      %2631 = vmatmul.f32.gmra.mxu0 %v2143
      %v2632 = vpop.f32.mrf.mxu0
      %v2633 = vadd.f32 0.0, %v2632
      %2634 = vmatmul.f32.gmra.mxu0 %v2146
      %v2635 = vpop.f32.mrf.mxu0
      %v2636 = vadd.f32 0.0, %v2635
      %2637 = vmatmul.f32.gmra.mxu0 %v2149
      %v2638 = vpop.f32.mrf.mxu0
      %v2639 = vadd.f32 0.0, %v2638
      %2640 = vmatmul.f32.gmra.mxu0 %v2152
      %v2641 = vpop.f32.mrf.mxu0
      %v2642 = vadd.f32 0.0, %v2641
      %2643 = vmatmul.f32.gmra.mxu0 %v2155
      %v2644 = vpop.f32.mrf.mxu0
      %v2645 = vadd.f32 0.0, %v2644
      %2646 = vmatmul.f32.gmra.mxu0 %v2158
      %v2647 = vpop.f32.mrf.mxu0
      %v2648 = vadd.f32 0.0, %v2647
      %2649 = vdwg.mxu0
      %2650 = vmatpush.msra.mxu0 0.0
      %2651 = vmatpush.msra.mxu0 0.0
      %2652 = vmatpush.msra.mxu0 0.0
      %2653 = vmatpush.msra.mxu0 0.0
      %2654 = vmatpush.msra.mxu0 0.0
      %2655 = vmatpush.msra.mxu0 0.0
      %2656 = vmatpush.msra.mxu0 0.0
      %2657 = vmatpush.msra.mxu0 0.0
      %2658 = vmatpush.msra.mxu0 0.0
      %2659 = vmatpush.msra.mxu0 0.0
      %2660 = vmatpush.msra.mxu0 0.0
      %2661 = vmatpush.msra.mxu0 0.0
      %2662 = vmatpush.msra.mxu0 0.0
      %2663 = vmatpush.msra.mxu0 0.0
      %2664 = vmatpush.msra.mxu0 %v965
      %2665 = vmatpush.msra.mxu0 %v949
      %2666 = vmatmul.f32.gmra.mxu0 %v2143
      %v2667 = vpop.f32.mrf.mxu0
      %v2668 = vadd.f32 0.0, %v2667
      %2669 = vmatmul.f32.gmra.mxu0 %v2146
      %v2670 = vpop.f32.mrf.mxu0
      %v2671 = vadd.f32 0.0, %v2670
      %2672 = vmatmul.f32.gmra.mxu0 %v2149
      %v2673 = vpop.f32.mrf.mxu0
      %v2674 = vadd.f32 0.0, %v2673
      %2675 = vmatmul.f32.gmra.mxu0 %v2152
      %v2676 = vpop.f32.mrf.mxu0
      %v2677 = vadd.f32 0.0, %v2676
      %2678 = vmatmul.f32.gmra.mxu0 %v2155
      %v2679 = vpop.f32.mrf.mxu0
      %v2680 = vadd.f32 0.0, %v2679
      %2681 = vmatmul.f32.gmra.mxu0 %v2158
      %v2682 = vpop.f32.mrf.mxu0
      %v2683 = vadd.f32 0.0, %v2682
      %2684 = vdwg.mxu0
      %2685 = vmatpush.msra.mxu0 0.0
      %2686 = vmatpush.msra.mxu0 0.0
      %2687 = vmatpush.msra.mxu0 0.0
      %2688 = vmatpush.msra.mxu0 0.0
      %2689 = vmatpush.msra.mxu0 0.0
      %2690 = vmatpush.msra.mxu0 0.0
      %2691 = vmatpush.msra.mxu0 0.0
      %2692 = vmatpush.msra.mxu0 0.0
      %2693 = vmatpush.msra.mxu0 0.0
      %2694 = vmatpush.msra.mxu0 0.0
      %2695 = vmatpush.msra.mxu0 0.0
      %2696 = vmatpush.msra.mxu0 0.0
      %2697 = vmatpush.msra.mxu0 0.0
      %2698 = vmatpush.msra.mxu0 0.0
      %2699 = vmatpush.msra.mxu0 %v966
      %2700 = vmatpush.msra.mxu0 %v950
      %2701 = vmatmul.f32.gmra.mxu0 %v2143
      %v2702 = vpop.f32.mrf.mxu0
      %v2703 = vadd.f32 0.0, %v2702
      %2704 = vmatmul.f32.gmra.mxu0 %v2146
      %v2705 = vpop.f32.mrf.mxu0
      %v2706 = vadd.f32 0.0, %v2705
      %2707 = vmatmul.f32.gmra.mxu0 %v2149
      %v2708 = vpop.f32.mrf.mxu0
      %v2709 = vadd.f32 0.0, %v2708
      %2710 = vmatmul.f32.gmra.mxu0 %v2152
      %v2711 = vpop.f32.mrf.mxu0
      %v2712 = vadd.f32 0.0, %v2711
      %2713 = vmatmul.f32.gmra.mxu0 %v2155
      %v2714 = vpop.f32.mrf.mxu0
      %v2715 = vadd.f32 0.0, %v2714
      %2716 = vmatmul.f32.gmra.mxu0 %v2158
      %v2717 = vpop.f32.mrf.mxu0
      %v2718 = vadd.f32 0.0, %v2717
      %2719 = vdwg.mxu0
      %v2720 = vadd.f32 %v1594, %v2178
      %v2721 = vadd.f32 %v1629, %v2213
      %v2722 = vadd.f32 %v1664, %v2248
      %v2723 = vadd.f32 %v1699, %v2283
      %v2724 = vadd.f32 %v1734, %v2318
      %v2725 = vadd.f32 %v1769, %v2353
      %v2726 = vadd.f32 %v1804, %v2388
      %v2727 = vadd.f32 %v1839, %v2423
      %v2728 = vadd.f32 %v1874, %v2458
      %v2729 = vadd.f32 %v1909, %v2493
      %v2730 = vadd.f32 %v1944, %v2528
      %v2731 = vadd.f32 %v1979, %v2563
      %v2732 = vadd.f32 %v2014, %v2598
      %v2733 = vadd.f32 %v2049, %v2633
      %v2734 = vadd.f32 %v2084, %v2668
      %v2735 = vadd.f32 %v2119, %v2703
      %v2736 = vadd.f32 %v1597, %v2181
      %v2737 = vadd.f32 %v1632, %v2216
      %v2738 = vadd.f32 %v1667, %v2251
      %v2739 = vadd.f32 %v1702, %v2286
      %v2740 = vadd.f32 %v1737, %v2321
      %v2741 = vadd.f32 %v1772, %v2356
      %v2742 = vadd.f32 %v1807, %v2391
      %v2743 = vadd.f32 %v1842, %v2426
      %v2744 = vadd.f32 %v1877, %v2461
      %v2745 = vadd.f32 %v1912, %v2496
      %v2746 = vadd.f32 %v1947, %v2531
      %v2747 = vadd.f32 %v1982, %v2566
      %v2748 = vadd.f32 %v2017, %v2601
      %v2749 = vadd.f32 %v2052, %v2636
      %v2750 = vadd.f32 %v2087, %v2671
      %v2751 = vadd.f32 %v2122, %v2706
      %v2752 = vadd.f32 %v1600, %v2184
      %v2753 = vadd.f32 %v1635, %v2219
      %v2754 = vadd.f32 %v1670, %v2254
      %v2755 = vadd.f32 %v1705, %v2289
      %v2756 = vadd.f32 %v1740, %v2324
      %v2757 = vadd.f32 %v1775, %v2359
      %v2758 = vadd.f32 %v1810, %v2394
      %v2759 = vadd.f32 %v1845, %v2429
      %v2760 = vadd.f32 %v1880, %v2464
      %v2761 = vadd.f32 %v1915, %v2499
      %v2762 = vadd.f32 %v1950, %v2534
      %v2763 = vadd.f32 %v1985, %v2569
      %v2764 = vadd.f32 %v2020, %v2604
      %v2765 = vadd.f32 %v2055, %v2639
      %v2766 = vadd.f32 %v2090, %v2674
      %v2767 = vadd.f32 %v2125, %v2709
      %v2768 = vadd.f32 %v1603, %v2187
      %v2769 = vadd.f32 %v1638, %v2222
      %v2770 = vadd.f32 %v1673, %v2257
      %v2771 = vadd.f32 %v1708, %v2292
      %v2772 = vadd.f32 %v1743, %v2327
      %v2773 = vadd.f32 %v1778, %v2362
      %v2774 = vadd.f32 %v1813, %v2397
      %v2775 = vadd.f32 %v1848, %v2432
      %v2776 = vadd.f32 %v1883, %v2467
      %v2777 = vadd.f32 %v1918, %v2502
      %v2778 = vadd.f32 %v1953, %v2537
      %v2779 = vadd.f32 %v1988, %v2572
      %v2780 = vadd.f32 %v2023, %v2607
      %v2781 = vadd.f32 %v2058, %v2642
      %v2782 = vadd.f32 %v2093, %v2677
      %v2783 = vadd.f32 %v2128, %v2712
      %v2784 = vadd.f32 %v1606, %v2190
      %v2785 = vadd.f32 %v1641, %v2225
      %v2786 = vadd.f32 %v1676, %v2260
      %v2787 = vadd.f32 %v1711, %v2295
      %v2788 = vadd.f32 %v1746, %v2330
      %v2789 = vadd.f32 %v1781, %v2365
      %v2790 = vadd.f32 %v1816, %v2400
      %v2791 = vadd.f32 %v1851, %v2435
      %v2792 = vadd.f32 %v1886, %v2470
      %v2793 = vadd.f32 %v1921, %v2505
      %v2794 = vadd.f32 %v1956, %v2540
      %v2795 = vadd.f32 %v1991, %v2575
      %v2796 = vadd.f32 %v2026, %v2610
      %v2797 = vadd.f32 %v2061, %v2645
      %v2798 = vadd.f32 %v2096, %v2680
      %v2799 = vadd.f32 %v2131, %v2715
      %v2800 = vadd.f32 %v1609, %v2193
      %v2801 = vadd.f32 %v1644, %v2228
      %v2802 = vadd.f32 %v1679, %v2263
      %v2803 = vadd.f32 %v1714, %v2298
      %v2804 = vadd.f32 %v1749, %v2333
      %v2805 = vadd.f32 %v1784, %v2368
      %v2806 = vadd.f32 %v1819, %v2403
      %v2807 = vadd.f32 %v1854, %v2438
      %v2808 = vadd.f32 %v1889, %v2473
      %v2809 = vadd.f32 %v1924, %v2508
      %v2810 = vadd.f32 %v1959, %v2543
      %v2811 = vadd.f32 %v1994, %v2578
      %v2812 = vadd.f32 %v2029, %v2613
      %v2813 = vadd.f32 %v2064, %v2648
      %v2814 = vadd.f32 %v2099, %v2683
      %v2815 = vadd.f32 %v2134, %v2718
      %2816 = vrot.lane.b32.xlu0 %v2720, 16
      %v2817 = vpop.permute.xlu0 %2816
      %2818 = vrot.lane.b32.xlu0 %v2736, 16
      %v2819 = vpop.permute.xlu0 %2818
      %2820 = vrot.lane.b32.xlu0 %v2721, 16
      %v2821 = vpop.permute.xlu0 %2820
      %2822 = vrot.lane.b32.xlu0 %v2737, 16
      %v2823 = vpop.permute.xlu0 %2822
      %2824 = vrot.lane.b32.xlu0 %v2722, 16
      %v2825 = vpop.permute.xlu0 %2824
      %2826 = vrot.lane.b32.xlu0 %v2738, 16
      %v2827 = vpop.permute.xlu0 %2826
      %2828 = vrot.lane.b32.xlu0 %v2723, 16
      %v2829 = vpop.permute.xlu0 %2828
      %2830 = vrot.lane.b32.xlu0 %v2739, 16
      %v2831 = vpop.permute.xlu0 %2830
      %2832 = vrot.lane.b32.xlu0 %v2724, 16
      %v2833 = vpop.permute.xlu0 %2832
      %2834 = vrot.lane.b32.xlu0 %v2740, 16
      %v2835 = vpop.permute.xlu0 %2834
      %2836 = vrot.lane.b32.xlu0 %v2725, 16
      %v2837 = vpop.permute.xlu0 %2836
      %2838 = vrot.lane.b32.xlu0 %v2741, 16
      %v2839 = vpop.permute.xlu0 %2838
      %2840 = vrot.lane.b32.xlu0 %v2726, 16
      %v2841 = vpop.permute.xlu0 %2840
      %2842 = vrot.lane.b32.xlu0 %v2742, 16
      %v2843 = vpop.permute.xlu0 %2842
      %2844 = vrot.lane.b32.xlu0 %v2727, 16
      %v2845 = vpop.permute.xlu0 %2844
      %2846 = vrot.lane.b32.xlu0 %v2743, 16
      %v2847 = vpop.permute.xlu0 %2846
      %2848 = vrot.lane.b32.xlu0 %v2728, 16
      %v2849 = vpop.permute.xlu0 %2848
      %2850 = vrot.lane.b32.xlu0 %v2744, 16
      %v2851 = vpop.permute.xlu0 %2850
      %2852 = vrot.lane.b32.xlu0 %v2729, 16
      %v2853 = vpop.permute.xlu0 %2852
      %2854 = vrot.lane.b32.xlu0 %v2745, 16
      %v2855 = vpop.permute.xlu0 %2854
      %2856 = vrot.lane.b32.xlu0 %v2730, 16
      %v2857 = vpop.permute.xlu0 %2856
      %2858 = vrot.lane.b32.xlu0 %v2746, 16
      %v2859 = vpop.permute.xlu0 %2858
      %2860 = vrot.lane.b32.xlu0 %v2731, 16
      %v2861 = vpop.permute.xlu0 %2860
      %2862 = vrot.lane.b32.xlu0 %v2747, 16
      %v2863 = vpop.permute.xlu0 %2862
      %2864 = vrot.lane.b32.xlu0 %v2732, 16
      %v2865 = vpop.permute.xlu0 %2864
      %2866 = vrot.lane.b32.xlu0 %v2748, 16
      %v2867 = vpop.permute.xlu0 %2866
      %2868 = vrot.lane.b32.xlu0 %v2733, 16
      %v2869 = vpop.permute.xlu0 %2868
      %2870 = vrot.lane.b32.xlu0 %v2749, 16
      %v2871 = vpop.permute.xlu0 %2870
      %2872 = vrot.lane.b32.xlu0 %v2734, 16
      %v2873 = vpop.permute.xlu0 %2872
      %2874 = vrot.lane.b32.xlu0 %v2750, 16
      %v2875 = vpop.permute.xlu0 %2874
      %2876 = vrot.lane.b32.xlu0 %v2735, 16
      %v2877 = vpop.permute.xlu0 %2876
      %2878 = vrot.lane.b32.xlu0 %v2751, 16
      %v2879 = vpop.permute.xlu0 %2878
      %vm2880 = vcmp.lt.s32.totalorder %v700, 16
      %v2881 = vsel %vm2880, %v2873, %v2877
      %v2882 = vsel %vm2880, %v2875, %v2879
      %v2883 = vsel %vm2880, %v2869, %v2873
      %v2884 = vsel %vm2880, %v2871, %v2875
      %v2885 = vsel %vm2880, %v2865, %v2869
      %v2886 = vsel %vm2880, %v2867, %v2871
      %v2887 = vsel %vm2880, %v2861, %v2865
      %v2888 = vsel %vm2880, %v2863, %v2867
      %v2889 = vsel %vm2880, %v2857, %v2861
      %v2890 = vsel %vm2880, %v2859, %v2863
      %v2891 = vsel %vm2880, %v2853, %v2857
      %v2892 = vsel %vm2880, %v2855, %v2859
      %v2893 = vsel %vm2880, %v2849, %v2853
      %v2894 = vsel %vm2880, %v2851, %v2855
      %v2895 = vsel %vm2880, %v2845, %v2849
      %v2896 = vsel %vm2880, %v2847, %v2851
      %v2897 = vsel %vm2880, %v2841, %v2845
      %v2898 = vsel %vm2880, %v2843, %v2847
      %v2899 = vsel %vm2880, %v2837, %v2841
      %v2900 = vsel %vm2880, %v2839, %v2843
      %v2901 = vsel %vm2880, %v2833, %v2837
      %v2902 = vsel %vm2880, %v2835, %v2839
      %v2903 = vsel %vm2880, %v2829, %v2833
      %v2904 = vsel %vm2880, %v2831, %v2835
      %v2905 = vsel %vm2880, %v2825, %v2829
      %v2906 = vsel %vm2880, %v2827, %v2831
      %v2907 = vsel %vm2880, %v2821, %v2825
      %v2908 = vsel %vm2880, %v2823, %v2827
      %v2909 = vsel %vm2880, %v2817, %v2821
      %v2910 = vsel %vm2880, %v2819, %v2823
      %v2911 = vsel %vm2880, %v2877, %v2817
      %v2912 = vsel %vm2880, %v2879, %v2819
      %v2913 = vld [vmem:[%s9] sm:$0xff]
      %v2914 = vld [vmem:[%s9 + $0x8] sm:$0xff]
      %v2917 = vperm.slane %v2913, 0
      %v2918 = vperm.slane %v2913, 1
      %v2919 = vperm.slane %v2913, 2
      %v2920 = vperm.slane %v2913, 3
      %v2921 = vperm.slane %v2913, 4
      %v2922 = vperm.slane %v2913, 5
      %v2923 = vperm.slane %v2913, 6
      %v2924 = vperm.slane %v2913, 7
      %v2925 = vperm.slane %v2914, 0
      %v2926 = vperm.slane %v2914, 1
      %v2927 = vperm.slane %v2914, 2
      %v2928 = vperm.slane %v2914, 3
      %v2929 = vperm.slane %v2914, 4
      %v2930 = vperm.slane %v2914, 5
      %v2931 = vperm.slane %v2914, 6
      %v2932 = vperm.slane %v2914, 7
      %v2949 = vmul.f32 %v2911, %v2917
      %v2950 = vmul.f32 %v2909, %v2918
      %v2951 = vmul.f32 %v2907, %v2919
      %v2952 = vmul.f32 %v2905, %v2920
      %v2953 = vmul.f32 %v2903, %v2921
      %v2954 = vmul.f32 %v2901, %v2922
      %v2955 = vmul.f32 %v2899, %v2923
      %v2956 = vmul.f32 %v2897, %v2924
      %v2957 = vmul.f32 %v2895, %v2925
      %v2958 = vmul.f32 %v2893, %v2926
      %v2959 = vmul.f32 %v2891, %v2927
      %v2960 = vmul.f32 %v2889, %v2928
      %v2961 = vmul.f32 %v2887, %v2929
      %v2962 = vmul.f32 %v2885, %v2930
      %v2963 = vmul.f32 %v2883, %v2931
      %v2964 = vmul.f32 %v2881, %v2932
      %v2965 = vmul.f32 %v2912, %v2917
      %v2966 = vmul.f32 %v2910, %v2918
      %v2967 = vmul.f32 %v2908, %v2919
      %v2968 = vmul.f32 %v2906, %v2920
      %v2969 = vmul.f32 %v2904, %v2921
      %v2970 = vmul.f32 %v2902, %v2922
      %v2971 = vmul.f32 %v2900, %v2923
      %v2972 = vmul.f32 %v2898, %v2924
      %v2973 = vmul.f32 %v2896, %v2925
      %v2974 = vmul.f32 %v2894, %v2926
      %v2975 = vmul.f32 %v2892, %v2927
      %v2976 = vmul.f32 %v2890, %v2928
      %v2977 = vmul.f32 %v2888, %v2929
      %v2978 = vmul.f32 %v2886, %v2930
      %v2979 = vmul.f32 %v2884, %v2931
      %v2980 = vmul.f32 %v2882, %v2932
      %v2981 = vadd.f32 %v2752, %v2949
      %v2982 = vadd.f32 %v2753, %v2950
      %v2983 = vadd.f32 %v2754, %v2951
      %v2984 = vadd.f32 %v2755, %v2952
      %v2985 = vadd.f32 %v2756, %v2953
      %v2986 = vadd.f32 %v2757, %v2954
      %v2987 = vadd.f32 %v2758, %v2955
      %v2988 = vadd.f32 %v2759, %v2956
      %v2989 = vadd.f32 %v2760, %v2957
      %v2990 = vadd.f32 %v2761, %v2958
      %v2991 = vadd.f32 %v2762, %v2959
      %v2992 = vadd.f32 %v2763, %v2960
      %v2993 = vadd.f32 %v2764, %v2961
      %v2994 = vadd.f32 %v2765, %v2962
      %v2995 = vadd.f32 %v2766, %v2963
      %v2996 = vadd.f32 %v2767, %v2964
      %v2997 = vadd.f32 %v2768, %v2965
      %v2998 = vadd.f32 %v2769, %v2966
      %v2999 = vadd.f32 %v2770, %v2967
      %v3000 = vadd.f32 %v2771, %v2968
      %v3001 = vadd.f32 %v2772, %v2969
      %v3002 = vadd.f32 %v2773, %v2970
      %v3003 = vadd.f32 %v2774, %v2971
      %v3004 = vadd.f32 %v2775, %v2972
      %v3005 = vadd.f32 %v2776, %v2973
      %v3006 = vadd.f32 %v2777, %v2974
      %v3007 = vadd.f32 %v2778, %v2975
      %v3008 = vadd.f32 %v2779, %v2976
      %v3009 = vadd.f32 %v2780, %v2977
      %v3010 = vadd.f32 %v2781, %v2978
      %v3011 = vadd.f32 %v2782, %v2979
      %v3012 = vadd.f32 %v2783, %v2980
      %3013 = vrot.lane.b32.xlu0 %v2784, 112
      %v3014 = vpop.permute.xlu0 %3013
      %3015 = vrot.lane.b32.xlu0 %v2800, 112
      %v3016 = vpop.permute.xlu0 %3015
      %3017 = vrot.lane.b32.xlu0 %v2785, 112
      %v3018 = vpop.permute.xlu0 %3017
      %3019 = vrot.lane.b32.xlu0 %v2801, 112
      %v3020 = vpop.permute.xlu0 %3019
      %3021 = vrot.lane.b32.xlu0 %v2786, 112
      %v3022 = vpop.permute.xlu0 %3021
      %3023 = vrot.lane.b32.xlu0 %v2802, 112
      %v3024 = vpop.permute.xlu0 %3023
      %3025 = vrot.lane.b32.xlu0 %v2787, 112
      %v3026 = vpop.permute.xlu0 %3025
      %3027 = vrot.lane.b32.xlu0 %v2803, 112
      %v3028 = vpop.permute.xlu0 %3027
      %3029 = vrot.lane.b32.xlu0 %v2788, 112
      %v3030 = vpop.permute.xlu0 %3029
      %3031 = vrot.lane.b32.xlu0 %v2804, 112
      %v3032 = vpop.permute.xlu0 %3031
      %3033 = vrot.lane.b32.xlu0 %v2789, 112
      %v3034 = vpop.permute.xlu0 %3033
      %3035 = vrot.lane.b32.xlu0 %v2805, 112
      %v3036 = vpop.permute.xlu0 %3035
      %3037 = vrot.lane.b32.xlu0 %v2790, 112
      %v3038 = vpop.permute.xlu0 %3037
      %3039 = vrot.lane.b32.xlu0 %v2806, 112
      %v3040 = vpop.permute.xlu0 %3039
      %3041 = vrot.lane.b32.xlu0 %v2791, 112
      %v3042 = vpop.permute.xlu0 %3041
      %3043 = vrot.lane.b32.xlu0 %v2807, 112
      %v3044 = vpop.permute.xlu0 %3043
      %3045 = vrot.lane.b32.xlu0 %v2792, 112
      %v3046 = vpop.permute.xlu0 %3045
      %3047 = vrot.lane.b32.xlu0 %v2808, 112
      %v3048 = vpop.permute.xlu0 %3047
      %3049 = vrot.lane.b32.xlu0 %v2793, 112
      %v3050 = vpop.permute.xlu0 %3049
      %3051 = vrot.lane.b32.xlu0 %v2809, 112
      %v3052 = vpop.permute.xlu0 %3051
      %3053 = vrot.lane.b32.xlu0 %v2794, 112
      %v3054 = vpop.permute.xlu0 %3053
      %3055 = vrot.lane.b32.xlu0 %v2810, 112
      %v3056 = vpop.permute.xlu0 %3055
      %3057 = vrot.lane.b32.xlu0 %v2795, 112
      %v3058 = vpop.permute.xlu0 %3057
      %3059 = vrot.lane.b32.xlu0 %v2811, 112
      %v3060 = vpop.permute.xlu0 %3059
      %3061 = vrot.lane.b32.xlu0 %v2796, 112
      %v3062 = vpop.permute.xlu0 %3061
      %3063 = vrot.lane.b32.xlu0 %v2812, 112
      %v3064 = vpop.permute.xlu0 %3063
      %3065 = vrot.lane.b32.xlu0 %v2797, 112
      %v3066 = vpop.permute.xlu0 %3065
      %3067 = vrot.lane.b32.xlu0 %v2813, 112
      %v3068 = vpop.permute.xlu0 %3067
      %3069 = vrot.lane.b32.xlu0 %v2798, 112
      %v3070 = vpop.permute.xlu0 %3069
      %3071 = vrot.lane.b32.xlu0 %v2814, 112
      %v3072 = vpop.permute.xlu0 %3071
      %3073 = vrot.lane.b32.xlu0 %v2799, 112
      %v3074 = vpop.permute.xlu0 %3073
      %3075 = vrot.lane.b32.xlu0 %v2815, 112
      %v3076 = vpop.permute.xlu0 %3075
      %vm3077 = vcmp.lt.s32.totalorder %v700, 112
      %v3078 = vsel %vm3077, %v3070, %v3074
      %v3079 = vsel %vm3077, %v3072, %v3076
      %v3080 = vsel %vm3077, %v3066, %v3070
      %v3081 = vsel %vm3077, %v3068, %v3072
      %v3082 = vsel %vm3077, %v3062, %v3066
      %v3083 = vsel %vm3077, %v3064, %v3068
      %v3084 = vsel %vm3077, %v3058, %v3062
      %v3085 = vsel %vm3077, %v3060, %v3064
      %v3086 = vsel %vm3077, %v3054, %v3058
      %v3087 = vsel %vm3077, %v3056, %v3060
      %v3088 = vsel %vm3077, %v3050, %v3054
      %v3089 = vsel %vm3077, %v3052, %v3056
      %v3090 = vsel %vm3077, %v3046, %v3050
      %v3091 = vsel %vm3077, %v3048, %v3052
      %v3092 = vsel %vm3077, %v3042, %v3046
      %v3093 = vsel %vm3077, %v3044, %v3048
      %v3094 = vsel %vm3077, %v3038, %v3042
      %v3095 = vsel %vm3077, %v3040, %v3044
      %v3096 = vsel %vm3077, %v3034, %v3038
      %v3097 = vsel %vm3077, %v3036, %v3040
      %v3098 = vsel %vm3077, %v3030, %v3034
      %v3099 = vsel %vm3077, %v3032, %v3036
      %v3100 = vsel %vm3077, %v3026, %v3030
      %v3101 = vsel %vm3077, %v3028, %v3032
      %v3102 = vsel %vm3077, %v3022, %v3026
      %v3103 = vsel %vm3077, %v3024, %v3028
      %v3104 = vsel %vm3077, %v3018, %v3022
      %v3105 = vsel %vm3077, %v3020, %v3024
      %v3106 = vsel %vm3077, %v3014, %v3018
      %v3107 = vsel %vm3077, %v3016, %v3020
      %v3108 = vsel %vm3077, %v3074, %v3014
      %v3109 = vsel %vm3077, %v3076, %v3016
      %v3110 = vld [vmem:[%s10] sm:$0xff]
      %v3111 = vld [vmem:[%s10 + $0x8] sm:$0xff]
      %v3114 = vperm.slane %v3110, 0
      %v3115 = vperm.slane %v3110, 1
      %v3116 = vperm.slane %v3110, 2
      %v3117 = vperm.slane %v3110, 3
      %v3118 = vperm.slane %v3110, 4
      %v3119 = vperm.slane %v3110, 5
      %v3120 = vperm.slane %v3110, 6
      %v3121 = vperm.slane %v3110, 7
      %v3122 = vperm.slane %v3111, 0
      %v3123 = vperm.slane %v3111, 1
      %v3124 = vperm.slane %v3111, 2
      %v3125 = vperm.slane %v3111, 3
      %v3126 = vperm.slane %v3111, 4
      %v3127 = vperm.slane %v3111, 5
      %v3128 = vperm.slane %v3111, 6
      %v3129 = vperm.slane %v3111, 7
      %v3146 = vmul.f32 %v3106, %v3114
      %v3147 = vmul.f32 %v3104, %v3115
      %v3148 = vmul.f32 %v3102, %v3116
      %v3149 = vmul.f32 %v3100, %v3117
      %v3150 = vmul.f32 %v3098, %v3118
      %v3151 = vmul.f32 %v3096, %v3119
      %v3152 = vmul.f32 %v3094, %v3120
      %v3153 = vmul.f32 %v3092, %v3121
      %v3154 = vmul.f32 %v3090, %v3122
      %v3155 = vmul.f32 %v3088, %v3123
      %v3156 = vmul.f32 %v3086, %v3124
      %v3157 = vmul.f32 %v3084, %v3125
      %v3158 = vmul.f32 %v3082, %v3126
      %v3159 = vmul.f32 %v3080, %v3127
      %v3160 = vmul.f32 %v3078, %v3128
      %v3161 = vmul.f32 %v3108, %v3129
      %v3162 = vmul.f32 %v3107, %v3114
      %v3163 = vmul.f32 %v3105, %v3115
      %v3164 = vmul.f32 %v3103, %v3116
      %v3165 = vmul.f32 %v3101, %v3117
      %v3166 = vmul.f32 %v3099, %v3118
      %v3167 = vmul.f32 %v3097, %v3119
      %v3168 = vmul.f32 %v3095, %v3120
      %v3169 = vmul.f32 %v3093, %v3121
      %v3170 = vmul.f32 %v3091, %v3122
      %v3171 = vmul.f32 %v3089, %v3123
      %v3172 = vmul.f32 %v3087, %v3124
      %v3173 = vmul.f32 %v3085, %v3125
      %v3174 = vmul.f32 %v3083, %v3126
      %v3175 = vmul.f32 %v3081, %v3127
      %v3176 = vmul.f32 %v3079, %v3128
      %v3177 = vmul.f32 %v3109, %v3129
      %v3178 = vadd.f32 %v2981, %v3146
      %v3179 = vadd.f32 %v2982, %v3147
      %v3180 = vadd.f32 %v2983, %v3148
      %v3181 = vadd.f32 %v2984, %v3149
      %v3182 = vadd.f32 %v2985, %v3150
      %v3183 = vadd.f32 %v2986, %v3151
      %v3184 = vadd.f32 %v2987, %v3152
      %v3185 = vadd.f32 %v2988, %v3153
      %v3186 = vadd.f32 %v2989, %v3154
      %v3187 = vadd.f32 %v2990, %v3155
      %v3188 = vadd.f32 %v2991, %v3156
      %v3189 = vadd.f32 %v2992, %v3157
      %v3190 = vadd.f32 %v2993, %v3158
      %v3191 = vadd.f32 %v2994, %v3159
      %v3192 = vadd.f32 %v2995, %v3160
      %v3193 = vadd.f32 %v2996, %v3161
      %v3194 = vadd.f32 %v2997, %v3162
      %v3195 = vadd.f32 %v2998, %v3163
      %v3196 = vadd.f32 %v2999, %v3164
      %v3197 = vadd.f32 %v3000, %v3165
      %v3198 = vadd.f32 %v3001, %v3166
      %v3199 = vadd.f32 %v3002, %v3167
      %v3200 = vadd.f32 %v3003, %v3168
      %v3201 = vadd.f32 %v3004, %v3169
      %v3202 = vadd.f32 %v3005, %v3170
      %v3203 = vadd.f32 %v3006, %v3171
      %v3204 = vadd.f32 %v3007, %v3172
      %v3205 = vadd.f32 %v3008, %v3173
      %v3206 = vadd.f32 %v3009, %v3174
      %v3207 = vadd.f32 %v3010, %v3175
      %v3208 = vadd.f32 %v3011, %v3176
      %v3209 = vadd.f32 %v3012, %v3177
      %v3210 = vld [vmem:[%s4] sm:$0xff]
      %v3211 = vld [vmem:[%s4 + $0x8] sm:$0xff]
      %3213 = vset.pattern.permute.xlu0 0
      %3214 = vperm.xlu0 %3213, %v3210
      %v3215 = vpop.permute.xlu0 %3214
      %3218 = vset.pattern.permute.xlu0 0
      %3219 = vperm.xlu0 %3218, %v3211
      %v3220 = vpop.permute.xlu0 %3219
      %v3222 = vadd.f32 %v3178, %v3215
      %v3223 = vadd.f32 %v3179, %v3215
      %v3224 = vadd.f32 %v3180, %v3215
      %v3225 = vadd.f32 %v3181, %v3215
      %v3226 = vadd.f32 %v3182, %v3215
      %v3227 = vadd.f32 %v3183, %v3215
      %v3228 = vadd.f32 %v3184, %v3215
      %v3229 = vadd.f32 %v3185, %v3215
      %v3230 = vadd.f32 %v3186, %v3215
      %v3231 = vadd.f32 %v3187, %v3215
      %v3232 = vadd.f32 %v3188, %v3215
      %v3233 = vadd.f32 %v3189, %v3215
      %v3234 = vadd.f32 %v3190, %v3215
      %v3235 = vadd.f32 %v3191, %v3215
      %v3236 = vadd.f32 %v3192, %v3215
      %v3237 = vadd.f32 %v3193, %v3215
      %v3238 = vadd.f32 %v3194, %v3220
      %v3239 = vadd.f32 %v3195, %v3220
      %v3240 = vadd.f32 %v3196, %v3220
      %v3241 = vadd.f32 %v3197, %v3220
      %v3242 = vadd.f32 %v3198, %v3220
      %v3243 = vadd.f32 %v3199, %v3220
      %v3244 = vadd.f32 %v3200, %v3220
      %v3245 = vadd.f32 %v3201, %v3220
      %v3246 = vadd.f32 %v3202, %v3220
      %v3247 = vadd.f32 %v3203, %v3220
      %v3248 = vadd.f32 %v3204, %v3220
      %v3249 = vadd.f32 %v3205, %v3220
      %v3250 = vadd.f32 %v3206, %v3220
      %v3251 = vadd.f32 %v3207, %v3220
      %v3252 = vadd.f32 %v3208, %v3220
      %v3253 = vadd.f32 %v3209, %v3220
      %v3254 = vmax.f32 %v3222, 0.0
      %v3255 = vmax.f32 %v3223, 0.0
      %v3256 = vmax.f32 %v3224, 0.0
      %v3257 = vmax.f32 %v3225, 0.0
      %v3258 = vmax.f32 %v3226, 0.0
      %v3259 = vmax.f32 %v3227, 0.0
      %v3260 = vmax.f32 %v3228, 0.0
      %v3261 = vmax.f32 %v3229, 0.0
      %v3262 = vmax.f32 %v3230, 0.0
      %v3263 = vmax.f32 %v3231, 0.0
      %v3264 = vmax.f32 %v3232, 0.0
      %v3265 = vmax.f32 %v3233, 0.0
      %v3266 = vmax.f32 %v3234, 0.0
      %v3267 = vmax.f32 %v3235, 0.0
      %v3268 = vmax.f32 %v3236, 0.0
      %v3269 = vmax.f32 %v3237, 0.0
      %v3270 = vmax.f32 %v3238, 0.0
      %v3271 = vmax.f32 %v3239, 0.0
      %v3272 = vmax.f32 %v3240, 0.0
      %v3273 = vmax.f32 %v3241, 0.0
      %v3274 = vmax.f32 %v3242, 0.0
      %v3275 = vmax.f32 %v3243, 0.0
      %v3276 = vmax.f32 %v3244, 0.0
      %v3277 = vmax.f32 %v3245, 0.0
      %v3278 = vmax.f32 %v3246, 0.0
      %v3279 = vmax.f32 %v3247, 0.0
      %v3280 = vmax.f32 %v3248, 0.0
      %v3281 = vmax.f32 %v3249, 0.0
      %v3282 = vmax.f32 %v3250, 0.0
      %v3283 = vmax.f32 %v3251, 0.0
      %v3284 = vmax.f32 %v3252, 0.0
      %v3285 = vmax.f32 %v3253, 0.0
      %v3286 = vld [vmem:[%s5] sm:$0xff]
      %v3287 = vld [vmem:[%s5 + $0x8] sm:$0xff]
      %v3288 = vld [vmem:[%s5 + $0x10] sm:$0xff]
      %v3290 = vsel %vm979, %v3286, 0
      %v3293 = vsel %vm979, %v3287, 0
      %v3296 = vsel %vm979, %v3288, 0
      %3298 = vmatpush.msra.mxu0 0.0
      %3299 = vmatpush.msra.mxu0 0.0
      %3300 = vmatpush.msra.mxu0 0.0
      %3301 = vmatpush.msra.mxu0 0.0
      %3302 = vmatpush.msra.mxu0 0.0
      %3303 = vmatpush.msra.mxu0 0.0
      %3304 = vmatpush.msra.mxu0 0.0
      %3305 = vmatpush.msra.mxu0 0.0
      %3306 = vmatpush.msra.mxu0 0.0
      %3307 = vmatpush.msra.mxu0 0.0
      %3308 = vmatpush.msra.mxu0 0.0
      %3309 = vmatpush.msra.mxu0 0.0
      %3310 = vmatpush.msra.mxu0 0.0
      %3311 = vmatpush.msra.mxu0 0.0
      %3312 = vmatpush.msra.mxu0 %v3270
      %3313 = vmatpush.msra.mxu0 %v3254
      %3314 = vmatmul.f32.gmra.mxu0 %v3290
      %v3315 = vpop.f32.mrf.mxu0
      %v3316 = vadd.f32 0.0, %v3315
      %3317 = vmatmul.f32.gmra.mxu0 %v3293
      %v3318 = vpop.f32.mrf.mxu0
      %v3319 = vadd.f32 0.0, %v3318
      %3320 = vmatmul.f32.gmra.mxu0 %v3296
      %v3321 = vpop.f32.mrf.mxu0
      %v3322 = vadd.f32 0.0, %v3321
      %3323 = vdwg.mxu0
      %3324 = vmatpush.msra.mxu0 0.0
      %3325 = vmatpush.msra.mxu0 0.0
      %3326 = vmatpush.msra.mxu0 0.0
      %3327 = vmatpush.msra.mxu0 0.0
      %3328 = vmatpush.msra.mxu0 0.0
      %3329 = vmatpush.msra.mxu0 0.0
      %3330 = vmatpush.msra.mxu0 0.0
      %3331 = vmatpush.msra.mxu0 0.0
      %3332 = vmatpush.msra.mxu0 0.0
      %3333 = vmatpush.msra.mxu0 0.0
      %3334 = vmatpush.msra.mxu0 0.0
      %3335 = vmatpush.msra.mxu0 0.0
      %3336 = vmatpush.msra.mxu0 0.0
      %3337 = vmatpush.msra.mxu0 0.0
      %3338 = vmatpush.msra.mxu0 %v3271
      %3339 = vmatpush.msra.mxu0 %v3255
      %3340 = vmatmul.f32.gmra.mxu0 %v3290
      %v3341 = vpop.f32.mrf.mxu0
      %v3342 = vadd.f32 0.0, %v3341
      %3343 = vmatmul.f32.gmra.mxu0 %v3293
      %v3344 = vpop.f32.mrf.mxu0
      %v3345 = vadd.f32 0.0, %v3344
      %3346 = vmatmul.f32.gmra.mxu0 %v3296
      %v3347 = vpop.f32.mrf.mxu0
      %v3348 = vadd.f32 0.0, %v3347
      %3349 = vdwg.mxu0
      %3350 = vmatpush.msra.mxu0 0.0
      %3351 = vmatpush.msra.mxu0 0.0
      %3352 = vmatpush.msra.mxu0 0.0
      %3353 = vmatpush.msra.mxu0 0.0
      %3354 = vmatpush.msra.mxu0 0.0
      %3355 = vmatpush.msra.mxu0 0.0
      %3356 = vmatpush.msra.mxu0 0.0
      %3357 = vmatpush.msra.mxu0 0.0
      %3358 = vmatpush.msra.mxu0 0.0
      %3359 = vmatpush.msra.mxu0 0.0
      %3360 = vmatpush.msra.mxu0 0.0
      %3361 = vmatpush.msra.mxu0 0.0
      %3362 = vmatpush.msra.mxu0 0.0
      %3363 = vmatpush.msra.mxu0 0.0
      %3364 = vmatpush.msra.mxu0 %v3272
      %3365 = vmatpush.msra.mxu0 %v3256
      %3366 = vmatmul.f32.gmra.mxu0 %v3290
      %v3367 = vpop.f32.mrf.mxu0
      %v3368 = vadd.f32 0.0, %v3367
      %3369 = vmatmul.f32.gmra.mxu0 %v3293
      %v3370 = vpop.f32.mrf.mxu0
      %v3371 = vadd.f32 0.0, %v3370
      %3372 = vmatmul.f32.gmra.mxu0 %v3296
      %v3373 = vpop.f32.mrf.mxu0
      %v3374 = vadd.f32 0.0, %v3373
      %3375 = vdwg.mxu0
      %3376 = vmatpush.msra.mxu0 0.0
      %3377 = vmatpush.msra.mxu0 0.0
      %3378 = vmatpush.msra.mxu0 0.0
      %3379 = vmatpush.msra.mxu0 0.0
      %3380 = vmatpush.msra.mxu0 0.0
      %3381 = vmatpush.msra.mxu0 0.0
      %3382 = vmatpush.msra.mxu0 0.0
      %3383 = vmatpush.msra.mxu0 0.0
      %3384 = vmatpush.msra.mxu0 0.0
      %3385 = vmatpush.msra.mxu0 0.0
      %3386 = vmatpush.msra.mxu0 0.0
      %3387 = vmatpush.msra.mxu0 0.0
      %3388 = vmatpush.msra.mxu0 0.0
      %3389 = vmatpush.msra.mxu0 0.0
      %3390 = vmatpush.msra.mxu0 %v3273
      %3391 = vmatpush.msra.mxu0 %v3257
      %3392 = vmatmul.f32.gmra.mxu0 %v3290
      %v3393 = vpop.f32.mrf.mxu0
      %v3394 = vadd.f32 0.0, %v3393
      %3395 = vmatmul.f32.gmra.mxu0 %v3293
      %v3396 = vpop.f32.mrf.mxu0
      %v3397 = vadd.f32 0.0, %v3396
      %3398 = vmatmul.f32.gmra.mxu0 %v3296
      %v3399 = vpop.f32.mrf.mxu0
      %v3400 = vadd.f32 0.0, %v3399
      %3401 = vdwg.mxu0
      %3402 = vmatpush.msra.mxu0 0.0
      %3403 = vmatpush.msra.mxu0 0.0
      %3404 = vmatpush.msra.mxu0 0.0
      %3405 = vmatpush.msra.mxu0 0.0
      %3406 = vmatpush.msra.mxu0 0.0
      %3407 = vmatpush.msra.mxu0 0.0
      %3408 = vmatpush.msra.mxu0 0.0
      %3409 = vmatpush.msra.mxu0 0.0
      %3410 = vmatpush.msra.mxu0 0.0
      %3411 = vmatpush.msra.mxu0 0.0
      %3412 = vmatpush.msra.mxu0 0.0
      %3413 = vmatpush.msra.mxu0 0.0
      %3414 = vmatpush.msra.mxu0 0.0
      %3415 = vmatpush.msra.mxu0 0.0
      %3416 = vmatpush.msra.mxu0 %v3274
      %3417 = vmatpush.msra.mxu0 %v3258
      %3418 = vmatmul.f32.gmra.mxu0 %v3290
      %v3419 = vpop.f32.mrf.mxu0
      %v3420 = vadd.f32 0.0, %v3419
      %3421 = vmatmul.f32.gmra.mxu0 %v3293
      %v3422 = vpop.f32.mrf.mxu0
      %v3423 = vadd.f32 0.0, %v3422
      %3424 = vmatmul.f32.gmra.mxu0 %v3296
      %v3425 = vpop.f32.mrf.mxu0
      %v3426 = vadd.f32 0.0, %v3425
      %3427 = vdwg.mxu0
      %3428 = vmatpush.msra.mxu0 0.0
      %3429 = vmatpush.msra.mxu0 0.0
      %3430 = vmatpush.msra.mxu0 0.0
      %3431 = vmatpush.msra.mxu0 0.0
      %3432 = vmatpush.msra.mxu0 0.0
      %3433 = vmatpush.msra.mxu0 0.0
      %3434 = vmatpush.msra.mxu0 0.0
      %3435 = vmatpush.msra.mxu0 0.0
      %3436 = vmatpush.msra.mxu0 0.0
      %3437 = vmatpush.msra.mxu0 0.0
      %3438 = vmatpush.msra.mxu0 0.0
      %3439 = vmatpush.msra.mxu0 0.0
      %3440 = vmatpush.msra.mxu0 0.0
      %3441 = vmatpush.msra.mxu0 0.0
      %3442 = vmatpush.msra.mxu0 %v3275
      %3443 = vmatpush.msra.mxu0 %v3259
      %3444 = vmatmul.f32.gmra.mxu0 %v3290
      %v3445 = vpop.f32.mrf.mxu0
      %v3446 = vadd.f32 0.0, %v3445
      %3447 = vmatmul.f32.gmra.mxu0 %v3293
      %v3448 = vpop.f32.mrf.mxu0
      %v3449 = vadd.f32 0.0, %v3448
      %3450 = vmatmul.f32.gmra.mxu0 %v3296
      %v3451 = vpop.f32.mrf.mxu0
      %v3452 = vadd.f32 0.0, %v3451
      %3453 = vdwg.mxu0
      %3454 = vmatpush.msra.mxu0 0.0
      %3455 = vmatpush.msra.mxu0 0.0
      %3456 = vmatpush.msra.mxu0 0.0
      %3457 = vmatpush.msra.mxu0 0.0
      %3458 = vmatpush.msra.mxu0 0.0
      %3459 = vmatpush.msra.mxu0 0.0
      %3460 = vmatpush.msra.mxu0 0.0
      %3461 = vmatpush.msra.mxu0 0.0
      %3462 = vmatpush.msra.mxu0 0.0
      %3463 = vmatpush.msra.mxu0 0.0
      %3464 = vmatpush.msra.mxu0 0.0
      %3465 = vmatpush.msra.mxu0 0.0
      %3466 = vmatpush.msra.mxu0 0.0
      %3467 = vmatpush.msra.mxu0 0.0
      %3468 = vmatpush.msra.mxu0 %v3276
      %3469 = vmatpush.msra.mxu0 %v3260
      %3470 = vmatmul.f32.gmra.mxu0 %v3290
      %v3471 = vpop.f32.mrf.mxu0
      %v3472 = vadd.f32 0.0, %v3471
      %3473 = vmatmul.f32.gmra.mxu0 %v3293
      %v3474 = vpop.f32.mrf.mxu0
      %v3475 = vadd.f32 0.0, %v3474
      %3476 = vmatmul.f32.gmra.mxu0 %v3296
      %v3477 = vpop.f32.mrf.mxu0
      %v3478 = vadd.f32 0.0, %v3477
      %3479 = vdwg.mxu0
      %3480 = vmatpush.msra.mxu0 0.0
      %3481 = vmatpush.msra.mxu0 0.0
      %3482 = vmatpush.msra.mxu0 0.0
      %3483 = vmatpush.msra.mxu0 0.0
      %3484 = vmatpush.msra.mxu0 0.0
      %3485 = vmatpush.msra.mxu0 0.0
      %3486 = vmatpush.msra.mxu0 0.0
      %3487 = vmatpush.msra.mxu0 0.0
      %3488 = vmatpush.msra.mxu0 0.0
      %3489 = vmatpush.msra.mxu0 0.0
      %3490 = vmatpush.msra.mxu0 0.0
      %3491 = vmatpush.msra.mxu0 0.0
      %3492 = vmatpush.msra.mxu0 0.0
      %3493 = vmatpush.msra.mxu0 0.0
      %3494 = vmatpush.msra.mxu0 %v3277
      %3495 = vmatpush.msra.mxu0 %v3261
      %3496 = vmatmul.f32.gmra.mxu0 %v3290
      %v3497 = vpop.f32.mrf.mxu0
      %v3498 = vadd.f32 0.0, %v3497
      %3499 = vmatmul.f32.gmra.mxu0 %v3293
      %v3500 = vpop.f32.mrf.mxu0
      %v3501 = vadd.f32 0.0, %v3500
      %3502 = vmatmul.f32.gmra.mxu0 %v3296
      %v3503 = vpop.f32.mrf.mxu0
      %v3504 = vadd.f32 0.0, %v3503
      %3505 = vdwg.mxu0
      %3506 = vmatpush.msra.mxu0 0.0
      %3507 = vmatpush.msra.mxu0 0.0
      %3508 = vmatpush.msra.mxu0 0.0
      %3509 = vmatpush.msra.mxu0 0.0
      %3510 = vmatpush.msra.mxu0 0.0
      %3511 = vmatpush.msra.mxu0 0.0
      %3512 = vmatpush.msra.mxu0 0.0
      %3513 = vmatpush.msra.mxu0 0.0
      %3514 = vmatpush.msra.mxu0 0.0
      %3515 = vmatpush.msra.mxu0 0.0
      %3516 = vmatpush.msra.mxu0 0.0
      %3517 = vmatpush.msra.mxu0 0.0
      %3518 = vmatpush.msra.mxu0 0.0
      %3519 = vmatpush.msra.mxu0 0.0
      %3520 = vmatpush.msra.mxu0 %v3278
      %3521 = vmatpush.msra.mxu0 %v3262
      %3522 = vmatmul.f32.gmra.mxu0 %v3290
      %v3523 = vpop.f32.mrf.mxu0
      %v3524 = vadd.f32 0.0, %v3523
      %3525 = vmatmul.f32.gmra.mxu0 %v3293
      %v3526 = vpop.f32.mrf.mxu0
      %v3527 = vadd.f32 0.0, %v3526
      %3528 = vmatmul.f32.gmra.mxu0 %v3296
      %v3529 = vpop.f32.mrf.mxu0
      %v3530 = vadd.f32 0.0, %v3529
      %3531 = vdwg.mxu0
      %3532 = vmatpush.msra.mxu0 0.0
      %3533 = vmatpush.msra.mxu0 0.0
      %3534 = vmatpush.msra.mxu0 0.0
      %3535 = vmatpush.msra.mxu0 0.0
      %3536 = vmatpush.msra.mxu0 0.0
      %3537 = vmatpush.msra.mxu0 0.0
      %3538 = vmatpush.msra.mxu0 0.0
      %3539 = vmatpush.msra.mxu0 0.0
      %3540 = vmatpush.msra.mxu0 0.0
      %3541 = vmatpush.msra.mxu0 0.0
      %3542 = vmatpush.msra.mxu0 0.0
      %3543 = vmatpush.msra.mxu0 0.0
      %3544 = vmatpush.msra.mxu0 0.0
      %3545 = vmatpush.msra.mxu0 0.0
      %3546 = vmatpush.msra.mxu0 %v3279
      %3547 = vmatpush.msra.mxu0 %v3263
      %3548 = vmatmul.f32.gmra.mxu0 %v3290
      %v3549 = vpop.f32.mrf.mxu0
      %v3550 = vadd.f32 0.0, %v3549
      %3551 = vmatmul.f32.gmra.mxu0 %v3293
      %v3552 = vpop.f32.mrf.mxu0
      %v3553 = vadd.f32 0.0, %v3552
      %3554 = vmatmul.f32.gmra.mxu0 %v3296
      %v3555 = vpop.f32.mrf.mxu0
      %v3556 = vadd.f32 0.0, %v3555
      %3557 = vdwg.mxu0
      %3558 = vmatpush.msra.mxu0 0.0
      %3559 = vmatpush.msra.mxu0 0.0
      %3560 = vmatpush.msra.mxu0 0.0
      %3561 = vmatpush.msra.mxu0 0.0
      %3562 = vmatpush.msra.mxu0 0.0
      %3563 = vmatpush.msra.mxu0 0.0
      %3564 = vmatpush.msra.mxu0 0.0
      %3565 = vmatpush.msra.mxu0 0.0
      %3566 = vmatpush.msra.mxu0 0.0
      %3567 = vmatpush.msra.mxu0 0.0
      %3568 = vmatpush.msra.mxu0 0.0
      %3569 = vmatpush.msra.mxu0 0.0
      %3570 = vmatpush.msra.mxu0 0.0
      %3571 = vmatpush.msra.mxu0 0.0
      %3572 = vmatpush.msra.mxu0 %v3280
      %3573 = vmatpush.msra.mxu0 %v3264
      %3574 = vmatmul.f32.gmra.mxu0 %v3290
      %v3575 = vpop.f32.mrf.mxu0
      %v3576 = vadd.f32 0.0, %v3575
      %3577 = vmatmul.f32.gmra.mxu0 %v3293
      %v3578 = vpop.f32.mrf.mxu0
      %v3579 = vadd.f32 0.0, %v3578
      %3580 = vmatmul.f32.gmra.mxu0 %v3296
      %v3581 = vpop.f32.mrf.mxu0
      %v3582 = vadd.f32 0.0, %v3581
      %3583 = vdwg.mxu0
      %3584 = vmatpush.msra.mxu0 0.0
      %3585 = vmatpush.msra.mxu0 0.0
      %3586 = vmatpush.msra.mxu0 0.0
      %3587 = vmatpush.msra.mxu0 0.0
      %3588 = vmatpush.msra.mxu0 0.0
      %3589 = vmatpush.msra.mxu0 0.0
      %3590 = vmatpush.msra.mxu0 0.0
      %3591 = vmatpush.msra.mxu0 0.0
      %3592 = vmatpush.msra.mxu0 0.0
      %3593 = vmatpush.msra.mxu0 0.0
      %3594 = vmatpush.msra.mxu0 0.0
      %3595 = vmatpush.msra.mxu0 0.0
      %3596 = vmatpush.msra.mxu0 0.0
      %3597 = vmatpush.msra.mxu0 0.0
      %3598 = vmatpush.msra.mxu0 %v3281
      %3599 = vmatpush.msra.mxu0 %v3265
      %3600 = vmatmul.f32.gmra.mxu0 %v3290
      %v3601 = vpop.f32.mrf.mxu0
      %v3602 = vadd.f32 0.0, %v3601
      %3603 = vmatmul.f32.gmra.mxu0 %v3293
      %v3604 = vpop.f32.mrf.mxu0
      %v3605 = vadd.f32 0.0, %v3604
      %3606 = vmatmul.f32.gmra.mxu0 %v3296
      %v3607 = vpop.f32.mrf.mxu0
      %v3608 = vadd.f32 0.0, %v3607
      %3609 = vdwg.mxu0
      %3610 = vmatpush.msra.mxu0 0.0
      %3611 = vmatpush.msra.mxu0 0.0
      %3612 = vmatpush.msra.mxu0 0.0
      %3613 = vmatpush.msra.mxu0 0.0
      %3614 = vmatpush.msra.mxu0 0.0
      %3615 = vmatpush.msra.mxu0 0.0
      %3616 = vmatpush.msra.mxu0 0.0
      %3617 = vmatpush.msra.mxu0 0.0
      %3618 = vmatpush.msra.mxu0 0.0
      %3619 = vmatpush.msra.mxu0 0.0
      %3620 = vmatpush.msra.mxu0 0.0
      %3621 = vmatpush.msra.mxu0 0.0
      %3622 = vmatpush.msra.mxu0 0.0
      %3623 = vmatpush.msra.mxu0 0.0
      %3624 = vmatpush.msra.mxu0 %v3282
      %3625 = vmatpush.msra.mxu0 %v3266
      %3626 = vmatmul.f32.gmra.mxu0 %v3290
      %v3627 = vpop.f32.mrf.mxu0
      %v3628 = vadd.f32 0.0, %v3627
      %3629 = vmatmul.f32.gmra.mxu0 %v3293
      %v3630 = vpop.f32.mrf.mxu0
      %v3631 = vadd.f32 0.0, %v3630
      %3632 = vmatmul.f32.gmra.mxu0 %v3296
      %v3633 = vpop.f32.mrf.mxu0
      %v3634 = vadd.f32 0.0, %v3633
      %3635 = vdwg.mxu0
      %3636 = vmatpush.msra.mxu0 0.0
      %3637 = vmatpush.msra.mxu0 0.0
      %3638 = vmatpush.msra.mxu0 0.0
      %3639 = vmatpush.msra.mxu0 0.0
      %3640 = vmatpush.msra.mxu0 0.0
      %3641 = vmatpush.msra.mxu0 0.0
      %3642 = vmatpush.msra.mxu0 0.0
      %3643 = vmatpush.msra.mxu0 0.0
      %3644 = vmatpush.msra.mxu0 0.0
      %3645 = vmatpush.msra.mxu0 0.0
      %3646 = vmatpush.msra.mxu0 0.0
      %3647 = vmatpush.msra.mxu0 0.0
      %3648 = vmatpush.msra.mxu0 0.0
      %3649 = vmatpush.msra.mxu0 0.0
      %3650 = vmatpush.msra.mxu0 %v3283
      %3651 = vmatpush.msra.mxu0 %v3267
      %3652 = vmatmul.f32.gmra.mxu0 %v3290
      %v3653 = vpop.f32.mrf.mxu0
      %v3654 = vadd.f32 0.0, %v3653
      %3655 = vmatmul.f32.gmra.mxu0 %v3293
      %v3656 = vpop.f32.mrf.mxu0
      %v3657 = vadd.f32 0.0, %v3656
      %3658 = vmatmul.f32.gmra.mxu0 %v3296
      %v3659 = vpop.f32.mrf.mxu0
      %v3660 = vadd.f32 0.0, %v3659
      %3661 = vdwg.mxu0
      %3662 = vmatpush.msra.mxu0 0.0
      %3663 = vmatpush.msra.mxu0 0.0
      %3664 = vmatpush.msra.mxu0 0.0
      %3665 = vmatpush.msra.mxu0 0.0
      %3666 = vmatpush.msra.mxu0 0.0
      %3667 = vmatpush.msra.mxu0 0.0
      %3668 = vmatpush.msra.mxu0 0.0
      %3669 = vmatpush.msra.mxu0 0.0
      %3670 = vmatpush.msra.mxu0 0.0
      %3671 = vmatpush.msra.mxu0 0.0
      %3672 = vmatpush.msra.mxu0 0.0
      %3673 = vmatpush.msra.mxu0 0.0
      %3674 = vmatpush.msra.mxu0 0.0
      %3675 = vmatpush.msra.mxu0 0.0
      %3676 = vmatpush.msra.mxu0 %v3284
      %3677 = vmatpush.msra.mxu0 %v3268
      %3678 = vmatmul.f32.gmra.mxu0 %v3290
      %v3679 = vpop.f32.mrf.mxu0
      %v3680 = vadd.f32 0.0, %v3679
      %3681 = vmatmul.f32.gmra.mxu0 %v3293
      %v3682 = vpop.f32.mrf.mxu0
      %v3683 = vadd.f32 0.0, %v3682
      %3684 = vmatmul.f32.gmra.mxu0 %v3296
      %v3685 = vpop.f32.mrf.mxu0
      %v3686 = vadd.f32 0.0, %v3685
      %3687 = vdwg.mxu0
      %3688 = vmatpush.msra.mxu0 0.0
      %3689 = vmatpush.msra.mxu0 0.0
      %3690 = vmatpush.msra.mxu0 0.0
      %3691 = vmatpush.msra.mxu0 0.0
      %3692 = vmatpush.msra.mxu0 0.0
      %3693 = vmatpush.msra.mxu0 0.0
      %3694 = vmatpush.msra.mxu0 0.0
      %3695 = vmatpush.msra.mxu0 0.0
      %3696 = vmatpush.msra.mxu0 0.0
      %3697 = vmatpush.msra.mxu0 0.0
      %3698 = vmatpush.msra.mxu0 0.0
      %3699 = vmatpush.msra.mxu0 0.0
      %3700 = vmatpush.msra.mxu0 0.0
      %3701 = vmatpush.msra.mxu0 0.0
      %3702 = vmatpush.msra.mxu0 %v3285
      %3703 = vmatpush.msra.mxu0 %v3269
      %3704 = vmatmul.f32.gmra.mxu0 %v3290
      %v3705 = vpop.f32.mrf.mxu0
      %v3706 = vadd.f32 0.0, %v3705
      %3707 = vmatmul.f32.gmra.mxu0 %v3293
      %v3708 = vpop.f32.mrf.mxu0
      %v3709 = vadd.f32 0.0, %v3708
      %3710 = vmatmul.f32.gmra.mxu0 %v3296
      %v3711 = vpop.f32.mrf.mxu0
      %v3712 = vadd.f32 0.0, %v3711
      %3713 = vdwg.mxu0
      %v3714 = vadd.f32 %v3680, %v3319
      %v3715 = vadd.f32 %v3706, %v3345
      %v3716 = vadd.f32 %v3316, %v3371
      %v3717 = vadd.f32 %v3342, %v3397
      %v3718 = vadd.f32 %v3368, %v3423
      %v3719 = vadd.f32 %v3394, %v3449
      %v3720 = vadd.f32 %v3420, %v3475
      %v3721 = vadd.f32 %v3446, %v3501
      %v3722 = vadd.f32 %v3472, %v3527
      %v3723 = vadd.f32 %v3498, %v3553
      %v3724 = vadd.f32 %v3524, %v3579
      %v3725 = vadd.f32 %v3550, %v3605
      %v3726 = vadd.f32 %v3576, %v3631
      %v3727 = vadd.f32 %v3602, %v3657
      %v3728 = vadd.f32 %v3628, %v3683
      %v3729 = vadd.f32 %v3654, %v3709
      %v3730 = vadd.f32 %v3714, %v3374
      %v3731 = vadd.f32 %v3715, %v3400
      %v3732 = vadd.f32 %v3716, %v3426
      %v3733 = vadd.f32 %v3717, %v3452
      %v3734 = vadd.f32 %v3718, %v3478
      %v3735 = vadd.f32 %v3719, %v3504
      %v3736 = vadd.f32 %v3720, %v3530
      %v3737 = vadd.f32 %v3721, %v3556
      %v3738 = vadd.f32 %v3722, %v3582
      %v3739 = vadd.f32 %v3723, %v3608
      %v3740 = vadd.f32 %v3724, %v3634
      %v3741 = vadd.f32 %v3725, %v3660
      %v3742 = vadd.f32 %v3726, %v3686
      %v3743 = vadd.f32 %v3727, %v3712
      %v3744 = vadd.f32 %v3728, %v3322
      %v3745 = vadd.f32 %v3729, %v3348
      %v3746 = vld [vmem:[%s6] sm:$0xff]
      %3748 = vset.pattern.permute.xlu0 0
      %3749 = vperm.xlu0 %3748, %v3746
      %v3750 = vpop.permute.xlu0 %3749
      %v3752 = vadd.f32 %v3730, %v3750
      %v3753 = vadd.f32 %v3731, %v3750
      %v3754 = vadd.f32 %v3732, %v3750
      %v3755 = vadd.f32 %v3733, %v3750
      %v3756 = vadd.f32 %v3734, %v3750
      %v3757 = vadd.f32 %v3735, %v3750
      %v3758 = vadd.f32 %v3736, %v3750
      %v3759 = vadd.f32 %v3737, %v3750
      %v3760 = vadd.f32 %v3738, %v3750
      %v3761 = vadd.f32 %v3739, %v3750
      %v3762 = vadd.f32 %v3740, %v3750
      %v3763 = vadd.f32 %v3741, %v3750
      %v3764 = vadd.f32 %v3742, %v3750
      %v3765 = vadd.f32 %v3743, %v3750
      %v3766 = vadd.f32 %v3744, %v3750
      %v3767 = vadd.f32 %v3745, %v3750
      %v3768 = vmul.f32 %v3752, 0.01
      %v3769 = vmul.f32 %v3753, 0.01
      %v3770 = vmul.f32 %v3754, 0.01
      %v3771 = vmul.f32 %v3755, 0.01
      %v3772 = vmul.f32 %v3756, 0.01
      %v3773 = vmul.f32 %v3757, 0.01
      %v3774 = vmul.f32 %v3758, 0.01
      %v3775 = vmul.f32 %v3759, 0.01
      %v3776 = vmul.f32 %v3760, 0.01
      %v3777 = vmul.f32 %v3761, 0.01
      %v3778 = vmul.f32 %v3762, 0.01
      %v3779 = vmul.f32 %v3763, 0.01
      %v3780 = vmul.f32 %v3764, 0.01
      %v3781 = vmul.f32 %v3765, 0.01
      %v3782 = vmul.f32 %v3766, 0.01
      %v3783 = vmul.f32 %v3767, 0.01
      %v3784 = vmax.f32 %v3752, %v3768
      %v3785 = vmax.f32 %v3753, %v3769
      %v3786 = vmax.f32 %v3754, %v3770
      %v3787 = vmax.f32 %v3755, %v3771
      %v3788 = vmax.f32 %v3756, %v3772
      %v3789 = vmax.f32 %v3757, %v3773
      %v3790 = vmax.f32 %v3758, %v3774
      %v3791 = vmax.f32 %v3759, %v3775
      %v3792 = vmax.f32 %v3760, %v3776
      %v3793 = vmax.f32 %v3761, %v3777
      %v3794 = vmax.f32 %v3762, %v3778
      %v3795 = vmax.f32 %v3763, %v3779
      %v3796 = vmax.f32 %v3764, %v3780
      %v3797 = vmax.f32 %v3765, %v3781
      %v3798 = vmax.f32 %v3766, %v3782
      %v3799 = vmax.f32 %v3767, %v3783
      %v3800 = vadd.f32 %v3784, %v3785
      %3801 = vadd.xlane.f32.xlu0 %v3800
      %v3802 = vpop.xlane.xlu0 %3801
      %v3803 = vadd.f32 %v3786, %v3787
      %3804 = vadd.xlane.f32.xlu0 %v3803
      %v3805 = vpop.xlane.xlu0 %3804
      %v3806 = vadd.f32 %v3788, %v3789
      %3807 = vadd.xlane.f32.xlu0 %v3806
      %v3808 = vpop.xlane.xlu0 %3807
      %v3809 = vadd.f32 %v3790, %v3791
      %3810 = vadd.xlane.f32.xlu0 %v3809
      %v3811 = vpop.xlane.xlu0 %3810
      %v3812 = vadd.f32 %v3792, %v3793
      %3813 = vadd.xlane.f32.xlu0 %v3812
      %v3814 = vpop.xlane.xlu0 %3813
      %v3815 = vadd.f32 %v3794, %v3795
      %3816 = vadd.xlane.f32.xlu0 %v3815
      %v3817 = vpop.xlane.xlu0 %3816
      %v3818 = vadd.f32 %v3796, %v3797
      %3819 = vadd.xlane.f32.xlu0 %v3818
      %v3820 = vpop.xlane.xlu0 %3819
      %v3821 = vadd.f32 %v3798, %v3799
      %3822 = vadd.xlane.f32.xlu0 %v3821
      %v3823 = vpop.xlane.xlu0 %3822
      %v3824 = vmul.f32 %v3802, 0.00390625
      %v3825 = vmul.f32 %v3805, 0.00390625
      %v3826 = vmul.f32 %v3808, 0.00390625
      %v3827 = vmul.f32 %v3811, 0.00390625
      %v3828 = vmul.f32 %v3814, 0.00390625
      %v3829 = vmul.f32 %v3817, 0.00390625
      %v3830 = vmul.f32 %v3820, 0.00390625
      %v3831 = vmul.f32 %v3823, 0.00390625
      %v3832 = vld [vmem:[%s14] sm:$0xff]
      %v3833 = vld [vmem:[%s15] sm:$0xff]
      %v3834 = vld [vmem:[%s15 + $0x8] sm:$0xff]
      %v3835 = vld [vmem:[%s15 + $0x10] sm:$0xff]
      %v3836 = vld [vmem:[%s15 + $0x18] sm:$0xff]
      %v3837 = vld [vmem:[%s15 + $0x20] sm:$0xff]
      %v3838 = vld [vmem:[%s15 + $0x28] sm:$0xff]
      %v3839 = vld [vmem:[%s15 + $0x30] sm:$0xff]
      %v3840 = vld [vmem:[%s15 + $0x38] sm:$0xff]
      %v3841 = vmul.f32 %v3833, %v3824
      %v3842 = vmul.f32 %v3834, %v3825
      %v3843 = vmul.f32 %v3835, %v3826
      %v3844 = vmul.f32 %v3836, %v3827
      %v3845 = vmul.f32 %v3837, %v3828
      %v3846 = vmul.f32 %v3838, %v3829
      %v3847 = vmul.f32 %v3839, %v3830
      %v3848 = vmul.f32 %v3840, %v3831
      %vm3849 = vcmask 523264
      %v3851 = vsel %vm3849, %v3832, 0
      %3853 = vmatpush.msra.mxu0 0.0
      %3854 = vmatpush.msra.mxu0 0.0
      %3855 = vmatpush.msra.mxu0 0.0
      %3856 = vmatpush.msra.mxu0 0.0
      %3857 = vmatpush.msra.mxu0 0.0
      %3858 = vmatpush.msra.mxu0 0.0
      %3859 = vmatpush.msra.mxu0 0.0
      %3860 = vmatpush.msra.mxu0 0.0
      %3861 = vmatpush.msra.mxu0 %v3848
      %3862 = vmatpush.msra.mxu0 %v3847
      %3863 = vmatpush.msra.mxu0 %v3846
      %3864 = vmatpush.msra.mxu0 %v3845
      %3865 = vmatpush.msra.mxu0 %v3844
      %3866 = vmatpush.msra.mxu0 %v3843
      %3867 = vmatpush.msra.mxu0 %v3842
      %3868 = vmatpush.msra.mxu0 %v3841
      %3869 = vmatmul.f32.gmra.mxu0 %v3851
      %v3870 = vpop.f32.mrf.mxu0
      %v3871 = vadd.f32 0.0, %v3870
      %3872 = vdwg.mxu0
      %vm3873 = vcmask 64512
      %v3875 = vsel %vm3873, %v3871, 0
      %3877 = vmatpush.xpose.msra.mxu0 0.0
      %3878 = vmatpush.xpose.msra.mxu0 0.0
      %3879 = vmatpush.xpose.msra.mxu0 0.0
      %3880 = vmatpush.xpose.msra.mxu0 0.0
      %3881 = vmatpush.xpose.msra.mxu0 0.0
      %3882 = vmatpush.xpose.msra.mxu0 0.0
      %3883 = vmatpush.xpose.msra.mxu0 0.0
      %3884 = vmatpush.xpose.msra.mxu0 0.0
      %3885 = vmatpush.xpose.msra.mxu0 0.0
      %3886 = vmatpush.xpose.msra.mxu0 0.0
      %3887 = vmatpush.xpose.msra.mxu0 0.0
      %3888 = vmatpush.xpose.msra.mxu0 0.0
      %3889 = vmatpush.xpose.msra.mxu0 0.0
      %3890 = vmatpush.xpose.msra.mxu0 0.0
      %3891 = vmatpush.xpose.msra.mxu0 0.0
      %3892 = vmatpush.xpose.msra.mxu0 %v3875
      %3893 = vmatmul.f32.gmra.mxu0 %v3875
      %v3894 = vpop.f32.mrf.mxu0
      %v3895 = vadd.f32 0.0, %v3894
      %3896 = vdwg.mxu0
      %v3897 = vmul.f32 %v3895, 0.35355338
      %v3898 = vadd.f32 %v3897, 1e-06
      %v3899 = vsel %vm3873, %v3898, -inf
      %3900 = vmax.xlane.f32.xlu0 %v3899
      %v3901 = vpop.xlane.xlu0 %3900
      %v3902 = vsub.f32 %v3898, %v3901
      %v3903 = vmul.f32 %v3902, 1.442695
      %v3904 = vpow.pop %v3903
      %v3905 = vsel %vm3873, %v3904, 0.0
      %3906 = vadd.xlane.f32.xlu0 %v3905
      %v3907 = vpop.xlane.xlu0 %3906
      %v3908 = vrcp.pop %v3907
      %v3909 = vmul.f32 %v3907, %v3908
      %v3910 = vsub.f32 1.0, %v3909
      %v3911 = vmul.f32 %v3908, %v3910
      %v3912 = vadd.f32 %v3908, %v3911
      %vm3913 = vweird.f32 %v3907
      %vm3914 = vweird.f32 %v3908
      %vm3915 = vmor %vm3913, %vm3914
      %v3916 = vsel %vm3915, %v3908, %v3912
      %v3917 = vand.u32 2147483647, %v3907
      %vm3918 = vcmp.eq.f32.partialorder %v3917, 8.507059e+37
      %v3919 = vand.u32 %v3907, 2147483648
      %v3920 = vor.u32 1.1754944e-38, %v3919
      %v3921 = vsel %vm3918, %v3920, %v3916
      %v3922 = vmul.f32 %v3904, %v3921
      %v3924 = vsel %vm3873, %v3922, 0
      %3926 = vmatpush.msra.mxu0 0.0
      %3927 = vmatpush.msra.mxu0 0.0
      %3928 = vmatpush.msra.mxu0 0.0
      %3929 = vmatpush.msra.mxu0 0.0
      %3930 = vmatpush.msra.mxu0 0.0
      %3931 = vmatpush.msra.mxu0 0.0
      %3932 = vmatpush.msra.mxu0 0.0
      %3933 = vmatpush.msra.mxu0 0.0
      %3934 = vmatpush.msra.mxu0 0.0
      %3935 = vmatpush.msra.mxu0 0.0
      %3936 = vmatpush.msra.mxu0 0.0
      %3937 = vmatpush.msra.mxu0 0.0
      %3938 = vmatpush.msra.mxu0 0.0
      %3939 = vmatpush.msra.mxu0 0.0
      %3940 = vmatpush.msra.mxu0 0.0
      %3941 = vmatpush.msra.mxu0 %v3871
      %3942 = vmatmul.f32.gmra.mxu0 %v3924
      %v3943 = vpop.f32.mrf.mxu0
      %v3944 = vadd.f32 0.0, %v3943
      %3945 = vdwg.mxu0
      %v3946 = vld [vmem:[%s11] sm:$0xff]
      %v3948 = vsel %vm3873, %v3944, 0
      %3950 = vmatpush.msra.mxu0 0.0
      %3951 = vmatpush.msra.mxu0 0.0
      %3952 = vmatpush.msra.mxu0 0.0
      %3953 = vmatpush.msra.mxu0 0.0
      %3954 = vmatpush.msra.mxu0 0.0
      %3955 = vmatpush.msra.mxu0 0.0
      %3956 = vmatpush.msra.mxu0 0.0
      %3957 = vmatpush.msra.mxu0 0.0
      %3958 = vmatpush.msra.mxu0 0.0
      %3959 = vmatpush.msra.mxu0 0.0
      %3960 = vmatpush.msra.mxu0 0.0
      %3961 = vmatpush.msra.mxu0 0.0
      %3962 = vmatpush.msra.mxu0 0.0
      %3963 = vmatpush.msra.mxu0 0.0
      %3964 = vmatpush.msra.mxu0 0.0
      %3965 = vmatpush.msra.mxu0 %v3946
      %3966 = vmatmul.f32.gmra.mxu0 %v3948
      %v3967 = vpop.f32.mrf.mxu0
      %v3968 = vadd.f32 0.0, %v3967
      %3969 = vdwg.mxu0
      %v3970 = vmax.f32 %v3968, 0.0
      %v3971 = vld [vmem:[%s12] sm:$0xff]
      %v3972 = vld [vmem:[%s12 + $0x8] sm:$0xff]
      %v3974 = vsel %vm979, %v3970, 0
      %3976 = vmatpush.msra.mxu0 0.0
      %3977 = vmatpush.msra.mxu0 0.0
      %3978 = vmatpush.msra.mxu0 0.0
      %3979 = vmatpush.msra.mxu0 0.0
      %3980 = vmatpush.msra.mxu0 0.0
      %3981 = vmatpush.msra.mxu0 0.0
      %3982 = vmatpush.msra.mxu0 0.0
      %3983 = vmatpush.msra.mxu0 0.0
      %3984 = vmatpush.msra.mxu0 0.0
      %3985 = vmatpush.msra.mxu0 0.0
      %3986 = vmatpush.msra.mxu0 0.0
      %3987 = vmatpush.msra.mxu0 0.0
      %3988 = vmatpush.msra.mxu0 0.0
      %3989 = vmatpush.msra.mxu0 0.0
      %3990 = vmatpush.msra.mxu0 %v3972
      %3991 = vmatpush.msra.mxu0 %v3971
      %3992 = vmatmul.f32.gmra.mxu0 %v3974
      %v3993 = vpop.f32.mrf.mxu0
      %v3994 = vadd.f32 0.0, %v3993
      %3995 = vdwg.mxu0
      %v3996 = vsub.f32 0.0, %v3994
      %v3997 = vmul.f32 %v3996, 1.442695
      %v3998 = vpow.pop %v3997
      %v3999 = vadd.f32 %v3998, 1.0
      %v4000 = vrcp.pop %v3999
      %v4001 = vmul.f32 %v3999, %v4000
      %v4002 = vsub.f32 1.0, %v4001
      %v4003 = vmul.f32 %v4000, %v4002
      %v4004 = vadd.f32 %v4000, %v4003
      %vm4005 = vweird.f32 %v3999
      %vm4006 = vweird.f32 %v4000
      %vm4007 = vmor %vm4005, %vm4006
      %v4008 = vsel %vm4007, %v4000, %v4004
      %v4009 = vand.u32 2147483647, %v3999
      %vm4010 = vcmp.eq.f32.partialorder %v4009, 8.507059e+37
      %v4011 = vand.u32 %v3999, 2147483648
      %v4012 = vor.u32 1.1754944e-38, %v4011
      %v4013 = vsel %vm4010, %v4012, %v4008
      %v4014 = vmul.f32 1.0, %v4013
      %v4015 = vld [vmem:[%s13] sm:$0xff]
      %v4016 = vld [vmem:[%s13 + $0x8] sm:$0xff]
      %v4017 = vld [vmem:[%s13 + $0x10] sm:$0xff]
      %v4018 = vld [vmem:[%s13 + $0x18] sm:$0xff]
      %v4019 = vld [vmem:[%s13 + $0x20] sm:$0xff]
      %v4020 = vld [vmem:[%s13 + $0x28] sm:$0xff]
      %v4021 = vld [vmem:[%s13 + $0x30] sm:$0xff]
      %v4022 = vld [vmem:[%s13 + $0x38] sm:$0xff]
      %v4024 = vsel %vm3873, %v4015, 0
      %v4027 = vsel %vm3873, %v4016, 0
      %v4030 = vsel %vm3873, %v4017, 0
      %v4033 = vsel %vm3873, %v4018, 0
      %v4036 = vsel %vm3873, %v4019, 0
      %v4039 = vsel %vm3873, %v4020, 0
      %v4042 = vsel %vm3873, %v4021, 0
      %v4045 = vsel %vm3873, %v4022, 0
      %4047 = vmatpush.msra.mxu0 0.0
      %4048 = vmatpush.msra.mxu0 0.0
      %4049 = vmatpush.msra.mxu0 0.0
      %4050 = vmatpush.msra.mxu0 0.0
      %4051 = vmatpush.msra.mxu0 0.0
      %4052 = vmatpush.msra.mxu0 0.0
      %4053 = vmatpush.msra.mxu0 0.0
      %4054 = vmatpush.msra.mxu0 0.0
      %4055 = vmatpush.msra.mxu0 0.0
      %4056 = vmatpush.msra.mxu0 0.0
      %4057 = vmatpush.msra.mxu0 0.0
      %4058 = vmatpush.msra.mxu0 0.0
      %4059 = vmatpush.msra.mxu0 0.0
      %4060 = vmatpush.msra.mxu0 0.0
      %4061 = vmatpush.msra.mxu0 0.0
      %4062 = vmatpush.msra.mxu0 %v4014
      %4063 = vmatmul.f32.gmra.mxu0 %v4024
      %v4064 = vpop.f32.mrf.mxu0
      %v4065 = vadd.f32 0.0, %v4064
      %4066 = vmatmul.f32.gmra.mxu0 %v4027
      %v4067 = vpop.f32.mrf.mxu0
      %v4068 = vadd.f32 0.0, %v4067
      %4069 = vmatmul.f32.gmra.mxu0 %v4030
      %v4070 = vpop.f32.mrf.mxu0
      %v4071 = vadd.f32 0.0, %v4070
      %4072 = vmatmul.f32.gmra.mxu0 %v4033
      %v4073 = vpop.f32.mrf.mxu0
      %v4074 = vadd.f32 0.0, %v4073
      %4075 = vmatmul.f32.gmra.mxu0 %v4036
      %v4076 = vpop.f32.mrf.mxu0
      %v4077 = vadd.f32 0.0, %v4076
      %4078 = vmatmul.f32.gmra.mxu0 %v4039
      %v4079 = vpop.f32.mrf.mxu0
      %v4080 = vadd.f32 0.0, %v4079
      %4081 = vmatmul.f32.gmra.mxu0 %v4042
      %v4082 = vpop.f32.mrf.mxu0
      %v4083 = vadd.f32 0.0, %v4082
      %4084 = vmatmul.f32.gmra.mxu0 %v4045
      %v4085 = vpop.f32.mrf.mxu0
      %v4086 = vadd.f32 0.0, %v4085
      %4087 = vdwg.mxu0
      %v4088 = vmul.f32 %v4065, %v3833
      %v4089 = vmul.f32 %v4068, %v3834
      %v4090 = vmul.f32 %v4071, %v3835
      %v4091 = vmul.f32 %v4074, %v3836
      %v4092 = vmul.f32 %v4077, %v3837
      %v4093 = vmul.f32 %v4080, %v3838
      %v4094 = vmul.f32 %v4083, %v3839
      %v4095 = vmul.f32 %v4086, %v3840
      %v4096 = vsel %vm3873, %v4088, 0.0
      %4097 = vadd.xlane.f32.xlu0 %v4096
      %v4098 = vpop.xlane.xlu0 %4097
      %v4099 = vsel %vm3873, %v4089, 0.0
      %4100 = vadd.xlane.f32.xlu0 %v4099
      %v4101 = vpop.xlane.xlu0 %4100
      %v4102 = vsel %vm3873, %v4090, 0.0
      %4103 = vadd.xlane.f32.xlu0 %v4102
      %v4104 = vpop.xlane.xlu0 %4103
      %v4105 = vsel %vm3873, %v4091, 0.0
      %4106 = vadd.xlane.f32.xlu0 %v4105
      %v4107 = vpop.xlane.xlu0 %4106
      %v4108 = vsel %vm3873, %v4092, 0.0
      %4109 = vadd.xlane.f32.xlu0 %v4108
      %v4110 = vpop.xlane.xlu0 %4109
      %v4111 = vsel %vm3873, %v4093, 0.0
      %4112 = vadd.xlane.f32.xlu0 %v4111
      %v4113 = vpop.xlane.xlu0 %4112
      %v4114 = vsel %vm3873, %v4094, 0.0
      %4115 = vadd.xlane.f32.xlu0 %v4114
      %v4116 = vpop.xlane.xlu0 %4115
      %v4117 = vsel %vm3873, %v4095, 0.0
      %4118 = vadd.xlane.f32.xlu0 %v4117
      %v4119 = vpop.xlane.xlu0 %4118
      %4120 = vmatpush.msra.mxu0 0.0
      %4121 = vmatpush.msra.mxu0 0.0
      %4122 = vmatpush.msra.mxu0 0.0
      %4123 = vmatpush.msra.mxu0 0.0
      %4124 = vmatpush.msra.mxu0 0.0
      %4125 = vmatpush.msra.mxu0 0.0
      %4126 = vmatpush.msra.mxu0 0.0
      %4127 = vmatpush.msra.mxu0 0.0
      %4128 = vmatpush.msra.mxu0 0.0
      %4129 = vmatpush.msra.mxu0 0.0
      %4130 = vmatpush.msra.mxu0 0.0
      %4131 = vmatpush.msra.mxu0 0.0
      %4132 = vmatpush.msra.mxu0 0.0
      %4133 = vmatpush.msra.mxu0 0.0
      %4134 = vmatpush.msra.mxu0 0.0
      %4135 = vmatpush.msra.mxu0 %v3922
      %4136 = vmatmul.f32.gmra.mxu0 %v4024
      %v4137 = vpop.f32.mrf.mxu0
      %v4138 = vadd.f32 0.0, %v4137
      %4139 = vmatmul.f32.gmra.mxu0 %v4027
      %v4140 = vpop.f32.mrf.mxu0
      %v4141 = vadd.f32 0.0, %v4140
      %4142 = vmatmul.f32.gmra.mxu0 %v4030
      %v4143 = vpop.f32.mrf.mxu0
      %v4144 = vadd.f32 0.0, %v4143
      %4145 = vmatmul.f32.gmra.mxu0 %v4033
      %v4146 = vpop.f32.mrf.mxu0
      %v4147 = vadd.f32 0.0, %v4146
      %4148 = vmatmul.f32.gmra.mxu0 %v4036
      %v4149 = vpop.f32.mrf.mxu0
      %v4150 = vadd.f32 0.0, %v4149
      %4151 = vmatmul.f32.gmra.mxu0 %v4039
      %v4152 = vpop.f32.mrf.mxu0
      %v4153 = vadd.f32 0.0, %v4152
      %4154 = vmatmul.f32.gmra.mxu0 %v4042
      %v4155 = vpop.f32.mrf.mxu0
      %v4156 = vadd.f32 0.0, %v4155
      %4157 = vmatmul.f32.gmra.mxu0 %v4045
      %v4158 = vpop.f32.mrf.mxu0
      %v4159 = vadd.f32 0.0, %v4158
      %4160 = vdwg.mxu0
      %v4162 = vsel %vm3873, %v4138, 0
      %v4165 = vsel %vm3873, %v4141, 0
      %v4168 = vsel %vm3873, %v4144, 0
      %v4171 = vsel %vm3873, %v4147, 0
      %v4174 = vsel %vm3873, %v4150, 0
      %v4177 = vsel %vm3873, %v4153, 0
      %v4180 = vsel %vm3873, %v4156, 0
      %v4183 = vsel %vm3873, %v4159, 0
      %4185 = vmatpush.msra.mxu0 0.0
      %4186 = vmatpush.msra.mxu0 0.0
      %4187 = vmatpush.msra.mxu0 0.0
      %4188 = vmatpush.msra.mxu0 0.0
      %4189 = vmatpush.msra.mxu0 0.0
      %4190 = vmatpush.msra.mxu0 0.0
      %4191 = vmatpush.msra.mxu0 0.0
      %4192 = vmatpush.msra.mxu0 0.0
      %4193 = vmatpush.msra.mxu0 0.0
      %4194 = vmatpush.msra.mxu0 0.0
      %4195 = vmatpush.msra.mxu0 0.0
      %4196 = vmatpush.msra.mxu0 0.0
      %4197 = vmatpush.msra.mxu0 0.0
      %4198 = vmatpush.msra.mxu0 0.0
      %4199 = vmatpush.msra.mxu0 0.0
      %4200 = vmatpush.msra.mxu0 %v3832
      %4201 = vmatmul.f32.gmra.mxu0 %v4162
      %v4202 = vpop.f32.mrf.mxu0
      %v4203 = vadd.f32 0.0, %v4202
      %4204 = vmatmul.f32.gmra.mxu0 %v4165
      %v4205 = vpop.f32.mrf.mxu0
      %v4206 = vadd.f32 0.0, %v4205
      %4207 = vmatmul.f32.gmra.mxu0 %v4168
      %v4208 = vpop.f32.mrf.mxu0
      %v4209 = vadd.f32 0.0, %v4208
      %4210 = vmatmul.f32.gmra.mxu0 %v4171
      %v4211 = vpop.f32.mrf.mxu0
      %v4212 = vadd.f32 0.0, %v4211
      %4213 = vmatmul.f32.gmra.mxu0 %v4174
      %v4214 = vpop.f32.mrf.mxu0
      %v4215 = vadd.f32 0.0, %v4214
      %4216 = vmatmul.f32.gmra.mxu0 %v4177
      %v4217 = vpop.f32.mrf.mxu0
      %v4218 = vadd.f32 0.0, %v4217
      %4219 = vmatmul.f32.gmra.mxu0 %v4180
      %v4220 = vpop.f32.mrf.mxu0
      %v4221 = vadd.f32 0.0, %v4220
      %4222 = vmatmul.f32.gmra.mxu0 %v4183
      %v4223 = vpop.f32.mrf.mxu0
      %v4224 = vadd.f32 0.0, %v4223
      %4225 = vdwg.mxu0
      %v4226 = vmul.f32 %v4098, %v4203
      %v4227 = vmul.f32 %v4101, %v4206
      %v4228 = vmul.f32 %v4104, %v4209
      %v4229 = vmul.f32 %v4107, %v4212
      %v4230 = vmul.f32 %v4110, %v4215
      %v4231 = vmul.f32 %v4113, %v4218
      %v4232 = vmul.f32 %v4116, %v4221
      %v4233 = vmul.f32 %v4119, %v4224
      %v4234 = vld [vmem:[%s16] sm:$0xff]
      %v4235 = vld [vmem:[%s16 + $0x8] sm:$0xff]
      %v4236 = vld [vmem:[%s16 + $0x10] sm:$0xff]
      %v4237 = vld [vmem:[%s16 + $0x18] sm:$0xff]
      %v4238 = vld [vmem:[%s16 + $0x20] sm:$0xff]
      %v4239 = vld [vmem:[%s16 + $0x28] sm:$0xff]
      %v4240 = vld [vmem:[%s16 + $0x30] sm:$0xff]
      %v4241 = vld [vmem:[%s16 + $0x38] sm:$0xff]
      %v4242 = vmul.f32 %v4226, %v4234
      %v4243 = vmul.f32 %v4227, %v4235
      %v4244 = vmul.f32 %v4228, %v4236
      %v4245 = vmul.f32 %v4229, %v4237
      %v4246 = vmul.f32 %v4230, %v4238
      %v4247 = vmul.f32 %v4231, %v4239
      %v4248 = vmul.f32 %v4232, %v4240
      %v4249 = vmul.f32 %v4233, %v4241
      %v4250 = vld [vmem:[%s17] sm:$0xff]
      %v4251 = vld [vmem:[%s17 + $0x8] sm:$0xff]
      %v4252 = vld [vmem:[%s17 + $0x10] sm:$0xff]
      %v4253 = vld [vmem:[%s17 + $0x18] sm:$0xff]
      %v4254 = vld [vmem:[%s17 + $0x20] sm:$0xff]
      %v4255 = vld [vmem:[%s17 + $0x28] sm:$0xff]
      %v4256 = vld [vmem:[%s17 + $0x30] sm:$0xff]
      %v4257 = vld [vmem:[%s17 + $0x38] sm:$0xff]
      %v4258 = vadd.f32 %v4242, %v4250
      %v4259 = vadd.f32 %v4243, %v4251
      %v4260 = vadd.f32 %v4244, %v4252
      %v4261 = vadd.f32 %v4245, %v4253
      %v4262 = vadd.f32 %v4246, %v4254
      %v4263 = vadd.f32 %v4247, %v4255
      %v4264 = vadd.f32 %v4248, %v4256
      %v4265 = vadd.f32 %v4249, %v4257
      %v4266 = vld [vmem:[%s18] sm:$0xff]
      %v4267 = vld [vmem:[%s18 + $0x8] sm:$0xff]
      %v4268 = vld [vmem:[%s18 + $0x10] sm:$0xff]
      %v4269 = vld [vmem:[%s18 + $0x18] sm:$0xff]
      %v4270 = vld [vmem:[%s18 + $0x20] sm:$0xff]
      %v4271 = vld [vmem:[%s18 + $0x28] sm:$0xff]
      %v4272 = vld [vmem:[%s18 + $0x30] sm:$0xff]
      %v4273 = vld [vmem:[%s18 + $0x38] sm:$0xff]
      %4275 = vset.pattern.permute.xlu0 0
      %4276 = vperm.xlu0 %4275, %v4266
      %v4277 = vpop.permute.xlu0 %4276
      %4280 = vset.pattern.permute.xlu0 0
      %4281 = vperm.xlu0 %4280, %v4267
      %v4282 = vpop.permute.xlu0 %4281
      %4285 = vset.pattern.permute.xlu0 0
      %4286 = vperm.xlu0 %4285, %v4268
      %v4287 = vpop.permute.xlu0 %4286
      %4290 = vset.pattern.permute.xlu0 0
      %4291 = vperm.xlu0 %4290, %v4269
      %v4292 = vpop.permute.xlu0 %4291
      %4295 = vset.pattern.permute.xlu0 0
      %4296 = vperm.xlu0 %4295, %v4270
      %v4297 = vpop.permute.xlu0 %4296
      %4300 = vset.pattern.permute.xlu0 0
      %4301 = vperm.xlu0 %4300, %v4271
      %v4302 = vpop.permute.xlu0 %4301
      %4305 = vset.pattern.permute.xlu0 0
      %4306 = vperm.xlu0 %4305, %v4272
      %v4307 = vpop.permute.xlu0 %4306
      %4310 = vset.pattern.permute.xlu0 0
      %4311 = vperm.xlu0 %4310, %v4273
      %v4312 = vpop.permute.xlu0 %4311
      %v4315 = vsel %vm3849, %v4258, 0
      %v4318 = vsel %vm3849, %v4259, 0
      %v4321 = vsel %vm3849, %v4260, 0
      %v4324 = vsel %vm3849, %v4261, 0
      %v4327 = vsel %vm3849, %v4262, 0
      %v4330 = vsel %vm3849, %v4263, 0
      %v4333 = vsel %vm3849, %v4264, 0
      %v4336 = vsel %vm3849, %v4265, 0
      %4338 = vmatpush.msra.mxu0 0.0
      %4339 = vmatpush.msra.mxu0 0.0
      %4340 = vmatpush.msra.mxu0 0.0
      %4341 = vmatpush.msra.mxu0 0.0
      %4342 = vmatpush.msra.mxu0 0.0
      %4343 = vmatpush.msra.mxu0 0.0
      %4344 = vmatpush.msra.mxu0 0.0
      %4345 = vmatpush.msra.mxu0 0.0
      %4346 = vmatpush.msra.mxu0 %v3798
      %4347 = vmatpush.msra.mxu0 %v3796
      %4348 = vmatpush.msra.mxu0 %v3794
      %4349 = vmatpush.msra.mxu0 %v3792
      %4350 = vmatpush.msra.mxu0 %v3790
      %4351 = vmatpush.msra.mxu0 %v3788
      %4352 = vmatpush.msra.mxu0 %v3786
      %4353 = vmatpush.msra.mxu0 %v3784
      %4354 = vmatmul.f32.gmra.mxu0 %v4315
      %v4355 = vpop.f32.mrf.mxu0
      %v4356 = vadd.f32 %v4277, %v4355
      %4357 = vmatmul.f32.gmra.mxu0 %v4318
      %v4358 = vpop.f32.mrf.mxu0
      %v4359 = vadd.f32 %v4282, %v4358
      %4360 = vmatmul.f32.gmra.mxu0 %v4321
      %v4361 = vpop.f32.mrf.mxu0
      %v4362 = vadd.f32 %v4287, %v4361
      %4363 = vmatmul.f32.gmra.mxu0 %v4324
      %v4364 = vpop.f32.mrf.mxu0
      %v4365 = vadd.f32 %v4292, %v4364
      %4366 = vmatmul.f32.gmra.mxu0 %v4327
      %v4367 = vpop.f32.mrf.mxu0
      %v4368 = vadd.f32 %v4297, %v4367
      %4369 = vmatmul.f32.gmra.mxu0 %v4330
      %v4370 = vpop.f32.mrf.mxu0
      %v4371 = vadd.f32 %v4302, %v4370
      %4372 = vmatmul.f32.gmra.mxu0 %v4333
      %v4373 = vpop.f32.mrf.mxu0
      %v4374 = vadd.f32 %v4307, %v4373
      %4375 = vmatmul.f32.gmra.mxu0 %v4336
      %v4376 = vpop.f32.mrf.mxu0
      %v4377 = vadd.f32 %v4312, %v4376
      %4378 = vdwg.mxu0
      %4379 = vmatpush.msra.mxu0 0.0
      %4380 = vmatpush.msra.mxu0 0.0
      %4381 = vmatpush.msra.mxu0 0.0
      %4382 = vmatpush.msra.mxu0 0.0
      %4383 = vmatpush.msra.mxu0 0.0
      %4384 = vmatpush.msra.mxu0 0.0
      %4385 = vmatpush.msra.mxu0 0.0
      %4386 = vmatpush.msra.mxu0 0.0
      %4387 = vmatpush.msra.mxu0 %v3799
      %4388 = vmatpush.msra.mxu0 %v3797
      %4389 = vmatpush.msra.mxu0 %v3795
      %4390 = vmatpush.msra.mxu0 %v3793
      %4391 = vmatpush.msra.mxu0 %v3791
      %4392 = vmatpush.msra.mxu0 %v3789
      %4393 = vmatpush.msra.mxu0 %v3787
      %4394 = vmatpush.msra.mxu0 %v3785
      %4395 = vmatmul.f32.gmra.mxu0 %v4315
      %v4396 = vpop.f32.mrf.mxu0
      %v4397 = vadd.f32 %v4277, %v4396
      %4398 = vmatmul.f32.gmra.mxu0 %v4318
      %v4399 = vpop.f32.mrf.mxu0
      %v4400 = vadd.f32 %v4282, %v4399
      %4401 = vmatmul.f32.gmra.mxu0 %v4321
      %v4402 = vpop.f32.mrf.mxu0
      %v4403 = vadd.f32 %v4287, %v4402
      %4404 = vmatmul.f32.gmra.mxu0 %v4324
      %v4405 = vpop.f32.mrf.mxu0
      %v4406 = vadd.f32 %v4292, %v4405
      %4407 = vmatmul.f32.gmra.mxu0 %v4327
      %v4408 = vpop.f32.mrf.mxu0
      %v4409 = vadd.f32 %v4297, %v4408
      %4410 = vmatmul.f32.gmra.mxu0 %v4330
      %v4411 = vpop.f32.mrf.mxu0
      %v4412 = vadd.f32 %v4302, %v4411
      %4413 = vmatmul.f32.gmra.mxu0 %v4333
      %v4414 = vpop.f32.mrf.mxu0
      %v4415 = vadd.f32 %v4307, %v4414
      %4416 = vmatmul.f32.gmra.mxu0 %v4336
      %v4417 = vpop.f32.mrf.mxu0
      %v4418 = vadd.f32 %v4312, %v4417
      %4419 = vdwg.mxu0
      %4420 = vst [vmem:[%s602] sm:$0xff] %v4356
      %4421 = vst [vmem:[%s602 + $0x8] sm:$0xff] %v4397
      %4422 = vst [vmem:[%s602 + $0x10] sm:$0xff] %v4359
      %4423 = vst [vmem:[%s602 + $0x18] sm:$0xff] %v4400
      %4424 = vst [vmem:[%s602 + $0x20] sm:$0xff] %v4362
      %4425 = vst [vmem:[%s602 + $0x28] sm:$0xff] %v4403
      %4426 = vst [vmem:[%s602 + $0x30] sm:$0xff] %v4365
      %4427 = vst [vmem:[%s602 + $0x38] sm:$0xff] %v4406
      %4428 = vst [vmem:[%s602 + $0x40] sm:$0xff] %v4368
      %4429 = vst [vmem:[%s602 + $0x48] sm:$0xff] %v4409
      %4430 = vst [vmem:[%s602 + $0x50] sm:$0xff] %v4371
      %4431 = vst [vmem:[%s602 + $0x58] sm:$0xff] %v4412
      %4432 = vst [vmem:[%s602 + $0x60] sm:$0xff] %v4374
      %4433 = vst [vmem:[%s602 + $0x68] sm:$0xff] %v4415
      %4434 = vst [vmem:[%s602 + $0x70] sm:$0xff] %v4377
      %4435 = vst [vmem:[%s602 + $0x78] sm:$0xff] %v4418
      %p4436 = scmp.lt.s32.totalorder %s30, 1
      %s4437 = scalar_select %p4436, %s30, 1
      %s4438 = smul.addr %s4437, 16
      %s4439 = smul.addr %s4438, 8
      %s4440 = scalar_lea.vmem %s19, %s4439
      // Predicated region
      $region97: #{ta_se_block_new_batched.1} parent=95 // pred_check
        %p4441 = pneg %p452
      $region98: #{ta_se_block_new_batched.1} parent=95 // pred_check_branch
        %4443 = sbr.rel (%p4441) target = $region100
      $region99: #{ta_se_block_new_batched.1} parent=95 // pred_region
        _
      $region100: #{ta_se_block_new_batched.1} parent=95 // pred_fallthru
        _
    $region96: #{ta_se_block_new_batched.1} parent=5 // pred_fallthru
      _
    %p4444 = scmp.le.s32.totalorder 2, %s25
    // Predicated region
    $region101: #{ta_se_block_new_batched.1} parent=5 // pred_check
      %p4445 = pneg %p4444
    $region102: #{ta_se_block_new_batched.1} parent=5 // pred_check_branch
      %4447 = sbr.rel (%p4445) target = $region104
    $region103: #{ta_se_block_new_batched.1} parent=5 // pred_region
      %s4448 = ssub.s32 %s25, 2
      // Predicated region
      $region105: #{ta_se_block_new_batched.1} parent=103 // pred_check
        %p4449 = pneg %p458
      $region106: #{ta_se_block_new_batched.1} parent=103 // pred_check_branch
        %4451 = sbr.rel (%p4449) target = $region108
      $region107: #{ta_se_block_new_batched.1} parent=103 // pred_region
        %p4452 = scmp.lt.s32.totalorder %s31, 1
        %s4453 = scalar_select %p4452, %s31, 1
        %s4454 = smul.addr %s4453, 16
        %s4455 = smul.addr %s4454, 8
        %s4456 = scalar_lea.vmem %s19, %s4455
      $region108: #{ta_se_block_new_batched.1} parent=103 // pred_fallthru
        _
    $region104: #{ta_se_block_new_batched.1} parent=5 // pred_fallthru
      _
  $region6: #{ta_se_block_new_batched.1} parent=0 // loop_footer
    %s29 = sadd.s32 1, %s25
  $region7: #{ta_se_block_new_batched.1} parent=0 // loop_footer_branch
    %24 = sbr.rel target = $region3
  $region8: #{ta_se_block_new_batched.1} parent=0 // loop_exit
    _

</llo_original>
